<compile_context>
chip_gen: v5e
topology: v5e:2x2
jax: 0.10.0
libtpu: 0.0.40
codegen_flags: <defaults>
</compile_context>

<pallas_src>
import functools
import math

import jax
import jax.numpy as jnp
from jax.experimental import pallas as pl
from jax.experimental.pallas import tpu as pltpu


def _round_up(x, m):
    return (x + m - 1) // m * m


# ------------------------ fused LM forward kernel ---------------------------
def _fused_lm_kernel(x_ref, h0_ref, c0_ref,
                     wih0_ref, whh0_ref, b0_ref,
                     wih1_ref, whh1_ref, b1_ref,
                     w1_ref, bd_ref, gam_ref, bet_ref,
                     w2_ref, b2_ref,
                     logits_ref, hn_ref, cn_ref,
                     y_sc):
    SB = x_ref.shape[0]
    _, Bp, H = h0_ref.shape
    S = SB // Bp

    def lstm_cell(xg, h, c, whh_ref):
        # h/c state stays f32; only the MXU operand is cast to bf16.
        gates = xg + jnp.dot(h.astype(whh_ref.dtype), whh_ref[...],
                             preferred_element_type=jnp.float32)
        # PyTorch gate order [i, f, g, o], each H=64 lanes wide (no padding).
        i = jax.nn.sigmoid(gates[:, 0 * H:1 * H])
        f = jax.nn.sigmoid(gates[:, 1 * H:2 * H])
        g = jnp.tanh(gates[:, 2 * H:3 * H])
        o = jax.nn.sigmoid(gates[:, 3 * H:4 * H])
        c = f * c + i * g
        h = o * jnp.tanh(c)
        return h, c

    # Layer-0 input projection batched over all timesteps: one big MXU matmul,
    # bias broadcast hoisted out of the recurrence.
    xg0 = (jnp.dot(x_ref[...], wih0_ref[...],
                   preferred_element_type=jnp.float32) + b0_ref[...])

    h0s, c0s = h0_ref[0], c0_ref[0]
    h1s, c1s = h0_ref[1], c0_ref[1]

    # Wavefront over the two LSTM layers (S+1 stages instead of 2*S).
    y_prev = None                       # layer-0 output of timestep w-1 (bf16)
    for w in range(S + 1):              # static unroll; S is small (see NOTE)
        if w < S:
            h0s, c0s = lstm_cell(xg0[w * Bp:(w + 1) * Bp, :],
                                 h0s, c0s, whh0_ref)
        if w >= 1:
            # Layer 1, timestep w-1: depends only on y_prev (previous
            # wavefront step) and layer-1 state -> independent of the layer-0
            # cell above, so both MXU pushes overlap.
            xg1 = (jnp.dot(y_prev, wih1_ref[...],
                           preferred_element_type=jnp.float32) + b1_ref[...])
            h1s, c1s = lstm_cell(xg1, h1s, c1s, whh1_ref)
            y_sc[(w - 1) * Bp:w * Bp, :] = h1s      # layer-1 output for DNN
        if w < S:
            y_prev = h0s.astype(wih1_ref.dtype)

    hn_ref[0] = h0s
    cn_ref[0] = c0s
    hn_ref[1] = h1s
    cn_ref[1] = c1s

    # ---- DNN block: Linear -> LayerNorm(1e-5) -> LeakyReLU(0.01) -> Linear -
    y1 = y_sc[...].astype(w1_ref.dtype)                          # (S*Bp, H)
    hlin = jnp.dot(y1, w1_ref[...],
                   preferred_element_type=jnp.float32) + bd_ref[...]
    # Single-pass variance: var = E[x^2] - mu^2 (independent reductions, one
    # fewer VPU pass over hlin).
    mu = jnp.mean(hlin, axis=-1, keepdims=True)
    msq = jnp.mean(hlin * hlin, axis=-1, keepdims=True)
    var = msq - mu * mu
    hln = (hlin - mu) * jax.lax.rsqrt(var + 1e-5)
    hln = hln * gam_ref[...] + bet_ref[...]
    act = jnp.where(hln >= 0, hln, 0.01 * hln)
    logits_ref[...] = (jnp.dot(act.astype(w2_ref.dtype), w2_ref[...],
                               preferred_element_type=jnp.float32)
                       + b2_ref[...]).astype(logits_ref.dtype)


def _full_spec(shape):
    zeros = (0,) * len(shape)
    return pl.BlockSpec(shape, lambda i, zeros=zeros: zeros)


def fused_lm_call(x, h0, c0, wih0, whh0, b0, wih1, whh1, b1,
                  w1, bd, gamma, beta, w2, b2):
    """x: (S*Bp, E) bf16 time-major rows; h0/c0: (L, Bp, H) f32. Returns
    (logits_flat (S*Bp, V) f32, h_n (L, Bp, H), c_n (L, Bp, H))."""
    SB, E = x.shape
    L, Bp, H = h0.shape
    S = SB // Bp
    G = 4 * H
    D = w1.shape[-1]
    V = w2.shape[-1]

    inputs = (x, h0, c0, wih0, whh0, b0, wih1, whh1, b1,
              w1, bd, gamma, beta, w2, b2)
    out_shape = (
        jax.ShapeDtypeStruct((SB, V), jnp.float32),
        jax.ShapeDtypeStruct((L, Bp, H), jnp.float32),
        jax.ShapeDtypeStruct((L, Bp, H), jnp.float32),
    )

    # Advisory cost estimate so XLA overlaps the surrounding glue ops.
    flops = 2 * (SB * E * G          # layer-0 input projection (batched)
                 + S * Bp * H * G    # layer-0 recurrence
                 + S * Bp * H * G    # layer-1 input projection (per step)
                 + S * Bp * H * G    # layer-1 recurrence
                 + SB * H * D        # DNN linear
                 + SB * D * V)       # output linear
    transcendentals = 2 * S * Bp * (4 * H + H) + SB
    bytes_accessed = sum(int(a.size) * a.dtype.itemsize for a in inputs)
    bytes_accessed += sum(math.prod(o.shape) * o.dtype.itemsize
                          for o in out_shape)

    return pl.pallas_call(
        _fused_lm_kernel,
        out_shape=out_shape,
        grid_spec=pltpu.PrefetchScalarGridSpec(
            num_scalar_prefetch=0,
            grid=(1,),
            in_specs=[_full_spec(a.shape) for a in inputs],
            out_specs=[_full_spec((SB, V)),
                       _full_spec((L, Bp, H)),
                       _full_spec((L, Bp, H))],
            scratch_shapes=[pltpu.VMEM((SB, H), jnp.float32)],
        ),
        compiler_params=pltpu.CompilerParams(
            dimension_semantics=("arbitrary",),
            # Explicit budget; everything here is ~0.3 MB.  Re-derive (and
            # tile) for real-size vocab/hidden, esp. v7x's 64 MiB VMEM.
            vmem_limit_bytes=32 * 1024 * 1024),
        cost_estimate=pl.CostEstimate(flops=flops,
                                      transcendentals=transcendentals,
                                      bytes_accessed=bytes_accessed),
    )(*inputs)


# -------------------------- parameters (synthetic) ---------------------------
class RNNLMParams:
    """Deterministic synthetic parameters for the RNNLM forward pass."""

    def __init__(self, key, vocab=128, embed=32, hidden=64, dnn=32,
                 num_layers=2):
        self.vocab, self.embed, self.hidden = vocab, embed, hidden
        self.dnn, self.num_layers = dnn, num_layers
        ks = jax.random.split(key, 4 + 4 * num_layers)
        s = 0.05
        self.embedding = s * jax.random.normal(ks[0], (vocab, embed),
                                               jnp.float32)
        self.lstm = []
        for l in range(num_layers):
            in_dim = embed if l == 0 else hidden
            k0, k1, k2, _ = jax.random.split(ks[1 + l], 4)
            w_ih = s * jax.random.normal(k0, (in_dim, 4 * hidden), jnp.float32)
            w_hh = s * jax.random.normal(k1, (hidden, 4 * hidden), jnp.float32)
            b = s * jax.random.normal(k2, (1, 4 * hidden), jnp.float32)
            self.lstm.append((w_ih, w_hh, b))
        k = ks[1 + num_layers]
        ka, kb, kc, kd = jax.random.split(k, 4)
        self.w1 = s * jax.random.normal(ka, (hidden, dnn), jnp.float32)
        self.b1 = s * jax.random.normal(kb, (1, dnn), jnp.float32)
        self.ln_gamma = jnp.ones((1, dnn), jnp.float32)
        self.ln_beta = jnp.zeros((1, dnn), jnp.float32)
        self.w2 = s * jax.random.normal(kc, (dnn, vocab), jnp.float32)
        self.b2 = s * jax.random.normal(kd, (1, vocab), jnp.float32)


# -------------------------------- full model ---------------------------------
def lm_forward(params, tokens, hx=None):
    """tokens: (B, S) int32. hx: optional (h0, c0), each (L, B, H).
    Returns (logits (B, S, V), (h_n, c_n)) mirroring RNNLM(return_hidden)."""
    B, S = tokens.shape
    H, E = params.hidden, params.embed
    V, L = params.vocab, params.num_layers
    assert L == 2, "fused kernel is specialised to the 2-layer RNNLM"
    Bp = _round_up(B, 8)        # 8-sublane granule for f32 per-step row slices

    # Embedding lookup (gather) — glue in plain JAX. Dropout: identity (eval).
    x = jnp.take(params.embedding, tokens.astype(jnp.int32), axis=0)  # (B,S,E)
    x = jnp.transpose(x, (1, 0, 2))                                   # (S,B,E)
    x = jnp.pad(x, ((0, 0), (0, Bp - B), (0, 0)))                     # (S,Bp,E)
    # No embedding-dim padding: wih0 carries the K=32 contraction.
    x = x.reshape(S * Bp, E).astype(jnp.bfloat16)        # time-major bf16 rows

    if hx is None:
        h0 = jnp.zeros((L, Bp, H), jnp.float32)
        c0 = jnp.zeros((L, Bp, H), jnp.float32)
    else:
        h0, c0 = hx
        h0 = jnp.pad(h0.astype(jnp.float32), ((0, 0), (0, Bp - B), (0, 0)))
        c0 = jnp.pad(c0.astype(jnp.float32), ((0, 0), (0, Bp - B), (0, 0)))

    (wih0, whh0, b0), (wih1, whh1, b1) = params.lstm
    bf = jnp.bfloat16
    logits_flat, hn_p, cn_p = fused_lm_call(
        x, h0, c0,
        wih0.astype(bf), whh0.astype(bf), b0,
        wih1.astype(bf), whh1.astype(bf), b1,
        params.w1.astype(bf), params.b1, params.ln_gamma, params.ln_beta,
        params.w2.astype(bf), params.b2)

    logits = logits_flat.reshape(S, Bp, V)[:, :B].transpose(1, 0, 2)
    return logits, (hn_p[:, :B], cn_p[:, :B])


# ------------------------- plain-JAX reference (check) -----------------------
def lm_forward_ref(params, tokens, hx=None):
    B, S = tokens.shape
    H, L = params.hidden, params.num_layers
    x = jnp.take(params.embedding, tokens.astype(jnp.int32), axis=0)
    if hx is None:
        h0 = jnp.zeros((L, B, H), jnp.float32)
        c0 = jnp.zeros((L, B, H), jnp.float32)
    else:
        h0, c0 = hx
    hns, cns = [], []
    for l in range(L):
        w_ih, w_hh, b = params.lstm[l]

        def step(carry, x_t, w_ih=w_ih, w_hh=w_hh, b=b):
            h, c = carry
            gates = x_t @ w_ih + h @ w_hh + b
            i = jax.nn.sigmoid(gates[:, 0 * H:1 * H])
            f = jax.nn.sigmoid(gates[:, 1 * H:2 * H])
            g = jnp.tanh(gates[:, 2 * H:3 * H])
            o = jax.nn.sigmoid(gates[:, 3 * H:4 * H])
            c = f * c + i * g
            h = o * jnp.tanh(c)
            return (h, c), h

        (hn, cn), ys = jax.lax.scan(step, (h0[l], c0[l]),
                                    jnp.transpose(x, (1, 0, 2)))
        x = jnp.transpose(ys, (1, 0, 2))
        hns.append(hn)
        cns.append(cn)
    h_n, c_n = jnp.stack(hns), jnp.stack(cns)
    xf = x.reshape(B * S, H)
    hlin = xf @ params.w1 + params.b1
    mu = hlin.mean(-1, keepdims=True)
    var = ((hlin - mu) ** 2).mean(-1, keepdims=True)
    hln = (hlin - mu) * jax.lax.rsqrt(var + 1e-5)
    hln = hln * params.ln_gamma + params.ln_beta
    act = jnp.where(hln >= 0, hln, 0.01 * hln)
    logits = (act @ params.w2 + params.b2).reshape(B, S, params.vocab)
    return logits, (h_n, c_n)


if __name__ == "__main__":
    key = jax.random.PRNGKey(0)
    pkey, tkey = jax.random.split(key)

    # batch=2, seq=8, vocab=128, embed=32, hidden=64, dnn=32, 2 LSTM layers.
    params = RNNLMParams(pkey, vocab=128, embed=32, hidden=64, dnn=32,
                         num_layers=2)
    tokens = jax.random.randint(tkey, (2, 8), 0, params.vocab, jnp.int32)

    fwd = jax.jit(functools.partial(lm_forward, params))
    logits, (h_n, c_n) = fwd(tokens)
    jax.block_until_ready((logits, h_n, c_n))

    assert logits.shape == (2, 8, params.vocab)
    assert h_n.shape == (2, 2, 64) and c_n.shape == (2, 2, 64)
    assert bool(jnp.all(jnp.isfinite(logits)))

    # Numerical sanity check vs. plain-JAX f32 reference (loose tol: the
    # kernel intentionally feeds the MXU bf16 operands with f32 accumulation).
    ref_logits, (ref_h, ref_c) = lm_forward_ref(params, tokens)
    assert bool(jnp.allclose(logits, ref_logits, rtol=3e-2, atol=3e-2))
    assert bool(jnp.allclose(h_n, ref_h, rtol=1e-2, atol=5e-3))
    assert bool(jnp.allclose(c_n, ref_c, rtol=1e-2, atol=5e-3))

    print("KERNEL_OK")
</pallas_src>

<mosaic_0001>
module attributes {stable_mosaic.version = 11 : i64} {
  func.func @_fused_lm_kernel(%arg0: i32, %arg1: memref<64x32xbf16, #tpu.memory_space<vmem>>, %arg2: memref<2x8x64xf32, #tpu.memory_space<vmem>>, %arg3: memref<2x8x64xf32, #tpu.memory_space<vmem>>, %arg4: memref<32x256xbf16, #tpu.memory_space<vmem>>, %arg5: memref<64x256xbf16, #tpu.memory_space<vmem>>, %arg6: memref<1x256xf32, #tpu.memory_space<vmem>>, %arg7: memref<64x256xbf16, #tpu.memory_space<vmem>>, %arg8: memref<64x256xbf16, #tpu.memory_space<vmem>>, %arg9: memref<1x256xf32, #tpu.memory_space<vmem>>, %arg10: memref<64x32xbf16, #tpu.memory_space<vmem>>, %arg11: memref<1x32xf32, #tpu.memory_space<vmem>>, %arg12: memref<1x32xf32, #tpu.memory_space<vmem>>, %arg13: memref<1x32xf32, #tpu.memory_space<vmem>>, %arg14: memref<32x128xbf16, #tpu.memory_space<vmem>>, %arg15: memref<1x128xf32, #tpu.memory_space<vmem>>, %arg16: memref<64x128xf32, #tpu.memory_space<vmem>>, %arg17: memref<2x8x64xf32, #tpu.memory_space<vmem>>, %arg18: memref<2x8x64xf32, #tpu.memory_space<vmem>>, %arg19: memref<64x64xf32, #tpu.memory_space<vmem>>) attributes {dimension_semantics = [#tpu.dimension_semantics<arbitrary>], iteration_bounds = array<i64: 1>, scalar_prefetch = 0 : i64, scratch_operands = 1 : i64, tpu.core_type = #tpu.core_type<tc>, window_params = [{pipeline_mode = #tpu.pipeline_mode<synchronous>, transform_indices = @transform_0, window_bounds = array<i64: 64, 32>}, {pipeline_mode = #tpu.pipeline_mode<synchronous>, transform_indices = @transform_1, window_bounds = array<i64: 2, 8, 64>}, {pipeline_mode = #tpu.pipeline_mode<synchronous>, transform_indices = @transform_2, window_bounds = array<i64: 2, 8, 64>}, {pipeline_mode = #tpu.pipeline_mode<synchronous>, transform_indices = @transform_3, window_bounds = array<i64: 32, 256>}, {pipeline_mode = #tpu.pipeline_mode<synchronous>, transform_indices = @transform_4, window_bounds = array<i64: 64, 256>}, {pipeline_mode = #tpu.pipeline_mode<synchronous>, transform_indices = @transform_5, window_bounds = array<i64: 1, 256>}, {pipeline_mode = #tpu.pipeline_mode<synchronous>, transform_indices = @transform_6, window_bounds = array<i64: 64, 256>}, {pipeline_mode = #tpu.pipeline_mode<synchronous>, transform_indices = @transform_7, window_bounds = array<i64: 64, 256>}, {pipeline_mode = #tpu.pipeline_mode<synchronous>, transform_indices = @transform_8, window_bounds = array<i64: 1, 256>}, {pipeline_mode = #tpu.pipeline_mode<synchronous>, transform_indices = @transform_9, window_bounds = array<i64: 64, 32>}, {pipeline_mode = #tpu.pipeline_mode<synchronous>, transform_indices = @transform_10, window_bounds = array<i64: 1, 32>}, {pipeline_mode = #tpu.pipeline_mode<synchronous>, transform_indices = @transform_11, window_bounds = array<i64: 1, 32>}, {pipeline_mode = #tpu.pipeline_mode<synchronous>, transform_indices = @transform_12, window_bounds = array<i64: 1, 32>}, {pipeline_mode = #tpu.pipeline_mode<synchronous>, transform_indices = @transform_13, window_bounds = array<i64: 32, 128>}, {pipeline_mode = #tpu.pipeline_mode<synchronous>, transform_indices = @transform_14, window_bounds = array<i64: 1, 128>}, {pipeline_mode = #tpu.pipeline_mode<synchronous>, transform_indices = @transform_15, window_bounds = array<i64: 64, 128>}, {pipeline_mode = #tpu.pipeline_mode<synchronous>, transform_indices = @transform_16, window_bounds = array<i64: 2, 8, 64>}, {pipeline_mode = #tpu.pipeline_mode<synchronous>, transform_indices = @transform_17, window_bounds = array<i64: 2, 8, 64>}]} {
    %c0 = arith.constant 0 : index
    %c0_0 = arith.constant 0 : index
    %0 = vector.load %arg1[%c0, %c0_0] : memref<64x32xbf16, #tpu.memory_space<vmem>>, vector<64x32xbf16>
    %c0_1 = arith.constant 0 : index
    %c0_2 = arith.constant 0 : index
    %1 = vector.load %arg4[%c0_1, %c0_2] : memref<32x256xbf16, #tpu.memory_space<vmem>>, vector<32x256xbf16>
    %cst = arith.constant dense<0.000000e+00> : vector<64x256xf32>
    %2 = tpu.matmul %0, %1, %cst {dimension_numbers = #tpu.dot_dimension_numbers<[1], [0], [0], [1], [0, 0, 1, 1], [], []>} : vector<64x32xbf16>, vector<32x256xbf16>, vector<64x256xf32> -> vector<64x256xf32>
    %c0_3 = arith.constant 0 : index
    %c0_4 = arith.constant 0 : index
    %3 = vector.load %arg6[%c0_3, %c0_4] : memref<1x256xf32, #tpu.memory_space<vmem>>, vector<1x256xf32>
    %4 = vector.broadcast %3 : vector<1x256xf32> to vector<64x256xf32>
    %5 = arith.addf %2, %4 : vector<64x256xf32>
    %c0_5 = arith.constant 0 : index
    %c0_6 = arith.constant 0 : index
    %c0_7 = arith.constant 0 : index
    %6 = vector.load %arg2[%c0_5, %c0_6, %c0_7] : memref<2x8x64xf32, #tpu.memory_space<vmem>>, vector<1x8x64xf32>
    %7 = vector.shape_cast %6 : vector<1x8x64xf32> to vector<8x64xf32>
    %c0_8 = arith.constant 0 : index
    %c0_9 = arith.constant 0 : index
    %c0_10 = arith.constant 0 : index
    %8 = vector.load %arg3[%c0_8, %c0_9, %c0_10] : memref<2x8x64xf32, #tpu.memory_space<vmem>>, vector<1x8x64xf32>
    %9 = vector.shape_cast %8 : vector<1x8x64xf32> to vector<8x64xf32>
    %c1 = arith.constant 1 : index
    %c0_11 = arith.constant 0 : index
    %c0_12 = arith.constant 0 : index
    %10 = vector.load %arg2[%c1, %c0_11, %c0_12] : memref<2x8x64xf32, #tpu.memory_space<vmem>>, vector<1x8x64xf32>
    %11 = vector.shape_cast %10 : vector<1x8x64xf32> to vector<8x64xf32>
    %c1_13 = arith.constant 1 : index
    %c0_14 = arith.constant 0 : index
    %c0_15 = arith.constant 0 : index
    %12 = vector.load %arg3[%c1_13, %c0_14, %c0_15] : memref<2x8x64xf32, #tpu.memory_space<vmem>>, vector<1x8x64xf32>
    %13 = vector.shape_cast %12 : vector<1x8x64xf32> to vector<8x64xf32>
    %14 = vector.extract_strided_slice %5 {offsets = [0, 0], sizes = [8, 256], strides = [1, 1]} : vector<64x256xf32> to vector<8x256xf32>
    %15 = arith.truncf %7 : vector<8x64xf32> to vector<8x64xbf16>
    %c0_16 = arith.constant 0 : index
    %c0_17 = arith.constant 0 : index
    %16 = vector.load %arg5[%c0_16, %c0_17] : memref<64x256xbf16, #tpu.memory_space<vmem>>, vector<64x256xbf16>
    %cst_18 = arith.constant dense<0.000000e+00> : vector<8x256xf32>
    %17 = tpu.matmul %15, %16, %cst_18 {dimension_numbers = #tpu.dot_dimension_numbers<[1], [0], [0], [1], [0, 0, 1, 1], [], []>} : vector<8x64xbf16>, vector<64x256xbf16>, vector<8x256xf32> -> vector<8x256xf32>
    %18 = arith.addf %14, %17 : vector<8x256xf32>
    %19 = vector.extract_strided_slice %18 {offsets = [0, 0], sizes = [8, 64], strides = [1, 1]} : vector<8x256xf32> to vector<8x64xf32>
    %20 = arith.negf %19 : vector<8x64xf32>
    %21 = math.exp %20 : vector<8x64xf32>
    %cst_19 = arith.constant 1.000000e+00 : f32
    %22 = vector.broadcast %cst_19 : f32 to vector<8x64xf32>
    %23 = arith.addf %22, %21 : vector<8x64xf32>
    %24 = arith.divf %22, %23 : vector<8x64xf32>
    %25 = vector.extract_strided_slice %18 {offsets = [0, 64], sizes = [8, 64], strides = [1, 1]} : vector<8x256xf32> to vector<8x64xf32>
    %26 = arith.negf %25 : vector<8x64xf32>
    %27 = math.exp %26 : vector<8x64xf32>
    %cst_20 = arith.constant 1.000000e+00 : f32
    %28 = vector.broadcast %cst_20 : f32 to vector<8x64xf32>
    %29 = arith.addf %28, %27 : vector<8x64xf32>
    %30 = arith.divf %28, %29 : vector<8x64xf32>
    %31 = vector.extract_strided_slice %18 {offsets = [0, 128], sizes = [8, 64], strides = [1, 1]} : vector<8x256xf32> to vector<8x64xf32>
    %32 = math.tanh %31 : vector<8x64xf32>
    %33 = vector.extract_strided_slice %18 {offsets = [0, 192], sizes = [8, 64], strides = [1, 1]} : vector<8x256xf32> to vector<8x64xf32>
    %34 = arith.negf %33 : vector<8x64xf32>
    %35 = math.exp %34 : vector<8x64xf32>
    %cst_21 = arith.constant 1.000000e+00 : f32
    %36 = vector.broadcast %cst_21 : f32 to vector<8x64xf32>
    %37 = arith.addf %36, %35 : vector<8x64xf32>
    %38 = arith.divf %36, %37 : vector<8x64xf32>
    %39 = arith.mulf %30, %9 : vector<8x64xf32>
    %40 = arith.mulf %24, %32 : vector<8x64xf32>
    %41 = arith.addf %39, %40 : vector<8x64xf32>
    %42 = math.tanh %41 : vector<8x64xf32>
    %43 = arith.mulf %38, %42 : vector<8x64xf32>
    %44 = arith.truncf %43 : vector<8x64xf32> to vector<8x64xbf16>
    %45 = vector.extract_strided_slice %5 {offsets = [8, 0], sizes = [8, 256], strides = [1, 1]} : vector<64x256xf32> to vector<8x256xf32>
    %46 = arith.truncf %43 : vector<8x64xf32> to vector<8x64xbf16>
    %c0_22 = arith.constant 0 : index
    %c0_23 = arith.constant 0 : index
    %47 = vector.load %arg5[%c0_22, %c0_23] : memref<64x256xbf16, #tpu.memory_space<vmem>>, vector<64x256xbf16>
    %cst_24 = arith.constant dense<0.000000e+00> : vector<8x256xf32>
    %48 = tpu.matmul %46, %47, %cst_24 {dimension_numbers = #tpu.dot_dimension_numbers<[1], [0], [0], [1], [0, 0, 1, 1], [], []>} : vector<8x64xbf16>, vector<64x256xbf16>, vector<8x256xf32> -> vector<8x256xf32>
    %49 = arith.addf %45, %48 : vector<8x256xf32>
    %50 = vector.extract_strided_slice %49 {offsets = [0, 0], sizes = [8, 64], strides = [1, 1]} : vector<8x256xf32> to vector<8x64xf32>
    %51 = arith.negf %50 : vector<8x64xf32>
    %52 = math.exp %51 : vector<8x64xf32>
    %cst_25 = arith.constant 1.000000e+00 : f32
    %53 = vector.broadcast %cst_25 : f32 to vector<8x64xf32>
    %54 = arith.addf %53, %52 : vector<8x64xf32>
    %55 = arith.divf %53, %54 : vector<8x64xf32>
    %56 = vector.extract_strided_slice %49 {offsets = [0, 64], sizes = [8, 64], strides = [1, 1]} : vector<8x256xf32> to vector<8x64xf32>
    %57 = arith.negf %56 : vector<8x64xf32>
    %58 = math.exp %57 : vector<8x64xf32>
    %cst_26 = arith.constant 1.000000e+00 : f32
    %59 = vector.broadcast %cst_26 : f32 to vector<8x64xf32>
    %60 = arith.addf %59, %58 : vector<8x64xf32>
    %61 = arith.divf %59, %60 : vector<8x64xf32>
    %62 = vector.extract_strided_slice %49 {offsets = [0, 128], sizes = [8, 64], strides = [1, 1]} : vector<8x256xf32> to vector<8x64xf32>
    %63 = math.tanh %62 : vector<8x64xf32>
    %64 = vector.extract_strided_slice %49 {offsets = [0, 192], sizes = [8, 64], strides = [1, 1]} : vector<8x256xf32> to vector<8x64xf32>
    %65 = arith.negf %64 : vector<8x64xf32>
    %66 = math.exp %65 : vector<8x64xf32>
    %cst_27 = arith.constant 1.000000e+00 : f32
    %67 = vector.broadcast %cst_27 : f32 to vector<8x64xf32>
    %68 = arith.addf %67, %66 : vector<8x64xf32>
    %69 = arith.divf %67, %68 : vector<8x64xf32>
    %70 = arith.mulf %61, %41 : vector<8x64xf32>
    %71 = arith.mulf %55, %63 : vector<8x64xf32>
    %72 = arith.addf %70, %71 : vector<8x64xf32>
    %73 = math.tanh %72 : vector<8x64xf32>
    %74 = arith.mulf %69, %73 : vector<8x64xf32>
    %c0_28 = arith.constant 0 : index
    %c0_29 = arith.constant 0 : index
    %75 = vector.load %arg7[%c0_28, %c0_29] : memref<64x256xbf16, #tpu.memory_space<vmem>>, vector<64x256xbf16>
    %cst_30 = arith.constant dense<0.000000e+00> : vector<8x256xf32>
    %76 = tpu.matmul %44, %75, %cst_30 {dimension_numbers = #tpu.dot_dimension_numbers<[1], [0], [0], [1], [0, 0, 1, 1], [], []>} : vector<8x64xbf16>, vector<64x256xbf16>, vector<8x256xf32> -> vector<8x256xf32>
    %c0_31 = arith.constant 0 : index
    %c0_32 = arith.constant 0 : index
    %77 = vector.load %arg9[%c0_31, %c0_32] : memref<1x256xf32, #tpu.memory_space<vmem>>, vector<1x256xf32>
    %78 = vector.broadcast %77 : vector<1x256xf32> to vector<8x256xf32>
    %79 = arith.addf %76, %78 : vector<8x256xf32>
    %80 = arith.truncf %11 : vector<8x64xf32> to vector<8x64xbf16>
    %c0_33 = arith.constant 0 : index
    %c0_34 = arith.constant 0 : index
    %81 = vector.load %arg8[%c0_33, %c0_34] : memref<64x256xbf16, #tpu.memory_space<vmem>>, vector<64x256xbf16>
    %cst_35 = arith.constant dense<0.000000e+00> : vector<8x256xf32>
    %82 = tpu.matmul %80, %81, %cst_35 {dimension_numbers = #tpu.dot_dimension_numbers<[1], [0], [0], [1], [0, 0, 1, 1], [], []>} : vector<8x64xbf16>, vector<64x256xbf16>, vector<8x256xf32> -> vector<8x256xf32>
    %83 = arith.addf %79, %82 : vector<8x256xf32>
    %84 = vector.extract_strided_slice %83 {offsets = [0, 0], sizes = [8, 64], strides = [1, 1]} : vector<8x256xf32> to vector<8x64xf32>
    %85 = arith.negf %84 : vector<8x64xf32>
    %86 = math.exp %85 : vector<8x64xf32>
    %cst_36 = arith.constant 1.000000e+00 : f32
    %87 = vector.broadcast %cst_36 : f32 to vector<8x64xf32>
    %88 = arith.addf %87, %86 : vector<8x64xf32>
    %89 = arith.divf %87, %88 : vector<8x64xf32>
    %90 = vector.extract_strided_slice %83 {offsets = [0, 64], sizes = [8, 64], strides = [1, 1]} : vector<8x256xf32> to vector<8x64xf32>
    %91 = arith.negf %90 : vector<8x64xf32>
    %92 = math.exp %91 : vector<8x64xf32>
    %cst_37 = arith.constant 1.000000e+00 : f32
    %93 = vector.broadcast %cst_37 : f32 to vector<8x64xf32>
    %94 = arith.addf %93, %92 : vector<8x64xf32>
    %95 = arith.divf %93, %94 : vector<8x64xf32>
    %96 = vector.extract_strided_slice %83 {offsets = [0, 128], sizes = [8, 64], strides = [1, 1]} : vector<8x256xf32> to vector<8x64xf32>
    %97 = math.tanh %96 : vector<8x64xf32>
    %98 = vector.extract_strided_slice %83 {offsets = [0, 192], sizes = [8, 64], strides = [1, 1]} : vector<8x256xf32> to vector<8x64xf32>
    %99 = arith.negf %98 : vector<8x64xf32>
    %100 = math.exp %99 : vector<8x64xf32>
    %cst_38 = arith.constant 1.000000e+00 : f32
    %101 = vector.broadcast %cst_38 : f32 to vector<8x64xf32>
    %102 = arith.addf %101, %100 : vector<8x64xf32>
    %103 = arith.divf %101, %102 : vector<8x64xf32>
    %104 = arith.mulf %95, %13 : vector<8x64xf32>
    %105 = arith.mulf %89, %97 : vector<8x64xf32>
    %106 = arith.addf %104, %105 : vector<8x64xf32>
    %107 = math.tanh %106 : vector<8x64xf32>
    %108 = arith.mulf %103, %107 : vector<8x64xf32>
    %c0_39 = arith.constant 0 : index
    %c0_40 = arith.constant 0 : index
    %109 = vector.load %arg19[%c0_39, %c0_40] : memref<64x64xf32, #tpu.memory_space<vmem>>, vector<8x64xf32>
    tpu.vector_store %arg19[%c0_39, %c0_40], %108 {strides = array<i32>} : memref<64x64xf32, #tpu.memory_space<vmem>>, vector<8x64xf32>,
    %110 = arith.truncf %74 : vector<8x64xf32> to vector<8x64xbf16>
    %111 = vector.extract_strided_slice %5 {offsets = [16, 0], sizes = [8, 256], strides = [1, 1]} : vector<64x256xf32> to vector<8x256xf32>
    %112 = arith.truncf %74 : vector<8x64xf32> to vector<8x64xbf16>
    %c0_41 = arith.constant 0 : index
    %c0_42 = arith.constant 0 : index
    %113 = vector.load %arg5[%c0_41, %c0_42] : memref<64x256xbf16, #tpu.memory_space<vmem>>, vector<64x256xbf16>
    %cst_43 = arith.constant dense<0.000000e+00> : vector<8x256xf32>
    %114 = tpu.matmul %112, %113, %cst_43 {dimension_numbers = #tpu.dot_dimension_numbers<[1], [0], [0], [1], [0, 0, 1, 1], [], []>} : vector<8x64xbf16>, vector<64x256xbf16>, vector<8x256xf32> -> vector<8x256xf32>
    %115 = arith.addf %111, %114 : vector<8x256xf32>
    %116 = vector.extract_strided_slice %115 {offsets = [0, 0], sizes = [8, 64], strides = [1, 1]} : vector<8x256xf32> to vector<8x64xf32>
    %117 = arith.negf %116 : vector<8x64xf32>
    %118 = math.exp %117 : vector<8x64xf32>
    %cst_44 = arith.constant 1.000000e+00 : f32
    %119 = vector.broadcast %cst_44 : f32 to vector<8x64xf32>
    %120 = arith.addf %119, %118 : vector<8x64xf32>
    %121 = arith.divf %119, %120 : vector<8x64xf32>
    %122 = vector.extract_strided_slice %115 {offsets = [0, 64], sizes = [8, 64], strides = [1, 1]} : vector<8x256xf32> to vector<8x64xf32>
    %123 = arith.negf %122 : vector<8x64xf32>
    %124 = math.exp %123 : vector<8x64xf32>
    %cst_45 = arith.constant 1.000000e+00 : f32
    %125 = vector.broadcast %cst_45 : f32 to vector<8x64xf32>
    %126 = arith.addf %125, %124 : vector<8x64xf32>
    %127 = arith.divf %125, %126 : vector<8x64xf32>
    %128 = vector.extract_strided_slice %115 {offsets = [0, 128], sizes = [8, 64], strides = [1, 1]} : vector<8x256xf32> to vector<8x64xf32>
    %129 = math.tanh %128 : vector<8x64xf32>
    %130 = vector.extract_strided_slice %115 {offsets = [0, 192], sizes = [8, 64], strides = [1, 1]} : vector<8x256xf32> to vector<8x64xf32>
    %131 = arith.negf %130 : vector<8x64xf32>
    %132 = math.exp %131 : vector<8x64xf32>
    %cst_46 = arith.constant 1.000000e+00 : f32
    %133 = vector.broadcast %cst_46 : f32 to vector<8x64xf32>
    %134 = arith.addf %133, %132 : vector<8x64xf32>
    %135 = arith.divf %133, %134 : vector<8x64xf32>
    %136 = arith.mulf %127, %72 : vector<8x64xf32>
    %137 = arith.mulf %121, %129 : vector<8x64xf32>
    %138 = arith.addf %136, %137 : vector<8x64xf32>
    %139 = math.tanh %138 : vector<8x64xf32>
    %140 = arith.mulf %135, %139 : vector<8x64xf32>
    %c0_47 = arith.constant 0 : index
    %c0_48 = arith.constant 0 : index
    %141 = vector.load %arg7[%c0_47, %c0_48] : memref<64x256xbf16, #tpu.memory_space<vmem>>, vector<64x256xbf16>
    %cst_49 = arith.constant dense<0.000000e+00> : vector<8x256xf32>
    %142 = tpu.matmul %110, %141, %cst_49 {dimension_numbers = #tpu.dot_dimension_numbers<[1], [0], [0], [1], [0, 0, 1, 1], [], []>} : vector<8x64xbf16>, vector<64x256xbf16>, vector<8x256xf32> -> vector<8x256xf32>
    %c0_50 = arith.constant 0 : index
    %c0_51 = arith.constant 0 : index
    %143 = vector.load %arg9[%c0_50, %c0_51] : memref<1x256xf32, #tpu.memory_space<vmem>>, vector<1x256xf32>
    %144 = vector.broadcast %143 : vector<1x256xf32> to vector<8x256xf32>
    %145 = arith.addf %142, %144 : vector<8x256xf32>
    %146 = arith.truncf %108 : vector<8x64xf32> to vector<8x64xbf16>
    %c0_52 = arith.constant 0 : index
    %c0_53 = arith.constant 0 : index
    %147 = vector.load %arg8[%c0_52, %c0_53] : memref<64x256xbf16, #tpu.memory_space<vmem>>, vector<64x256xbf16>
    %cst_54 = arith.constant dense<0.000000e+00> : vector<8x256xf32>
    %148 = tpu.matmul %146, %147, %cst_54 {dimension_numbers = #tpu.dot_dimension_numbers<[1], [0], [0], [1], [0, 0, 1, 1], [], []>} : vector<8x64xbf16>, vector<64x256xbf16>, vector<8x256xf32> -> vector<8x256xf32>
    %149 = arith.addf %145, %148 : vector<8x256xf32>
    %150 = vector.extract_strided_slice %149 {offsets = [0, 0], sizes = [8, 64], strides = [1, 1]} : vector<8x256xf32> to vector<8x64xf32>
    %151 = arith.negf %150 : vector<8x64xf32>
    %152 = math.exp %151 : vector<8x64xf32>
    %cst_55 = arith.constant 1.000000e+00 : f32
    %153 = vector.broadcast %cst_55 : f32 to vector<8x64xf32>
    %154 = arith.addf %153, %152 : vector<8x64xf32>
    %155 = arith.divf %153, %154 : vector<8x64xf32>
    %156 = vector.extract_strided_slice %149 {offsets = [0, 64], sizes = [8, 64], strides = [1, 1]} : vector<8x256xf32> to vector<8x64xf32>
    %157 = arith.negf %156 : vector<8x64xf32>
    %158 = math.exp %157 : vector<8x64xf32>
    %cst_56 = arith.constant 1.000000e+00 : f32
    %159 = vector.broadcast %cst_56 : f32 to vector<8x64xf32>
    %160 = arith.addf %159, %158 : vector<8x64xf32>
    %161 = arith.divf %159, %160 : vector<8x64xf32>
    %162 = vector.extract_strided_slice %149 {offsets = [0, 128], sizes = [8, 64], strides = [1, 1]} : vector<8x256xf32> to vector<8x64xf32>
    %163 = math.tanh %162 : vector<8x64xf32>
    %164 = vector.extract_strided_slice %149 {offsets = [0, 192], sizes = [8, 64], strides = [1, 1]} : vector<8x256xf32> to vector<8x64xf32>
    %165 = arith.negf %164 : vector<8x64xf32>
    %166 = math.exp %165 : vector<8x64xf32>
    %cst_57 = arith.constant 1.000000e+00 : f32
    %167 = vector.broadcast %cst_57 : f32 to vector<8x64xf32>
    %168 = arith.addf %167, %166 : vector<8x64xf32>
    %169 = arith.divf %167, %168 : vector<8x64xf32>
    %170 = arith.mulf %161, %106 : vector<8x64xf32>
    %171 = arith.mulf %155, %163 : vector<8x64xf32>
    %172 = arith.addf %170, %171 : vector<8x64xf32>
    %173 = math.tanh %172 : vector<8x64xf32>
    %174 = arith.mulf %169, %173 : vector<8x64xf32>
    %c8 = arith.constant 8 : index
    %c0_58 = arith.constant 0 : index
    %175 = vector.load %arg19[%c8, %c0_58] : memref<64x64xf32, #tpu.memory_space<vmem>>, vector<8x64xf32>
    tpu.vector_store %arg19[%c8, %c0_58], %174 {strides = array<i32>} : memref<64x64xf32, #tpu.memory_space<vmem>>, vector<8x64xf32>,
    %176 = arith.truncf %140 : vector<8x64xf32> to vector<8x64xbf16>
    %177 = vector.extract_strided_slice %5 {offsets = [24, 0], sizes = [8, 256], strides = [1, 1]} : vector<64x256xf32> to vector<8x256xf32>
    %178 = arith.truncf %140 : vector<8x64xf32> to vector<8x64xbf16>
    %c0_59 = arith.constant 0 : index
    %c0_60 = arith.constant 0 : index
    %179 = vector.load %arg5[%c0_59, %c0_60] : memref<64x256xbf16, #tpu.memory_space<vmem>>, vector<64x256xbf16>
    %cst_61 = arith.constant dense<0.000000e+00> : vector<8x256xf32>
    %180 = tpu.matmul %178, %179, %cst_61 {dimension_numbers = #tpu.dot_dimension_numbers<[1], [0], [0], [1], [0, 0, 1, 1], [], []>} : vector<8x64xbf16>, vector<64x256xbf16>, vector<8x256xf32> -> vector<8x256xf32>
    %181 = arith.addf %177, %180 : vector<8x256xf32>
    %182 = vector.extract_strided_slice %181 {offsets = [0, 0], sizes = [8, 64], strides = [1, 1]} : vector<8x256xf32> to vector<8x64xf32>
    %183 = arith.negf %182 : vector<8x64xf32>
    %184 = math.exp %183 : vector<8x64xf32>
    %cst_62 = arith.constant 1.000000e+00 : f32
    %185 = vector.broadcast %cst_62 : f32 to vector<8x64xf32>
    %186 = arith.addf %185, %184 : vector<8x64xf32>
    %187 = arith.divf %185, %186 : vector<8x64xf32>
    %188 = vector.extract_strided_slice %181 {offsets = [0, 64], sizes = [8, 64], strides = [1, 1]} : vector<8x256xf32> to vector<8x64xf32>
    %189 = arith.negf %188 : vector<8x64xf32>
    %190 = math.exp %189 : vector<8x64xf32>
    %cst_63 = arith.constant 1.000000e+00 : f32
    %191 = vector.broadcast %cst_63 : f32 to vector<8x64xf32>
    %192 = arith.addf %191, %190 : vector<8x64xf32>
    %193 = arith.divf %191, %192 : vector<8x64xf32>
    %194 = vector.extract_strided_slice %181 {offsets = [0, 128], sizes = [8, 64], strides = [1, 1]} : vector<8x256xf32> to vector<8x64xf32>
    %195 = math.tanh %194 : vector<8x64xf32>
    %196 = vector.extract_strided_slice %181 {offsets = [0, 192], sizes = [8, 64], strides = [1, 1]} : vector<8x256xf32> to vector<8x64xf32>
    %197 = arith.negf %196 : vector<8x64xf32>
    %198 = math.exp %197 : vector<8x64xf32>
    %cst_64 = arith.constant 1.000000e+00 : f32
    %199 = vector.broadcast %cst_64 : f32 to vector<8x64xf32>
    %200 = arith.addf %199, %198 : vector<8x64xf32>
    %201 = arith.divf %199, %200 : vector<8x64xf32>
    %202 = arith.mulf %193, %138 : vector<8x64xf32>
    %203 = arith.mulf %187, %195 : vector<8x64xf32>
    %204 = arith.addf %202, %203 : vector<8x64xf32>
    %205 = math.tanh %204 : vector<8x64xf32>
    %206 = arith.mulf %201, %205 : vector<8x64xf32>
    %c0_65 = arith.constant 0 : index
    %c0_66 = arith.constant 0 : index
    %207 = vector.load %arg7[%c0_65, %c0_66] : memref<64x256xbf16, #tpu.memory_space<vmem>>, vector<64x256xbf16>
    %cst_67 = arith.constant dense<0.000000e+00> : vector<8x256xf32>
    %208 = tpu.matmul %176, %207, %cst_67 {dimension_numbers = #tpu.dot_dimension_numbers<[1], [0], [0], [1], [0, 0, 1, 1], [], []>} : vector<8x64xbf16>, vector<64x256xbf16>, vector<8x256xf32> -> vector<8x256xf32>
    %c0_68 = arith.constant 0 : index
    %c0_69 = arith.constant 0 : index
    %209 = vector.load %arg9[%c0_68, %c0_69] : memref<1x256xf32, #tpu.memory_space<vmem>>, vector<1x256xf32>
    %210 = vector.broadcast %209 : vector<1x256xf32> to vector<8x256xf32>
    %211 = arith.addf %208, %210 : vector<8x256xf32>
    %212 = arith.truncf %174 : vector<8x64xf32> to vector<8x64xbf16>
    %c0_70 = arith.constant 0 : index
    %c0_71 = arith.constant 0 : index
    %213 = vector.load %arg8[%c0_70, %c0_71] : memref<64x256xbf16, #tpu.memory_space<vmem>>, vector<64x256xbf16>
    %cst_72 = arith.constant dense<0.000000e+00> : vector<8x256xf32>
    %214 = tpu.matmul %212, %213, %cst_72 {dimension_numbers = #tpu.dot_dimension_numbers<[1], [0], [0], [1], [0, 0, 1, 1], [], []>} : vector<8x64xbf16>, vector<64x256xbf16>, vector<8x256xf32> -> vector<8x256xf32>
    %215 = arith.addf %211, %214 : vector<8x256xf32>
    %216 = vector.extract_strided_slice %215 {offsets = [0, 0], sizes = [8, 64], strides = [1, 1]} : vector<8x256xf32> to vector<8x64xf32>
    %217 = arith.negf %216 : vector<8x64xf32>
    %218 = math.exp %217 : vector<8x64xf32>
    %cst_73 = arith.constant 1.000000e+00 : f32
    %219 = vector.broadcast %cst_73 : f32 to vector<8x64xf32>
    %220 = arith.addf %219, %218 : vector<8x64xf32>
    %221 = arith.divf %219, %220 : vector<8x64xf32>
    %222 = vector.extract_strided_slice %215 {offsets = [0, 64], sizes = [8, 64], strides = [1, 1]} : vector<8x256xf32> to vector<8x64xf32>
    %223 = arith.negf %222 : vector<8x64xf32>
    %224 = math.exp %223 : vector<8x64xf32>
    %cst_74 = arith.constant 1.000000e+00 : f32
    %225 = vector.broadcast %cst_74 : f32 to vector<8x64xf32>
    %226 = arith.addf %225, %224 : vector<8x64xf32>
    %227 = arith.divf %225, %226 : vector<8x64xf32>
    %228 = vector.extract_strided_slice %215 {offsets = [0, 128], sizes = [8, 64], strides = [1, 1]} : vector<8x256xf32> to vector<8x64xf32>
    %229 = math.tanh %228 : vector<8x64xf32>
    %230 = vector.extract_strided_slice %215 {offsets = [0, 192], sizes = [8, 64], strides = [1, 1]} : vector<8x256xf32> to vector<8x64xf32>
    %231 = arith.negf %230 : vector<8x64xf32>
    %232 = math.exp %231 : vector<8x64xf32>
    %cst_75 = arith.constant 1.000000e+00 : f32
    %233 = vector.broadcast %cst_75 : f32 to vector<8x64xf32>
    %234 = arith.addf %233, %232 : vector<8x64xf32>
    %235 = arith.divf %233, %234 : vector<8x64xf32>
    %236 = arith.mulf %227, %172 : vector<8x64xf32>
    %237 = arith.mulf %221, %229 : vector<8x64xf32>
    %238 = arith.addf %236, %237 : vector<8x64xf32>
    %239 = math.tanh %238 : vector<8x64xf32>
    %240 = arith.mulf %235, %239 : vector<8x64xf32>
    %c16 = arith.constant 16 : index
    %c0_76 = arith.constant 0 : index
    %241 = vector.load %arg19[%c16, %c0_76] : memref<64x64xf32, #tpu.memory_space<vmem>>, vector<8x64xf32>
    tpu.vector_store %arg19[%c16, %c0_76], %240 {strides = array<i32>} : memref<64x64xf32, #tpu.memory_space<vmem>>, vector<8x64xf32>,
    %242 = arith.truncf %206 : vector<8x64xf32> to vector<8x64xbf16>
    %243 = vector.extract_strided_slice %5 {offsets = [32, 0], sizes = [8, 256], strides = [1, 1]} : vector<64x256xf32> to vector<8x256xf32>
    %244 = arith.truncf %206 : vector<8x64xf32> to vector<8x64xbf16>
    %c0_77 = arith.constant 0 : index
    %c0_78 = arith.constant 0 : index
    %245 = vector.load %arg5[%c0_77, %c0_78] : memref<64x256xbf16, #tpu.memory_space<vmem>>, vector<64x256xbf16>
    %cst_79 = arith.constant dense<0.000000e+00> : vector<8x256xf32>
    %246 = tpu.matmul %244, %245, %cst_79 {dimension_numbers = #tpu.dot_dimension_numbers<[1], [0], [0], [1], [0, 0, 1, 1], [], []>} : vector<8x64xbf16>, vector<64x256xbf16>, vector<8x256xf32> -> vector<8x256xf32>
    %247 = arith.addf %243, %246 : vector<8x256xf32>
    %248 = vector.extract_strided_slice %247 {offsets = [0, 0], sizes = [8, 64], strides = [1, 1]} : vector<8x256xf32> to vector<8x64xf32>
    %249 = arith.negf %248 : vector<8x64xf32>
    %250 = math.exp %249 : vector<8x64xf32>
    %cst_80 = arith.constant 1.000000e+00 : f32
    %251 = vector.broadcast %cst_80 : f32 to vector<8x64xf32>
    %252 = arith.addf %251, %250 : vector<8x64xf32>
    %253 = arith.divf %251, %252 : vector<8x64xf32>
    %254 = vector.extract_strided_slice %247 {offsets = [0, 64], sizes = [8, 64], strides = [1, 1]} : vector<8x256xf32> to vector<8x64xf32>
    %255 = arith.negf %254 : vector<8x64xf32>
    %256 = math.exp %255 : vector<8x64xf32>
    %cst_81 = arith.constant 1.000000e+00 : f32
    %257 = vector.broadcast %cst_81 : f32 to vector<8x64xf32>
    %258 = arith.addf %257, %256 : vector<8x64xf32>
    %259 = arith.divf %257, %258 : vector<8x64xf32>
    %260 = vector.extract_strided_slice %247 {offsets = [0, 128], sizes = [8, 64], strides = [1, 1]} : vector<8x256xf32> to vector<8x64xf32>
    %261 = math.tanh %260 : vector<8x64xf32>
    %262 = vector.extract_strided_slice %247 {offsets = [0, 192], sizes = [8, 64], strides = [1, 1]} : vector<8x256xf32> to vector<8x64xf32>
    %263 = arith.negf %262 : vector<8x64xf32>
    %264 = math.exp %263 : vector<8x64xf32>
    %cst_82 = arith.constant 1.000000e+00 : f32
    %265 = vector.broadcast %cst_82 : f32 to vector<8x64xf32>
    %266 = arith.addf %265, %264 : vector<8x64xf32>
    %267 = arith.divf %265, %266 : vector<8x64xf32>
    %268 = arith.mulf %259, %204 : vector<8x64xf32>
    %269 = arith.mulf %253, %261 : vector<8x64xf32>
    %270 = arith.addf %268, %269 : vector<8x64xf32>
    %271 = math.tanh %270 : vector<8x64xf32>
    %272 = arith.mulf %267, %271 : vector<8x64xf32>
    %c0_83 = arith.constant 0 : index
    %c0_84 = arith.constant 0 : index
    %273 = vector.load %arg7[%c0_83, %c0_84] : memref<64x256xbf16, #tpu.memory_space<vmem>>, vector<64x256xbf16>
    %cst_85 = arith.constant dense<0.000000e+00> : vector<8x256xf32>
    %274 = tpu.matmul %242, %273, %cst_85 {dimension_numbers = #tpu.dot_dimension_numbers<[1], [0], [0], [1], [0, 0, 1, 1], [], []>} : vector<8x64xbf16>, vector<64x256xbf16>, vector<8x256xf32> -> vector<8x256xf32>
    %c0_86 = arith.constant 0 : index
    %c0_87 = arith.constant 0 : index
    %275 = vector.load %arg9[%c0_86, %c0_87] : memref<1x256xf32, #tpu.memory_space<vmem>>, vector<1x256xf32>
    %276 = vector.broadcast %275 : vector<1x256xf32> to vector<8x256xf32>
    %277 = arith.addf %274, %276 : vector<8x256xf32>
    %278 = arith.truncf %240 : vector<8x64xf32> to vector<8x64xbf16>
    %c0_88 = arith.constant 0 : index
    %c0_89 = arith.constant 0 : index
    %279 = vector.load %arg8[%c0_88, %c0_89] : memref<64x256xbf16, #tpu.memory_space<vmem>>, vector<64x256xbf16>
    %cst_90 = arith.constant dense<0.000000e+00> : vector<8x256xf32>
    %280 = tpu.matmul %278, %279, %cst_90 {dimension_numbers = #tpu.dot_dimension_numbers<[1], [0], [0], [1], [0, 0, 1, 1], [], []>} : vector<8x64xbf16>, vector<64x256xbf16>, vector<8x256xf32> -> vector<8x256xf32>
    %281 = arith.addf %277, %280 : vector<8x256xf32>
    %282 = vector.extract_strided_slice %281 {offsets = [0, 0], sizes = [8, 64], strides = [1, 1]} : vector<8x256xf32> to vector<8x64xf32>
    %283 = arith.negf %282 : vector<8x64xf32>
    %284 = math.exp %283 : vector<8x64xf32>
    %cst_91 = arith.constant 1.000000e+00 : f32
    %285 = vector.broadcast %cst_91 : f32 to vector<8x64xf32>
    %286 = arith.addf %285, %284 : vector<8x64xf32>
    %287 = arith.divf %285, %286 : vector<8x64xf32>
    %288 = vector.extract_strided_slice %281 {offsets = [0, 64], sizes = [8, 64], strides = [1, 1]} : vector<8x256xf32> to vector<8x64xf32>
    %289 = arith.negf %288 : vector<8x64xf32>
    %290 = math.exp %289 : vector<8x64xf32>
    %cst_92 = arith.constant 1.000000e+00 : f32
    %291 = vector.broadcast %cst_92 : f32 to vector<8x64xf32>
    %292 = arith.addf %291, %290 : vector<8x64xf32>
    %293 = arith.divf %291, %292 : vector<8x64xf32>
    %294 = vector.extract_strided_slice %281 {offsets = [0, 128], sizes = [8, 64], strides = [1, 1]} : vector<8x256xf32> to vector<8x64xf32>
    %295 = math.tanh %294 : vector<8x64xf32>
    %296 = vector.extract_strided_slice %281 {offsets = [0, 192], sizes = [8, 64], strides = [1, 1]} : vector<8x256xf32> to vector<8x64xf32>
    %297 = arith.negf %296 : vector<8x64xf32>
    %298 = math.exp %297 : vector<8x64xf32>
    %cst_93 = arith.constant 1.000000e+00 : f32
    %299 = vector.broadcast %cst_93 : f32 to vector<8x64xf32>
    %300 = arith.addf %299, %298 : vector<8x64xf32>
    %301 = arith.divf %299, %300 : vector<8x64xf32>
    %302 = arith.mulf %293, %238 : vector<8x64xf32>
    %303 = arith.mulf %287, %295 : vector<8x64xf32>
    %304 = arith.addf %302, %303 : vector<8x64xf32>
    %305 = math.tanh %304 : vector<8x64xf32>
    %306 = arith.mulf %301, %305 : vector<8x64xf32>
    %c24 = arith.constant 24 : index
    %c0_94 = arith.constant 0 : index
    %307 = vector.load %arg19[%c24, %c0_94] : memref<64x64xf32, #tpu.memory_space<vmem>>, vector<8x64xf32>
    tpu.vector_store %arg19[%c24, %c0_94], %306 {strides = array<i32>} : memref<64x64xf32, #tpu.memory_space<vmem>>, vector<8x64xf32>,
    %308 = arith.truncf %272 : vector<8x64xf32> to vector<8x64xbf16>
    %309 = vector.extract_strided_slice %5 {offsets = [40, 0], sizes = [8, 256], strides = [1, 1]} : vector<64x256xf32> to vector<8x256xf32>
    %310 = arith.truncf %272 : vector<8x64xf32> to vector<8x64xbf16>
    %c0_95 = arith.constant 0 : index
    %c0_96 = arith.constant 0 : index
    %311 = vector.load %arg5[%c0_95, %c0_96] : memref<64x256xbf16, #tpu.memory_space<vmem>>, vector<64x256xbf16>
    %cst_97 = arith.constant dense<0.000000e+00> : vector<8x256xf32>
    %312 = tpu.matmul %310, %311, %cst_97 {dimension_numbers = #tpu.dot_dimension_numbers<[1], [0], [0], [1], [0, 0, 1, 1], [], []>} : vector<8x64xbf16>, vector<64x256xbf16>, vector<8x256xf32> -> vector<8x256xf32>
    %313 = arith.addf %309, %312 : vector<8x256xf32>
    %314 = vector.extract_strided_slice %313 {offsets = [0, 0], sizes = [8, 64], strides = [1, 1]} : vector<8x256xf32> to vector<8x64xf32>
    %315 = arith.negf %314 : vector<8x64xf32>
    %316 = math.exp %315 : vector<8x64xf32>
    %cst_98 = arith.constant 1.000000e+00 : f32
    %317 = vector.broadcast %cst_98 : f32 to vector<8x64xf32>
    %318 = arith.addf %317, %316 : vector<8x64xf32>
    %319 = arith.divf %317, %318 : vector<8x64xf32>
    %320 = vector.extract_strided_slice %313 {offsets = [0, 64], sizes = [8, 64], strides = [1, 1]} : vector<8x256xf32> to vector<8x64xf32>
    %321 = arith.negf %320 : vector<8x64xf32>
    %322 = math.exp %321 : vector<8x64xf32>
    %cst_99 = arith.constant 1.000000e+00 : f32
    %323 = vector.broadcast %cst_99 : f32 to vector<8x64xf32>
    %324 = arith.addf %323, %322 : vector<8x64xf32>
    %325 = arith.divf %323, %324 : vector<8x64xf32>
    %326 = vector.extract_strided_slice %313 {offsets = [0, 128], sizes = [8, 64], strides = [1, 1]} : vector<8x256xf32> to vector<8x64xf32>
    %327 = math.tanh %326 : vector<8x64xf32>
    %328 = vector.extract_strided_slice %313 {offsets = [0, 192], sizes = [8, 64], strides = [1, 1]} : vector<8x256xf32> to vector<8x64xf32>
    %329 = arith.negf %328 : vector<8x64xf32>
    %330 = math.exp %329 : vector<8x64xf32>
    %cst_100 = arith.constant 1.000000e+00 : f32
    %331 = vector.broadcast %cst_100 : f32 to vector<8x64xf32>
    %332 = arith.addf %331, %330 : vector<8x64xf32>
    %333 = arith.divf %331, %332 : vector<8x64xf32>
    %334 = arith.mulf %325, %270 : vector<8x64xf32>
    %335 = arith.mulf %319, %327 : vector<8x64xf32>
    %336 = arith.addf %334, %335 : vector<8x64xf32>
    %337 = math.tanh %336 : vector<8x64xf32>
    %338 = arith.mulf %333, %337 : vector<8x64xf32>
    %c0_101 = arith.constant 0 : index
    %c0_102 = arith.constant 0 : index
    %339 = vector.load %arg7[%c0_101, %c0_102] : memref<64x256xbf16, #tpu.memory_space<vmem>>, vector<64x256xbf16>
    %cst_103 = arith.constant dense<0.000000e+00> : vector<8x256xf32>
    %340 = tpu.matmul %308, %339, %cst_103 {dimension_numbers = #tpu.dot_dimension_numbers<[1], [0], [0], [1], [0, 0, 1, 1], [], []>} : vector<8x64xbf16>, vector<64x256xbf16>, vector<8x256xf32> -> vector<8x256xf32>
    %c0_104 = arith.constant 0 : index
    %c0_105 = arith.constant 0 : index
    %341 = vector.load %arg9[%c0_104, %c0_105] : memref<1x256xf32, #tpu.memory_space<vmem>>, vector<1x256xf32>
    %342 = vector.broadcast %341 : vector<1x256xf32> to vector<8x256xf32>
    %343 = arith.addf %340, %342 : vector<8x256xf32>
    %344 = arith.truncf %306 : vector<8x64xf32> to vector<8x64xbf16>
    %c0_106 = arith.constant 0 : index
    %c0_107 = arith.constant 0 : index
    %345 = vector.load %arg8[%c0_106, %c0_107] : memref<64x256xbf16, #tpu.memory_space<vmem>>, vector<64x256xbf16>
    %cst_108 = arith.constant dense<0.000000e+00> : vector<8x256xf32>
    %346 = tpu.matmul %344, %345, %cst_108 {dimension_numbers = #tpu.dot_dimension_numbers<[1], [0], [0], [1], [0, 0, 1, 1], [], []>} : vector<8x64xbf16>, vector<64x256xbf16>, vector<8x256xf32> -> vector<8x256xf32>
    %347 = arith.addf %343, %346 : vector<8x256xf32>
    %348 = vector.extract_strided_slice %347 {offsets = [0, 0], sizes = [8, 64], strides = [1, 1]} : vector<8x256xf32> to vector<8x64xf32>
    %349 = arith.negf %348 : vector<8x64xf32>
    %350 = math.exp %349 : vector<8x64xf32>
    %cst_109 = arith.constant 1.000000e+00 : f32
    %351 = vector.broadcast %cst_109 : f32 to vector<8x64xf32>
    %352 = arith.addf %351, %350 : vector<8x64xf32>
    %353 = arith.divf %351, %352 : vector<8x64xf32>
    %354 = vector.extract_strided_slice %347 {offsets = [0, 64], sizes = [8, 64], strides = [1, 1]} : vector<8x256xf32> to vector<8x64xf32>
    %355 = arith.negf %354 : vector<8x64xf32>
    %356 = math.exp %355 : vector<8x64xf32>
    %cst_110 = arith.constant 1.000000e+00 : f32
    %357 = vector.broadcast %cst_110 : f32 to vector<8x64xf32>
    %358 = arith.addf %357, %356 : vector<8x64xf32>
    %359 = arith.divf %357, %358 : vector<8x64xf32>
    %360 = vector.extract_strided_slice %347 {offsets = [0, 128], sizes = [8, 64], strides = [1, 1]} : vector<8x256xf32> to vector<8x64xf32>
    %361 = math.tanh %360 : vector<8x64xf32>
    %362 = vector.extract_strided_slice %347 {offsets = [0, 192], sizes = [8, 64], strides = [1, 1]} : vector<8x256xf32> to vector<8x64xf32>
    %363 = arith.negf %362 : vector<8x64xf32>
    %364 = math.exp %363 : vector<8x64xf32>
    %cst_111 = arith.constant 1.000000e+00 : f32
    %365 = vector.broadcast %cst_111 : f32 to vector<8x64xf32>
    %366 = arith.addf %365, %364 : vector<8x64xf32>
    %367 = arith.divf %365, %366 : vector<8x64xf32>
    %368 = arith.mulf %359, %304 : vector<8x64xf32>
    %369 = arith.mulf %353, %361 : vector<8x64xf32>
    %370 = arith.addf %368, %369 : vector<8x64xf32>
    %371 = math.tanh %370 : vector<8x64xf32>
    %372 = arith.mulf %367, %371 : vector<8x64xf32>
    %c32 = arith.constant 32 : index
    %c0_112 = arith.constant 0 : index
    %373 = vector.load %arg19[%c32, %c0_112] : memref<64x64xf32, #tpu.memory_space<vmem>>, vector<8x64xf32>
    tpu.vector_store %arg19[%c32, %c0_112], %372 {strides = array<i32>} : memref<64x64xf32, #tpu.memory_space<vmem>>, vector<8x64xf32>,
    %374 = arith.truncf %338 : vector<8x64xf32> to vector<8x64xbf16>
    %375 = vector.extract_strided_slice %5 {offsets = [48, 0], sizes = [8, 256], strides = [1, 1]} : vector<64x256xf32> to vector<8x256xf32>
    %376 = arith.truncf %338 : vector<8x64xf32> to vector<8x64xbf16>
    %c0_113 = arith.constant 0 : index
    %c0_114 = arith.constant 0 : index
    %377 = vector.load %arg5[%c0_113, %c0_114] : memref<64x256xbf16, #tpu.memory_space<vmem>>, vector<64x256xbf16>
    %cst_115 = arith.constant dense<0.000000e+00> : vector<8x256xf32>
    %378 = tpu.matmul %376, %377, %cst_115 {dimension_numbers = #tpu.dot_dimension_numbers<[1], [0], [0], [1], [0, 0, 1, 1], [], []>} : vector<8x64xbf16>, vector<64x256xbf16>, vector<8x256xf32> -> vector<8x256xf32>
    %379 = arith.addf %375, %378 : vector<8x256xf32>
    %380 = vector.extract_strided_slice %379 {offsets = [0, 0], sizes = [8, 64], strides = [1, 1]} : vector<8x256xf32> to vector<8x64xf32>
    %381 = arith.negf %380 : vector<8x64xf32>
    %382 = math.exp %381 : vector<8x64xf32>
    %cst_116 = arith.constant 1.000000e+00 : f32
    %383 = vector.broadcast %cst_116 : f32 to vector<8x64xf32>
    %384 = arith.addf %383, %382 : vector<8x64xf32>
    %385 = arith.divf %383, %384 : vector<8x64xf32>
    %386 = vector.extract_strided_slice %379 {offsets = [0, 64], sizes = [8, 64], strides = [1, 1]} : vector<8x256xf32> to vector<8x64xf32>
    %387 = arith.negf %386 : vector<8x64xf32>
    %388 = math.exp %387 : vector<8x64xf32>
    %cst_117 = arith.constant 1.000000e+00 : f32
    %389 = vector.broadcast %cst_117 : f32 to vector<8x64xf32>
    %390 = arith.addf %389, %388 : vector<8x64xf32>
    %391 = arith.divf %389, %390 : vector<8x64xf32>
    %392 = vector.extract_strided_slice %379 {offsets = [0, 128], sizes = [8, 64], strides = [1, 1]} : vector<8x256xf32> to vector<8x64xf32>
    %393 = math.tanh %392 : vector<8x64xf32>
    %394 = vector.extract_strided_slice %379 {offsets = [0, 192], sizes = [8, 64], strides = [1, 1]} : vector<8x256xf32> to vector<8x64xf32>
    %395 = arith.negf %394 : vector<8x64xf32>
    %396 = math.exp %395 : vector<8x64xf32>
    %cst_118 = arith.constant 1.000000e+00 : f32
    %397 = vector.broadcast %cst_118 : f32 to vector<8x64xf32>
    %398 = arith.addf %397, %396 : vector<8x64xf32>
    %399 = arith.divf %397, %398 : vector<8x64xf32>
    %400 = arith.mulf %391, %336 : vector<8x64xf32>
    %401 = arith.mulf %385, %393 : vector<8x64xf32>
    %402 = arith.addf %400, %401 : vector<8x64xf32>
    %403 = math.tanh %402 : vector<8x64xf32>
    %404 = arith.mulf %399, %403 : vector<8x64xf32>
    %c0_119 = arith.constant 0 : index
    %c0_120 = arith.constant 0 : index
    %405 = vector.load %arg7[%c0_119, %c0_120] : memref<64x256xbf16, #tpu.memory_space<vmem>>, vector<64x256xbf16>
    %cst_121 = arith.constant dense<0.000000e+00> : vector<8x256xf32>
    %406 = tpu.matmul %374, %405, %cst_121 {dimension_numbers = #tpu.dot_dimension_numbers<[1], [0], [0], [1], [0, 0, 1, 1], [], []>} : vector<8x64xbf16>, vector<64x256xbf16>, vector<8x256xf32> -> vector<8x256xf32>
    %c0_122 = arith.constant 0 : index
    %c0_123 = arith.constant 0 : index
    %407 = vector.load %arg9[%c0_122, %c0_123] : memref<1x256xf32, #tpu.memory_space<vmem>>, vector<1x256xf32>
    %408 = vector.broadcast %407 : vector<1x256xf32> to vector<8x256xf32>
    %409 = arith.addf %406, %408 : vector<8x256xf32>
    %410 = arith.truncf %372 : vector<8x64xf32> to vector<8x64xbf16>
    %c0_124 = arith.constant 0 : index
    %c0_125 = arith.constant 0 : index
    %411 = vector.load %arg8[%c0_124, %c0_125] : memref<64x256xbf16, #tpu.memory_space<vmem>>, vector<64x256xbf16>
    %cst_126 = arith.constant dense<0.000000e+00> : vector<8x256xf32>
    %412 = tpu.matmul %410, %411, %cst_126 {dimension_numbers = #tpu.dot_dimension_numbers<[1], [0], [0], [1], [0, 0, 1, 1], [], []>} : vector<8x64xbf16>, vector<64x256xbf16>, vector<8x256xf32> -> vector<8x256xf32>
    %413 = arith.addf %409, %412 : vector<8x256xf32>
    %414 = vector.extract_strided_slice %413 {offsets = [0, 0], sizes = [8, 64], strides = [1, 1]} : vector<8x256xf32> to vector<8x64xf32>
    %415 = arith.negf %414 : vector<8x64xf32>
    %416 = math.exp %415 : vector<8x64xf32>
    %cst_127 = arith.constant 1.000000e+00 : f32
    %417 = vector.broadcast %cst_127 : f32 to vector<8x64xf32>
    %418 = arith.addf %417, %416 : vector<8x64xf32>
    %419 = arith.divf %417, %418 : vector<8x64xf32>
    %420 = vector.extract_strided_slice %413 {offsets = [0, 64], sizes = [8, 64], strides = [1, 1]} : vector<8x256xf32> to vector<8x64xf32>
    %421 = arith.negf %420 : vector<8x64xf32>
    %422 = math.exp %421 : vector<8x64xf32>
    %cst_128 = arith.constant 1.000000e+00 : f32
    %423 = vector.broadcast %cst_128 : f32 to vector<8x64xf32>
    %424 = arith.addf %423, %422 : vector<8x64xf32>
    %425 = arith.divf %423, %424 : vector<8x64xf32>
    %426 = vector.extract_strided_slice %413 {offsets = [0, 128], sizes = [8, 64], strides = [1, 1]} : vector<8x256xf32> to vector<8x64xf32>
    %427 = math.tanh %426 : vector<8x64xf32>
    %428 = vector.extract_strided_slice %413 {offsets = [0, 192], sizes = [8, 64], strides = [1, 1]} : vector<8x256xf32> to vector<8x64xf32>
    %429 = arith.negf %428 : vector<8x64xf32>
    %430 = math.exp %429 : vector<8x64xf32>
    %cst_129 = arith.constant 1.000000e+00 : f32
    %431 = vector.broadcast %cst_129 : f32 to vector<8x64xf32>
    %432 = arith.addf %431, %430 : vector<8x64xf32>
    %433 = arith.divf %431, %432 : vector<8x64xf32>
    %434 = arith.mulf %425, %370 : vector<8x64xf32>
    %435 = arith.mulf %419, %427 : vector<8x64xf32>
    %436 = arith.addf %434, %435 : vector<8x64xf32>
    %437 = math.tanh %436 : vector<8x64xf32>
    %438 = arith.mulf %433, %437 : vector<8x64xf32>
    %c40 = arith.constant 40 : index
    %c0_130 = arith.constant 0 : index
    %439 = vector.load %arg19[%c40, %c0_130] : memref<64x64xf32, #tpu.memory_space<vmem>>, vector<8x64xf32>
    tpu.vector_store %arg19[%c40, %c0_130], %438 {strides = array<i32>} : memref<64x64xf32, #tpu.memory_space<vmem>>, vector<8x64xf32>,
    %440 = arith.truncf %404 : vector<8x64xf32> to vector<8x64xbf16>
    %441 = vector.extract_strided_slice %5 {offsets = [56, 0], sizes = [8, 256], strides = [1, 1]} : vector<64x256xf32> to vector<8x256xf32>
    %442 = arith.truncf %404 : vector<8x64xf32> to vector<8x64xbf16>
    %c0_131 = arith.constant 0 : index
    %c0_132 = arith.constant 0 : index
    %443 = vector.load %arg5[%c0_131, %c0_132] : memref<64x256xbf16, #tpu.memory_space<vmem>>, vector<64x256xbf16>
    %cst_133 = arith.constant dense<0.000000e+00> : vector<8x256xf32>
    %444 = tpu.matmul %442, %443, %cst_133 {dimension_numbers = #tpu.dot_dimension_numbers<[1], [0], [0], [1], [0, 0, 1, 1], [], []>} : vector<8x64xbf16>, vector<64x256xbf16>, vector<8x256xf32> -> vector<8x256xf32>
    %445 = arith.addf %441, %444 : vector<8x256xf32>
    %446 = vector.extract_strided_slice %445 {offsets = [0, 0], sizes = [8, 64], strides = [1, 1]} : vector<8x256xf32> to vector<8x64xf32>
    %447 = arith.negf %446 : vector<8x64xf32>
    %448 = math.exp %447 : vector<8x64xf32>
    %cst_134 = arith.constant 1.000000e+00 : f32
    %449 = vector.broadcast %cst_134 : f32 to vector<8x64xf32>
    %450 = arith.addf %449, %448 : vector<8x64xf32>
    %451 = arith.divf %449, %450 : vector<8x64xf32>
    %452 = vector.extract_strided_slice %445 {offsets = [0, 64], sizes = [8, 64], strides = [1, 1]} : vector<8x256xf32> to vector<8x64xf32>
    %453 = arith.negf %452 : vector<8x64xf32>
    %454 = math.exp %453 : vector<8x64xf32>
    %cst_135 = arith.constant 1.000000e+00 : f32
    %455 = vector.broadcast %cst_135 : f32 to vector<8x64xf32>
    %456 = arith.addf %455, %454 : vector<8x64xf32>
    %457 = arith.divf %455, %456 : vector<8x64xf32>
    %458 = vector.extract_strided_slice %445 {offsets = [0, 128], sizes = [8, 64], strides = [1, 1]} : vector<8x256xf32> to vector<8x64xf32>
    %459 = math.tanh %458 : vector<8x64xf32>
    %460 = vector.extract_strided_slice %445 {offsets = [0, 192], sizes = [8, 64], strides = [1, 1]} : vector<8x256xf32> to vector<8x64xf32>
    %461 = arith.negf %460 : vector<8x64xf32>
    %462 = math.exp %461 : vector<8x64xf32>
    %cst_136 = arith.constant 1.000000e+00 : f32
    %463 = vector.broadcast %cst_136 : f32 to vector<8x64xf32>
    %464 = arith.addf %463, %462 : vector<8x64xf32>
    %465 = arith.divf %463, %464 : vector<8x64xf32>
    %466 = arith.mulf %457, %402 : vector<8x64xf32>
    %467 = arith.mulf %451, %459 : vector<8x64xf32>
    %468 = arith.addf %466, %467 : vector<8x64xf32>
    %469 = math.tanh %468 : vector<8x64xf32>
    %470 = arith.mulf %465, %469 : vector<8x64xf32>
    %c0_137 = arith.constant 0 : index
    %c0_138 = arith.constant 0 : index
    %471 = vector.load %arg7[%c0_137, %c0_138] : memref<64x256xbf16, #tpu.memory_space<vmem>>, vector<64x256xbf16>
    %cst_139 = arith.constant dense<0.000000e+00> : vector<8x256xf32>
    %472 = tpu.matmul %440, %471, %cst_139 {dimension_numbers = #tpu.dot_dimension_numbers<[1], [0], [0], [1], [0, 0, 1, 1], [], []>} : vector<8x64xbf16>, vector<64x256xbf16>, vector<8x256xf32> -> vector<8x256xf32>
    %c0_140 = arith.constant 0 : index
    %c0_141 = arith.constant 0 : index
    %473 = vector.load %arg9[%c0_140, %c0_141] : memref<1x256xf32, #tpu.memory_space<vmem>>, vector<1x256xf32>
    %474 = vector.broadcast %473 : vector<1x256xf32> to vector<8x256xf32>
    %475 = arith.addf %472, %474 : vector<8x256xf32>
    %476 = arith.truncf %438 : vector<8x64xf32> to vector<8x64xbf16>
    %c0_142 = arith.constant 0 : index
    %c0_143 = arith.constant 0 : index
    %477 = vector.load %arg8[%c0_142, %c0_143] : memref<64x256xbf16, #tpu.memory_space<vmem>>, vector<64x256xbf16>
    %cst_144 = arith.constant dense<0.000000e+00> : vector<8x256xf32>
    %478 = tpu.matmul %476, %477, %cst_144 {dimension_numbers = #tpu.dot_dimension_numbers<[1], [0], [0], [1], [0, 0, 1, 1], [], []>} : vector<8x64xbf16>, vector<64x256xbf16>, vector<8x256xf32> -> vector<8x256xf32>
    %479 = arith.addf %475, %478 : vector<8x256xf32>
    %480 = vector.extract_strided_slice %479 {offsets = [0, 0], sizes = [8, 64], strides = [1, 1]} : vector<8x256xf32> to vector<8x64xf32>
    %481 = arith.negf %480 : vector<8x64xf32>
    %482 = math.exp %481 : vector<8x64xf32>
    %cst_145 = arith.constant 1.000000e+00 : f32
    %483 = vector.broadcast %cst_145 : f32 to vector<8x64xf32>
    %484 = arith.addf %483, %482 : vector<8x64xf32>
    %485 = arith.divf %483, %484 : vector<8x64xf32>
    %486 = vector.extract_strided_slice %479 {offsets = [0, 64], sizes = [8, 64], strides = [1, 1]} : vector<8x256xf32> to vector<8x64xf32>
    %487 = arith.negf %486 : vector<8x64xf32>
    %488 = math.exp %487 : vector<8x64xf32>
    %cst_146 = arith.constant 1.000000e+00 : f32
    %489 = vector.broadcast %cst_146 : f32 to vector<8x64xf32>
    %490 = arith.addf %489, %488 : vector<8x64xf32>
    %491 = arith.divf %489, %490 : vector<8x64xf32>
    %492 = vector.extract_strided_slice %479 {offsets = [0, 128], sizes = [8, 64], strides = [1, 1]} : vector<8x256xf32> to vector<8x64xf32>
    %493 = math.tanh %492 : vector<8x64xf32>
    %494 = vector.extract_strided_slice %479 {offsets = [0, 192], sizes = [8, 64], strides = [1, 1]} : vector<8x256xf32> to vector<8x64xf32>
    %495 = arith.negf %494 : vector<8x64xf32>
    %496 = math.exp %495 : vector<8x64xf32>
    %cst_147 = arith.constant 1.000000e+00 : f32
    %497 = vector.broadcast %cst_147 : f32 to vector<8x64xf32>
    %498 = arith.addf %497, %496 : vector<8x64xf32>
    %499 = arith.divf %497, %498 : vector<8x64xf32>
    %500 = arith.mulf %491, %436 : vector<8x64xf32>
    %501 = arith.mulf %485, %493 : vector<8x64xf32>
    %502 = arith.addf %500, %501 : vector<8x64xf32>
    %503 = math.tanh %502 : vector<8x64xf32>
    %504 = arith.mulf %499, %503 : vector<8x64xf32>
    %c48 = arith.constant 48 : index
    %c0_148 = arith.constant 0 : index
    %505 = vector.load %arg19[%c48, %c0_148] : memref<64x64xf32, #tpu.memory_space<vmem>>, vector<8x64xf32>
    tpu.vector_store %arg19[%c48, %c0_148], %504 {strides = array<i32>} : memref<64x64xf32, #tpu.memory_space<vmem>>, vector<8x64xf32>,
    %506 = arith.truncf %470 : vector<8x64xf32> to vector<8x64xbf16>
    %c0_149 = arith.constant 0 : index
    %c0_150 = arith.constant 0 : index
    %507 = vector.load %arg7[%c0_149, %c0_150] : memref<64x256xbf16, #tpu.memory_space<vmem>>, vector<64x256xbf16>
    %cst_151 = arith.constant dense<0.000000e+00> : vector<8x256xf32>
    %508 = tpu.matmul %506, %507, %cst_151 {dimension_numbers = #tpu.dot_dimension_numbers<[1], [0], [0], [1], [0, 0, 1, 1], [], []>} : vector<8x64xbf16>, vector<64x256xbf16>, vector<8x256xf32> -> vector<8x256xf32>
    %c0_152 = arith.constant 0 : index
    %c0_153 = arith.constant 0 : index
    %509 = vector.load %arg9[%c0_152, %c0_153] : memref<1x256xf32, #tpu.memory_space<vmem>>, vector<1x256xf32>
    %510 = vector.broadcast %509 : vector<1x256xf32> to vector<8x256xf32>
    %511 = arith.addf %508, %510 : vector<8x256xf32>
    %512 = arith.truncf %504 : vector<8x64xf32> to vector<8x64xbf16>
    %c0_154 = arith.constant 0 : index
    %c0_155 = arith.constant 0 : index
    %513 = vector.load %arg8[%c0_154, %c0_155] : memref<64x256xbf16, #tpu.memory_space<vmem>>, vector<64x256xbf16>
    %cst_156 = arith.constant dense<0.000000e+00> : vector<8x256xf32>
    %514 = tpu.matmul %512, %513, %cst_156 {dimension_numbers = #tpu.dot_dimension_numbers<[1], [0], [0], [1], [0, 0, 1, 1], [], []>} : vector<8x64xbf16>, vector<64x256xbf16>, vector<8x256xf32> -> vector<8x256xf32>
    %515 = arith.addf %511, %514 : vector<8x256xf32>
    %516 = vector.extract_strided_slice %515 {offsets = [0, 0], sizes = [8, 64], strides = [1, 1]} : vector<8x256xf32> to vector<8x64xf32>
    %517 = arith.negf %516 : vector<8x64xf32>
    %518 = math.exp %517 : vector<8x64xf32>
    %cst_157 = arith.constant 1.000000e+00 : f32
    %519 = vector.broadcast %cst_157 : f32 to vector<8x64xf32>
    %520 = arith.addf %519, %518 : vector<8x64xf32>
    %521 = arith.divf %519, %520 : vector<8x64xf32>
    %522 = vector.extract_strided_slice %515 {offsets = [0, 64], sizes = [8, 64], strides = [1, 1]} : vector<8x256xf32> to vector<8x64xf32>
    %523 = arith.negf %522 : vector<8x64xf32>
    %524 = math.exp %523 : vector<8x64xf32>
    %cst_158 = arith.constant 1.000000e+00 : f32
    %525 = vector.broadcast %cst_158 : f32 to vector<8x64xf32>
    %526 = arith.addf %525, %524 : vector<8x64xf32>
    %527 = arith.divf %525, %526 : vector<8x64xf32>
    %528 = vector.extract_strided_slice %515 {offsets = [0, 128], sizes = [8, 64], strides = [1, 1]} : vector<8x256xf32> to vector<8x64xf32>
    %529 = math.tanh %528 : vector<8x64xf32>
    %530 = vector.extract_strided_slice %515 {offsets = [0, 192], sizes = [8, 64], strides = [1, 1]} : vector<8x256xf32> to vector<8x64xf32>
    %531 = arith.negf %530 : vector<8x64xf32>
    %532 = math.exp %531 : vector<8x64xf32>
    %cst_159 = arith.constant 1.000000e+00 : f32
    %533 = vector.broadcast %cst_159 : f32 to vector<8x64xf32>
    %534 = arith.addf %533, %532 : vector<8x64xf32>
    %535 = arith.divf %533, %534 : vector<8x64xf32>
    %536 = arith.mulf %527, %502 : vector<8x64xf32>
    %537 = arith.mulf %521, %529 : vector<8x64xf32>
    %538 = arith.addf %536, %537 : vector<8x64xf32>
    %539 = math.tanh %538 : vector<8x64xf32>
    %540 = arith.mulf %535, %539 : vector<8x64xf32>
    %c56 = arith.constant 56 : index
    %c0_160 = arith.constant 0 : index
    %541 = vector.load %arg19[%c56, %c0_160] : memref<64x64xf32, #tpu.memory_space<vmem>>, vector<8x64xf32>
    tpu.vector_store %arg19[%c56, %c0_160], %540 {strides = array<i32>} : memref<64x64xf32, #tpu.memory_space<vmem>>, vector<8x64xf32>,
    %c0_161 = arith.constant 0 : index
    %c0_162 = arith.constant 0 : index
    %c0_163 = arith.constant 0 : index
    %542 = vector.load %arg17[%c0_161, %c0_162, %c0_163] : memref<2x8x64xf32, #tpu.memory_space<vmem>>, vector<1x8x64xf32>
    %543 = vector.shape_cast %542 : vector<1x8x64xf32> to vector<8x64xf32>
    %544 = vector.shape_cast %470 : vector<8x64xf32> to vector<1x8x64xf32>
    tpu.vector_store %arg17[%c0_161, %c0_162, %c0_163], %544 {strides = array<i32>} : memref<2x8x64xf32, #tpu.memory_space<vmem>>, vector<1x8x64xf32>,
    %c0_164 = arith.constant 0 : index
    %c0_165 = arith.constant 0 : index
    %c0_166 = arith.constant 0 : index
    %545 = vector.load %arg18[%c0_164, %c0_165, %c0_166] : memref<2x8x64xf32, #tpu.memory_space<vmem>>, vector<1x8x64xf32>
    %546 = vector.shape_cast %545 : vector<1x8x64xf32> to vector<8x64xf32>
    %547 = vector.shape_cast %468 : vector<8x64xf32> to vector<1x8x64xf32>
    tpu.vector_store %arg18[%c0_164, %c0_165, %c0_166], %547 {strides = array<i32>} : memref<2x8x64xf32, #tpu.memory_space<vmem>>, vector<1x8x64xf32>,
    %c1_167 = arith.constant 1 : index
    %c0_168 = arith.constant 0 : index
    %c0_169 = arith.constant 0 : index
    %548 = vector.load %arg17[%c1_167, %c0_168, %c0_169] : memref<2x8x64xf32, #tpu.memory_space<vmem>>, vector<1x8x64xf32>
    %549 = vector.shape_cast %548 : vector<1x8x64xf32> to vector<8x64xf32>
    %550 = vector.shape_cast %540 : vector<8x64xf32> to vector<1x8x64xf32>
    tpu.vector_store %arg17[%c1_167, %c0_168, %c0_169], %550 {strides = array<i32>} : memref<2x8x64xf32, #tpu.memory_space<vmem>>, vector<1x8x64xf32>,
    %c1_170 = arith.constant 1 : index
    %c0_171 = arith.constant 0 : index
    %c0_172 = arith.constant 0 : index
    %551 = vector.load %arg18[%c1_170, %c0_171, %c0_172] : memref<2x8x64xf32, #tpu.memory_space<vmem>>, vector<1x8x64xf32>
    %552 = vector.shape_cast %551 : vector<1x8x64xf32> to vector<8x64xf32>
    %553 = vector.shape_cast %538 : vector<8x64xf32> to vector<1x8x64xf32>
    tpu.vector_store %arg18[%c1_170, %c0_171, %c0_172], %553 {strides = array<i32>} : memref<2x8x64xf32, #tpu.memory_space<vmem>>, vector<1x8x64xf32>,
    %c0_173 = arith.constant 0 : index
    %c0_174 = arith.constant 0 : index
    %554 = vector.load %arg19[%c0_173, %c0_174] : memref<64x64xf32, #tpu.memory_space<vmem>>, vector<64x64xf32>
    %555 = arith.truncf %554 : vector<64x64xf32> to vector<64x64xbf16>
    %c0_175 = arith.constant 0 : index
    %c0_176 = arith.constant 0 : index
    %556 = vector.load %arg10[%c0_175, %c0_176] : memref<64x32xbf16, #tpu.memory_space<vmem>>, vector<64x32xbf16>
    %cst_177 = arith.constant dense<0.000000e+00> : vector<64x32xf32>
    %557 = tpu.matmul %555, %556, %cst_177 {dimension_numbers = #tpu.dot_dimension_numbers<[1], [0], [0], [1], [0, 0, 1, 1], [], []>} : vector<64x64xbf16>, vector<64x32xbf16>, vector<64x32xf32> -> vector<64x32xf32>
    %c0_178 = arith.constant 0 : index
    %c0_179 = arith.constant 0 : index
    %558 = vector.load %arg11[%c0_178, %c0_179] : memref<1x32xf32, #tpu.memory_space<vmem>>, vector<1x32xf32>
    %559 = vector.broadcast %558 : vector<1x32xf32> to vector<64x32xf32>
    %560 = arith.addf %557, %559 : vector<64x32xf32>
    %cst_180 = arith.constant dense<0.000000e+00> : vector<64xf32>
    %561 = vector.multi_reduction <add>, %560, %cst_180 [1] : vector<64x32xf32> to vector<64xf32>
    %562 = vector.shape_cast %561 : vector<64xf32> to vector<64x1xf32>
    %cst_181 = arith.constant 3.200000e+01 : f32
    %563 = vector.broadcast %cst_181 : f32 to vector<64x1xf32>
    %564 = arith.divf %562, %563 : vector<64x1xf32>
    %565 = arith.mulf %560, %560 : vector<64x32xf32>
    %cst_182 = arith.constant dense<0.000000e+00> : vector<64xf32>
    %566 = vector.multi_reduction <add>, %565, %cst_182 [1] : vector<64x32xf32> to vector<64xf32>
    %567 = vector.shape_cast %566 : vector<64xf32> to vector<64x1xf32>
    %cst_183 = arith.constant 3.200000e+01 : f32
    %568 = vector.broadcast %cst_183 : f32 to vector<64x1xf32>
    %569 = arith.divf %567, %568 : vector<64x1xf32>
    %570 = arith.mulf %564, %564 : vector<64x1xf32>
    %571 = arith.subf %569, %570 : vector<64x1xf32>
    %572 = vector.broadcast %564 : vector<64x1xf32> to vector<64x32xf32>
    %573 = arith.subf %560, %572 : vector<64x32xf32>
    %cst_184 = arith.constant 9.99999974E-6 : f32
    %574 = vector.broadcast %cst_184 : f32 to vector<64x1xf32>
    %575 = arith.addf %571, %574 : vector<64x1xf32>
    %576 = math.rsqrt %575 : vector<64x1xf32>
    %577 = vector.broadcast %576 : vector<64x1xf32> to vector<64x32xf32>
    %578 = arith.mulf %573, %577 : vector<64x32xf32>
    %c0_185 = arith.constant 0 : index
    %c0_186 = arith.constant 0 : index
    %579 = vector.load %arg12[%c0_185, %c0_186] : memref<1x32xf32, #tpu.memory_space<vmem>>, vector<1x32xf32>
    %580 = vector.broadcast %579 : vector<1x32xf32> to vector<64x32xf32>
    %581 = arith.mulf %578, %580 : vector<64x32xf32>
    %c0_187 = arith.constant 0 : index
    %c0_188 = arith.constant 0 : index
    %582 = vector.load %arg13[%c0_187, %c0_188] : memref<1x32xf32, #tpu.memory_space<vmem>>, vector<1x32xf32>
    %583 = vector.broadcast %582 : vector<1x32xf32> to vector<64x32xf32>
    %584 = arith.addf %581, %583 : vector<64x32xf32>
    %cst_189 = arith.constant 0.000000e+00 : f32
    %585 = vector.broadcast %cst_189 : f32 to vector<64x32xf32>
    %586 = arith.cmpf oge, %584, %585 : vector<64x32xf32>
    %cst_190 = arith.constant 0.00999999977 : f32
    %587 = vector.broadcast %cst_190 : f32 to vector<64x32xf32>
    %588 = arith.mulf %587, %584 : vector<64x32xf32>
    %589 = arith.select %586, %584, %588 : vector<64x32xi1>, vector<64x32xf32>
    %590 = arith.truncf %589 : vector<64x32xf32> to vector<64x32xbf16>
    %c0_191 = arith.constant 0 : index
    %c0_192 = arith.constant 0 : index
    %591 = vector.load %arg14[%c0_191, %c0_192] : memref<32x128xbf16, #tpu.memory_space<vmem>>, vector<32x128xbf16>
    %cst_193 = arith.constant dense<0.000000e+00> : vector<64x128xf32>
    %592 = tpu.matmul %590, %591, %cst_193 {dimension_numbers = #tpu.dot_dimension_numbers<[1], [0], [0], [1], [0, 0, 1, 1], [], []>} : vector<64x32xbf16>, vector<32x128xbf16>, vector<64x128xf32> -> vector<64x128xf32>
    %c0_194 = arith.constant 0 : index
    %c0_195 = arith.constant 0 : index
    %593 = vector.load %arg15[%c0_194, %c0_195] : memref<1x128xf32, #tpu.memory_space<vmem>>, vector<1x128xf32>
    %594 = vector.broadcast %593 : vector<1x128xf32> to vector<64x128xf32>
    %595 = arith.addf %592, %594 : vector<64x128xf32>
    %c0_196 = arith.constant 0 : index
    %c0_197 = arith.constant 0 : index
    %596 = vector.load %arg16[%c0_196, %c0_197] : memref<64x128xf32, #tpu.memory_space<vmem>>, vector<64x128xf32>
    tpu.vector_store %arg16[%c0_196, %c0_197], %595 {strides = array<i32>} : memref<64x128xf32, #tpu.memory_space<vmem>>, vector<64x128xf32>,
    return
  }
  func.func @transform_0(%arg0: i32) -> (i32, i32) {
    %c0_i32 = arith.constant 0 : i32
    %c0_i32_0 = arith.constant 0 : i32
    %c0_i32_1 = arith.constant 0 : i32
    return %c0_i32, %c0_i32_0 : i32, i32
  }
  func.func @transform_1(%arg0: i32) -> (i32, i32, i32) {
    %c0_i32 = arith.constant 0 : i32
    %c0_i32_0 = arith.constant 0 : i32
    %c0_i32_1 = arith.constant 0 : i32
    %c0_i32_2 = arith.constant 0 : i32
    return %c0_i32, %c0_i32_0, %c0_i32_1 : i32, i32, i32
  }
  func.func @transform_2(%arg0: i32) -> (i32, i32, i32) {
    %c0_i32 = arith.constant 0 : i32
    %c0_i32_0 = arith.constant 0 : i32
    %c0_i32_1 = arith.constant 0 : i32
    %c0_i32_2 = arith.constant 0 : i32
    return %c0_i32, %c0_i32_0, %c0_i32_1 : i32, i32, i32
  }
  func.func @transform_3(%arg0: i32) -> (i32, i32) {
    %c0_i32 = arith.constant 0 : i32
    %c0_i32_0 = arith.constant 0 : i32
    %c0_i32_1 = arith.constant 0 : i32
    return %c0_i32, %c0_i32_0 : i32, i32
  }
  func.func @transform_4(%arg0: i32) -> (i32, i32) {
    %c0_i32 = arith.constant 0 : i32
    %c0_i32_0 = arith.constant 0 : i32
    %c0_i32_1 = arith.constant 0 : i32
    return %c0_i32, %c0_i32_0 : i32, i32
  }
  func.func @transform_5(%arg0: i32) -> (i32, i32) {
    %c0_i32 = arith.constant 0 : i32
    %c0_i32_0 = arith.constant 0 : i32
    %c0_i32_1 = arith.constant 0 : i32
    return %c0_i32, %c0_i32_0 : i32, i32
  }
  func.func @transform_6(%arg0: i32) -> (i32, i32) {
    %c0_i32 = arith.constant 0 : i32
    %c0_i32_0 = arith.constant 0 : i32
    %c0_i32_1 = arith.constant 0 : i32
    return %c0_i32, %c0_i32_0 : i32, i32
  }
  func.func @transform_7(%arg0: i32) -> (i32, i32) {
    %c0_i32 = arith.constant 0 : i32
    %c0_i32_0 = arith.constant 0 : i32
    %c0_i32_1 = arith.constant 0 : i32
    return %c0_i32, %c0_i32_0 : i32, i32
  }
  func.func @transform_8(%arg0: i32) -> (i32, i32) {
    %c0_i32 = arith.constant 0 : i32
    %c0_i32_0 = arith.constant 0 : i32
    %c0_i32_1 = arith.constant 0 : i32
    return %c0_i32, %c0_i32_0 : i32, i32
  }
  func.func @transform_9(%arg0: i32) -> (i32, i32) {
    %c0_i32 = arith.constant 0 : i32
    %c0_i32_0 = arith.constant 0 : i32
    %c0_i32_1 = arith.constant 0 : i32
    return %c0_i32, %c0_i32_0 : i32, i32
  }
  func.func @transform_10(%arg0: i32) -> (i32, i32) {
    %c0_i32 = arith.constant 0 : i32
    %c0_i32_0 = arith.constant 0 : i32
    %c0_i32_1 = arith.constant 0 : i32
    return %c0_i32, %c0_i32_0 : i32, i32
  }
  func.func @transform_11(%arg0: i32) -> (i32, i32) {
    %c0_i32 = arith.constant 0 : i32
    %c0_i32_0 = arith.constant 0 : i32
    %c0_i32_1 = arith.constant 0 : i32
    return %c0_i32, %c0_i32_0 : i32, i32
  }
  func.func @transform_12(%arg0: i32) -> (i32, i32) {
    %c0_i32 = arith.constant 0 : i32
    %c0_i32_0 = arith.constant 0 : i32
    %c0_i32_1 = arith.constant 0 : i32
    return %c0_i32, %c0_i32_0 : i32, i32
  }
  func.func @transform_13(%arg0: i32) -> (i32, i32) {
    %c0_i32 = arith.constant 0 : i32
    %c0_i32_0 = arith.constant 0 : i32
    %c0_i32_1 = arith.constant 0 : i32
    return %c0_i32, %c0_i32_0 : i32, i32
  }
  func.func @transform_14(%arg0: i32) -> (i32, i32) {
    %c0_i32 = arith.constant 0 : i32
    %c0_i32_0 = arith.constant 0 : i32
    %c0_i32_1 = arith.constant 0 : i32
    return %c0_i32, %c0_i32_0 : i32, i32
  }
  func.func @transform_15(%arg0: i32) -> (i32, i32) {
    %c0_i32 = arith.constant 0 : i32
    %c0_i32_0 = arith.constant 0 : i32
    %c0_i32_1 = arith.constant 0 : i32
    return %c0_i32, %c0_i32_0 : i32, i32
  }
  func.func @transform_16(%arg0: i32) -> (i32, i32, i32) {
    %c0_i32 = arith.constant 0 : i32
    %c0_i32_0 = arith.constant 0 : i32
    %c0_i32_1 = arith.constant 0 : i32
    %c0_i32_2 = arith.constant 0 : i32
    return %c0_i32, %c0_i32_0, %c0_i32_1 : i32, i32, i32
  }
  func.func @transform_17(%arg0: i32) -> (i32, i32, i32) {
    %c0_i32 = arith.constant 0 : i32
    %c0_i32_0 = arith.constant 0 : i32
    %c0_i32_1 = arith.constant 0 : i32
    %c0_i32_2 = arith.constant 0 : i32
    return %c0_i32, %c0_i32_0, %c0_i32_1 : i32, i32, i32
  }
}

</mosaic_0001>

<llo_original>
// kernel: lm_forward.1
$region0: #{lm_forward.1}
  #allocation0 [shape = 'u32[]', space=smem, size = 0x4, offset = 0x4, fixed_abs, tag = 'smem constant byte address 0x4 - core index']
  #allocation1 [shape = 'u32[72,128]{1,0:T(1,128)}', space=vmem, size = 0x9000, scoped, tag = 'internal scratch']
  #allocation2 [shape = 'f32[64,64]{1,0:T(8,128)}', space=vmem, size = 0x8000, scoped, tag = 'scratch operand']
  %s0 = inlined_call_operand.vmem [shape: bf16[64,32], index: 0, kind: input, shape index: {}]
  %s1 = inlined_call_operand.vmem [shape: f32[2,8,64], index: 1, kind: input, shape index: {}, may-alias: {1,2}]
  %s2 = inlined_call_operand.vmem [shape: f32[2,8,64], index: 2, kind: input, shape index: {}, may-alias: {1,2}]
  %s3 = inlined_call_operand.vmem [shape: bf16[32,256], index: 3, kind: input, shape index: {}]
  %s4 = inlined_call_operand.vmem [shape: bf16[64,256], index: 4, kind: input, shape index: {}]
  %s5 = inlined_call_operand.vmem [shape: f32[1,256], index: 5, kind: input, shape index: {}]
  %s6 = inlined_call_operand.vmem [shape: bf16[64,256], index: 6, kind: input, shape index: {}]
  %s7 = inlined_call_operand.hbm [shape: bf16[64,256], index: 7, kind: input, shape index: {}]
  %s8 = inlined_call_operand.vmem [shape: f32[1,256], index: 8, kind: input, shape index: {}]
  %s9 = inlined_call_operand.hbm [shape: bf16[64,32], index: 9, kind: input, shape index: {}]
  %s10 = inlined_call_operand.vmem [shape: f32[1,32], index: 10, kind: input, shape index: {}]
  %s11 = inlined_call_operand.vmem [shape: f32[1,32], index: 11, kind: input, shape index: {}]
  %s12 = inlined_call_operand.vmem [shape: f32[1,32], index: 12, kind: input, shape index: {}]
  %s13 = inlined_call_operand.vmem [shape: bf16[32,128], index: 13, kind: input, shape index: {}]
  %s14 = inlined_call_operand.vmem [shape: f32[1,128], index: 14, kind: input, shape index: {}]
  %s15 = inlined_call_operand.vmem [shape: f32[64,128], index: 15, kind: output, shape index: {0}]
  %s16 = inlined_call_operand.vmem [shape: f32[2,8,64], index: 16, kind: output, shape index: {1}]
  %s17 = inlined_call_operand.vmem [shape: f32[2,8,64], index: 17, kind: output, shape index: {2}]
  %18 = xla_tuple %s15, %s16, %s17
  %s19 = sld [smem:[#allocation0]]
  $region94: #{lm_forward.1} parent=0
    _
  %s21 = ssub.s32 1, %s19
  %s22 = scalar_select 0, %s21, %s19
  $region1: #{lm_forward.1} parent=0
    #allocation3 [shape = 'u8[32768]{0}', space=vmem, size = 0x8000, scoped, tag = 'input window, operand 7, single buffered']
    #allocation4 [shape = 's32[1]{0}', space=sflag, size = 0x4, scoped, tag = 'scoped memory for lm_forward.1']
    #allocation5 [shape = 'u8[16384]{0}', space=vmem, size = 0x4000, scoped, tag = 'input window, operand 9, single buffered']
    #allocation6 [shape = 's32[1]{0}', space=sflag, size = 0x4, scoped, tag = 'scoped memory for lm_forward.1']
    %23 = vsyncpa [#allocation4], 0
    %24 = vsyncpa [#allocation6], 0
    // Predicated region
    $region2: #{lm_forward.1} parent=1 // pred_check
      _
    $region3: #{lm_forward.1} parent=1 // pred_check_branch
      %26 = sbr.rel (0) target = $region5
    $region4: #{lm_forward.1} parent=1 // pred_region
      _
    $region5: #{lm_forward.1} parent=1 // pred_fallthru
      _
    // Predicated region
    $region6: #{lm_forward.1} parent=1 // pred_check
      _
    $region7: #{lm_forward.1} parent=1 // pred_check_branch
      %28 = sbr.rel (0) target = $region9
    $region8: #{lm_forward.1} parent=1 // pred_region
      _
    $region9: #{lm_forward.1} parent=1 // pred_fallthru
      _
    // Predicated region
    $region10: #{lm_forward.1} parent=1 // pred_check
      _
    $region11: #{lm_forward.1} parent=1 // pred_check_branch
      %30 = sbr.rel (0) target = $region13
    $region12: #{lm_forward.1} parent=1 // pred_region
      _
    $region13: #{lm_forward.1} parent=1 // pred_fallthru
      _
    // Predicated region
    $region14: #{lm_forward.1} parent=1 // pred_check
      _
    $region15: #{lm_forward.1} parent=1 // pred_check_branch
      %32 = sbr.rel (0) target = $region17
    $region16: #{lm_forward.1} parent=1 // pred_region
      _
    $region17: #{lm_forward.1} parent=1 // pred_fallthru
      _
    // Predicated region
    $region18: #{lm_forward.1} parent=1 // pred_check
      _
    $region19: #{lm_forward.1} parent=1 // pred_check_branch
      %34 = sbr.rel (0) target = $region21
    $region20: #{lm_forward.1} parent=1 // pred_region
      _
    $region21: #{lm_forward.1} parent=1 // pred_fallthru
      _
    // Predicated region
    $region22: #{lm_forward.1} parent=1 // pred_check
      _
    $region23: #{lm_forward.1} parent=1 // pred_check_branch
      %36 = sbr.rel (0) target = $region25
    $region24: #{lm_forward.1} parent=1 // pred_region
      _
    $region25: #{lm_forward.1} parent=1 // pred_fallthru
      _
    // Predicated region
    $region26: #{lm_forward.1} parent=1 // pred_check
      _
    $region27: #{lm_forward.1} parent=1 // pred_check_branch
      %38 = sbr.rel (0) target = $region29
    $region28: #{lm_forward.1} parent=1 // pred_region
      _
    $region29: #{lm_forward.1} parent=1 // pred_fallthru
      _
    // Predicated region
    $region30: #{lm_forward.1} parent=1 // pred_check
      _
    $region31: #{lm_forward.1} parent=1 // pred_check_branch
      %40 = sbr.rel (0) target = $region33
    $region32: #{lm_forward.1} parent=1 // pred_region
      %42 = vsyncadd [#allocation4], 0
      %s43 = sshll.u32 %s7, 4
      %s44 = int_to_ptr.hbm [resolvable:$true] %s43
      %s45 = sshll.u32 [#allocation3], 4
      %s46 = int_to_ptr.vmem [resolvable:$true] %s45
      %51 = dma.hbm_to_vmem [thread:$0]  %s44, 1024, %s46, [#allocation4], 128, 128, 8
    $region33: #{lm_forward.1} parent=1 // pred_fallthru
      _
    // Predicated region
    $region34: #{lm_forward.1} parent=1 // pred_check
      _
    $region35: #{lm_forward.1} parent=1 // pred_check_branch
      %53 = sbr.rel (0) target = $region37
    $region36: #{lm_forward.1} parent=1 // pred_region
      _
    $region37: #{lm_forward.1} parent=1 // pred_fallthru
      _
    // Predicated region
    $region38: #{lm_forward.1} parent=1 // pred_check
      _
    $region39: #{lm_forward.1} parent=1 // pred_check_branch
      %55 = sbr.rel (0) target = $region41
    $region40: #{lm_forward.1} parent=1 // pred_region
      %57 = vsyncadd [#allocation6], 0
      %s58 = sshll.u32 %s9, 4
      %s59 = int_to_ptr.hbm [resolvable:$true] %s58
      %s60 = sshll.u32 [#allocation5], 4
      %s61 = int_to_ptr.vmem [resolvable:$true] %s60
      %66 = dma.hbm_to_vmem [thread:$0]  %s59, 512, %s61, [#allocation6], 64, 64, 4
    $region41: #{lm_forward.1} parent=1 // pred_fallthru
      _
    // Predicated region
    $region42: #{lm_forward.1} parent=1 // pred_check
      _
    $region43: #{lm_forward.1} parent=1 // pred_check_branch
      %68 = sbr.rel (0) target = $region45
    $region44: #{lm_forward.1} parent=1 // pred_region
      _
    $region45: #{lm_forward.1} parent=1 // pred_fallthru
      _
    // Predicated region
    $region46: #{lm_forward.1} parent=1 // pred_check
      _
    $region47: #{lm_forward.1} parent=1 // pred_check_branch
      %70 = sbr.rel (0) target = $region49
    $region48: #{lm_forward.1} parent=1 // pred_region
      _
    $region49: #{lm_forward.1} parent=1 // pred_fallthru
      _
    // Predicated region
    $region50: #{lm_forward.1} parent=1 // pred_check
      _
    $region51: #{lm_forward.1} parent=1 // pred_check_branch
      %72 = sbr.rel (0) target = $region53
    $region52: #{lm_forward.1} parent=1 // pred_region
      _
    $region53: #{lm_forward.1} parent=1 // pred_fallthru
      _
    // Predicated region
    $region54: #{lm_forward.1} parent=1 // pred_check
      _
    $region55: #{lm_forward.1} parent=1 // pred_check_branch
      %74 = sbr.rel (0) target = $region57
    $region56: #{lm_forward.1} parent=1 // pred_region
      _
    $region57: #{lm_forward.1} parent=1 // pred_fallthru
      _
    // Predicated region
    $region58: #{lm_forward.1} parent=1 // pred_check
      _
    $region59: #{lm_forward.1} parent=1 // pred_check_branch
      %76 = sbr.rel (0) target = $region61
    $region60: #{lm_forward.1} parent=1 // pred_region
      _
    $region61: #{lm_forward.1} parent=1 // pred_fallthru
      _
    // Predicated region
    $region62: #{lm_forward.1} parent=1 // pred_check
      _
    $region63: #{lm_forward.1} parent=1 // pred_check_branch
      %78 = sbr.rel (0) target = $region65
    $region64: #{lm_forward.1} parent=1 // pred_region
      %80 = dma.done [#allocation4], 1024
    $region65: #{lm_forward.1} parent=1 // pred_fallthru
      _
    // Predicated region
    $region66: #{lm_forward.1} parent=1 // pred_check
      _
    $region67: #{lm_forward.1} parent=1 // pred_check_branch
      %82 = sbr.rel (0) target = $region69
    $region68: #{lm_forward.1} parent=1 // pred_region
      %84 = dma.done [#allocation6], 512
    $region69: #{lm_forward.1} parent=1 // pred_fallthru
      _
    %v86 = vld [vmem:[%s0] sm:$0xf]
    %v87 = vld [vmem:[%s0 + $0x4] sm:$0xf]
    %v88 = vld [vmem:[%s0 + $0x8] sm:$0xf]
    %v89 = vld [vmem:[%s0 + $0xc] sm:$0xf]
    %v90 = vld [vmem:[%s0 + $0x10] sm:$0xf]
    %v91 = vld [vmem:[%s0 + $0x14] sm:$0xf]
    %v92 = vld [vmem:[%s0 + $0x18] sm:$0xf]
    %v93 = vld [vmem:[%s0 + $0x1c] sm:$0xf]
    %v94 = vld [vmem:[%s3] sm:$0xff]
    %v95 = vld [vmem:[%s3 + $0x8] sm:$0xff]
    %v96 = vld [vmem:[%s3 + $0x10] sm:$0xff]
    %v97 = vld [vmem:[%s3 + $0x18] sm:$0xff]
    %v98 = vld [vmem:[%s5] sm:$0x3]
    %v100 = vperm.slane %v98, 0
    %v101 = vperm.slane %v98, 1
    %v112 = vunpack.c.l.b16 %v86
    %v113 = vunpack.c.l.b16 %v87
    %v114 = vunpack.c.l.b16 %v88
    %v115 = vunpack.c.l.b16 %v89
    %v116 = vunpack.c.l.b16 %v90
    %v117 = vunpack.c.l.b16 %v91
    %v118 = vunpack.c.l.b16 %v92
    %v119 = vunpack.c.l.b16 %v93
    %v120 = vpack.c.b16 %v113, %v112
    %v121 = vpack.c.b16 %v115, %v114
    %v122 = vpack.c.b16 %v117, %v116
    %v123 = vpack.c.b16 %v119, %v118
    %v128 = vunpack.c.l.b16 %v94
    %v129 = vunpack.c.h.b16 %v94
    %v130 = vunpack.c.l.b16 %v95
    %v131 = vunpack.c.h.b16 %v95
    %v132 = vunpack.c.l.b16 %v96
    %v133 = vunpack.c.h.b16 %v96
    %v134 = vunpack.c.l.b16 %v97
    %v135 = vunpack.c.h.b16 %v97
    %v136 = vpack.c.b16 %v130, %v128
    %v137 = vpack.c.b16 %v131, %v129
    %v138 = vpack.c.b16 %v134, %v132
    %v139 = vpack.c.b16 %v135, %v133
    %vm144 = vcmask 261120
    %v146 = vsel %vm144, %v120, 0
    %v149 = vsel %vm144, %v121, 0
    %v152 = vsel %vm144, %v122, 0
    %v155 = vsel %vm144, %v123, 0
    %157 = vmatpush.bf16.msra.mxu0 0
    %158 = vmatpush.bf16.msra.mxu0 0
    %159 = vmatpush.bf16.msra.mxu0 0
    %160 = vmatpush.bf16.msra.mxu0 0
    %161 = vmatpush.bf16.msra.mxu0 0
    %162 = vmatpush.bf16.msra.mxu0 0
    %163 = vmatpush.bf16.msra.mxu0 %v138
    %164 = vmatpush.bf16.msra.mxu0 %v136
    %165 = vmatmul.bf16.gmra.mxu0 %v146
    %v166 = vpop.f32.mrf.mxu0
    %v167 = vadd.f32 %v100, %v166
    %v168 = vpop.f32.mrf.mxu0
    %v169 = vadd.f32 %v100, %v168
    %170 = vmatmul.bf16.gmra.mxu0 %v149
    %v171 = vpop.f32.mrf.mxu0
    %v172 = vadd.f32 %v100, %v171
    %v173 = vpop.f32.mrf.mxu0
    %v174 = vadd.f32 %v100, %v173
    %175 = vmatmul.bf16.gmra.mxu0 %v152
    %v176 = vpop.f32.mrf.mxu0
    %v177 = vadd.f32 %v100, %v176
    %v178 = vpop.f32.mrf.mxu0
    %v179 = vadd.f32 %v100, %v178
    %180 = vmatmul.bf16.gmra.mxu0 %v155
    %v181 = vpop.f32.mrf.mxu0
    %v182 = vadd.f32 %v100, %v181
    %v183 = vpop.f32.mrf.mxu0
    %v184 = vadd.f32 %v100, %v183
    %185 = vdwg.mxu0
    %186 = vmatpush.bf16.msra.mxu0 0
    %187 = vmatpush.bf16.msra.mxu0 0
    %188 = vmatpush.bf16.msra.mxu0 0
    %189 = vmatpush.bf16.msra.mxu0 0
    %190 = vmatpush.bf16.msra.mxu0 0
    %191 = vmatpush.bf16.msra.mxu0 0
    %192 = vmatpush.bf16.msra.mxu0 %v139
    %193 = vmatpush.bf16.msra.mxu0 %v137
    %194 = vmatmul.bf16.gmra.mxu0 %v146
    %v195 = vpop.f32.mrf.mxu0
    %v196 = vadd.f32 %v101, %v195
    %v197 = vpop.f32.mrf.mxu0
    %v198 = vadd.f32 %v101, %v197
    %199 = vmatmul.bf16.gmra.mxu0 %v149
    %v200 = vpop.f32.mrf.mxu0
    %v201 = vadd.f32 %v101, %v200
    %v202 = vpop.f32.mrf.mxu0
    %v203 = vadd.f32 %v101, %v202
    %204 = vmatmul.bf16.gmra.mxu0 %v152
    %v205 = vpop.f32.mrf.mxu0
    %v206 = vadd.f32 %v101, %v205
    %v207 = vpop.f32.mrf.mxu0
    %v208 = vadd.f32 %v101, %v207
    %209 = vmatmul.bf16.gmra.mxu0 %v155
    %v210 = vpop.f32.mrf.mxu0
    %v211 = vadd.f32 %v101, %v210
    %v212 = vpop.f32.mrf.mxu0
    %v213 = vadd.f32 %v101, %v212
    %214 = vdwg.mxu0
    %v215 = vld [vmem:[%s1] sm:$0xff]
    %v216 = vld [vmem:[%s2] sm:$0xff]
    %s217 = scalar_lea.vmem %s1, 8
    %v218 = vld [vmem:[%s217] sm:$0xff]
    %s219 = scalar_lea.vmem %s2, 8
    %v220 = vld [vmem:[%s219] sm:$0xff]
    %v221 = vpack.c.bf16 %v215, %v215
    %v222 = vld [vmem:[%s4] sm:$0xff]
    %v223 = vld [vmem:[%s4 + $0x8] sm:$0xff]
    %v224 = vld [vmem:[%s4 + $0x10] sm:$0xff]
    %v225 = vld [vmem:[%s4 + $0x18] sm:$0xff]
    %v226 = vld [vmem:[%s4 + $0x20] sm:$0xff]
    %v227 = vld [vmem:[%s4 + $0x28] sm:$0xff]
    %v228 = vld [vmem:[%s4 + $0x30] sm:$0xff]
    %v229 = vld [vmem:[%s4 + $0x38] sm:$0xff]
    %v238 = vunpack.c.l.b16 %v222
    %v239 = vunpack.c.h.b16 %v222
    %v240 = vunpack.c.l.b16 %v223
    %v241 = vunpack.c.h.b16 %v223
    %v242 = vunpack.c.l.b16 %v224
    %v243 = vunpack.c.h.b16 %v224
    %v244 = vunpack.c.l.b16 %v225
    %v245 = vunpack.c.h.b16 %v225
    %v246 = vunpack.c.l.b16 %v226
    %v247 = vunpack.c.h.b16 %v226
    %v248 = vunpack.c.l.b16 %v227
    %v249 = vunpack.c.h.b16 %v227
    %v250 = vunpack.c.l.b16 %v228
    %v251 = vunpack.c.h.b16 %v228
    %v252 = vunpack.c.l.b16 %v229
    %v253 = vunpack.c.h.b16 %v229
    %v254 = vpack.c.b16 %v240, %v238
    %v255 = vpack.c.b16 %v241, %v239
    %v256 = vpack.c.b16 %v244, %v242
    %v257 = vpack.c.b16 %v245, %v243
    %v258 = vpack.c.b16 %v248, %v246
    %v259 = vpack.c.b16 %v249, %v247
    %v260 = vpack.c.b16 %v252, %v250
    %v261 = vpack.c.b16 %v253, %v251
    %vm270 = vcmask 523264
    %v272 = vsel %vm270, %v221, 0
    %274 = vmatpush.bf16.msra.mxu0 0
    %275 = vmatpush.bf16.msra.mxu0 0
    %276 = vmatpush.bf16.msra.mxu0 0
    %277 = vmatpush.bf16.msra.mxu0 0
    %278 = vmatpush.bf16.msra.mxu0 %v260
    %279 = vmatpush.bf16.msra.mxu0 %v258
    %280 = vmatpush.bf16.msra.mxu0 %v256
    %281 = vmatpush.bf16.msra.mxu0 %v254
    %282 = vmatmul.bf16.gmra.mxu0 %v272
    %v283 = vpop.f32.mrf.mxu0
    %v284 = vadd.f32 0.0, %v283
    %v285 = vpop.f32.mrf.mxu0
    %286 = vdwg.mxu0
    %287 = vmatpush.bf16.msra.mxu0 0
    %288 = vmatpush.bf16.msra.mxu0 0
    %289 = vmatpush.bf16.msra.mxu0 0
    %290 = vmatpush.bf16.msra.mxu0 0
    %291 = vmatpush.bf16.msra.mxu0 %v261
    %292 = vmatpush.bf16.msra.mxu0 %v259
    %293 = vmatpush.bf16.msra.mxu0 %v257
    %294 = vmatpush.bf16.msra.mxu0 %v255
    %295 = vmatmul.bf16.gmra.mxu0 %v272
    %v296 = vpop.f32.mrf.mxu0
    %v297 = vadd.f32 0.0, %v296
    %v298 = vpop.f32.mrf.mxu0
    %299 = vdwg.mxu0
    %v300 = vadd.f32 %v167, %v284
    %v301 = vadd.f32 %v196, %v297
    %v302 = vxor.u32 %v300, 2147483648
    %v303 = vmul.f32 %v302, 1.442695
    %v304 = vpow.pop %v303
    %v305 = vadd.f32 %v304, 1.0
    %v306 = vrcp.pop %v305
    %v307 = vmul.f32 %v305, %v306
    %v308 = vsub.f32 1.0, %v307
    %v309 = vmul.f32 %v306, %v308
    %v310 = vadd.f32 %v306, %v309
    %vm311 = vweird.f32 %v305
    %vm312 = vweird.f32 %v306
    %vm313 = vmor %vm311, %vm312
    %v314 = vsel %vm313, %v306, %v310
    %v315 = vand.u32 2147483647, %v305
    %vm316 = vcmp.eq.f32.partialorder %v315, 8.507059e+37
    %v317 = vand.u32 %v305, 2147483648
    %v318 = vor.u32 1.1754944e-38, %v317
    %v319 = vsel %vm316, %v318, %v314
    %v320 = vmul.f32 1.0, %v319
    %v321 = vtanh.pop %v301
    %v322 = vxor.u32 %v301, 2147483648
    %v323 = vmul.f32 %v322, 1.442695
    %v324 = vpow.pop %v323
    %v325 = vadd.f32 %v324, 1.0
    %v326 = vrcp.pop %v325
    %v327 = vmul.f32 %v325, %v326
    %v328 = vsub.f32 1.0, %v327
    %v329 = vmul.f32 %v326, %v328
    %v330 = vadd.f32 %v326, %v329
    %vm331 = vweird.f32 %v325
    %vm332 = vweird.f32 %v326
    %vm333 = vmor %vm331, %vm332
    %v334 = vsel %vm333, %v326, %v330
    %v335 = vand.u32 2147483647, %v325
    %vm336 = vcmp.eq.f32.partialorder %v335, 8.507059e+37
    %v337 = vand.u32 %v325, 2147483648
    %v338 = vor.u32 1.1754944e-38, %v337
    %v339 = vsel %vm336, %v338, %v334
    %v340 = vmul.f32 1.0, %v339
    %342 = vrot.lane.b32.xlu0 %v216, 64
    %v343 = vpop.permute.xlu0 %342
    %v345 = vmul.f32 %v320, %v343
    %v346 = vmul.f32 %v320, %v321
    %348 = vrot.lane.b32.xlu0 %v346, 64
    %v349 = vpop.permute.xlu0 %348
    %v351 = vadd.f32 %v345, %v349
    %v352 = vtanh.pop %v351
    %v353 = vmul.f32 %v340, %v352
    %v354 = vpack.c.bf16 %v353, %v353
    %356 = vrot.lane.b32.xlu0 %v354, 64
    %v357 = vpop.permute.xlu0 %356
    %v359 = vsel %vm270, %v357, 0
    %361 = vmatpush.bf16.msra.mxu0 0
    %362 = vmatpush.bf16.msra.mxu0 0
    %363 = vmatpush.bf16.msra.mxu0 0
    %364 = vmatpush.bf16.msra.mxu0 0
    %365 = vmatpush.bf16.msra.mxu0 %v260
    %366 = vmatpush.bf16.msra.mxu0 %v258
    %367 = vmatpush.bf16.msra.mxu0 %v256
    %368 = vmatpush.bf16.msra.mxu0 %v254
    %369 = vmatmul.bf16.gmra.mxu0 %v359
    %v370 = vpop.f32.mrf.mxu0
    %v371 = vadd.f32 0.0, %v370
    %v372 = vpop.f32.mrf.mxu0
    %373 = vdwg.mxu0
    %374 = vmatpush.bf16.msra.mxu0 0
    %375 = vmatpush.bf16.msra.mxu0 0
    %376 = vmatpush.bf16.msra.mxu0 0
    %377 = vmatpush.bf16.msra.mxu0 0
    %378 = vmatpush.bf16.msra.mxu0 %v261
    %379 = vmatpush.bf16.msra.mxu0 %v259
    %380 = vmatpush.bf16.msra.mxu0 %v257
    %381 = vmatpush.bf16.msra.mxu0 %v255
    %382 = vmatmul.bf16.gmra.mxu0 %v359
    %v383 = vpop.f32.mrf.mxu0
    %v384 = vadd.f32 0.0, %v383
    %v385 = vpop.f32.mrf.mxu0
    %386 = vdwg.mxu0
    %v387 = vadd.f32 %v169, %v371
    %v388 = vadd.f32 %v198, %v384
    %v389 = vxor.u32 %v387, 2147483648
    %v390 = vmul.f32 %v389, 1.442695
    %v391 = vpow.pop %v390
    %v392 = vadd.f32 %v391, 1.0
    %v393 = vrcp.pop %v392
    %v394 = vmul.f32 %v392, %v393
    %v395 = vsub.f32 1.0, %v394
    %v396 = vmul.f32 %v393, %v395
    %v397 = vadd.f32 %v393, %v396
    %vm398 = vweird.f32 %v392
    %vm399 = vweird.f32 %v393
    %vm400 = vmor %vm398, %vm399
    %v401 = vsel %vm400, %v393, %v397
    %v402 = vand.u32 2147483647, %v392
    %vm403 = vcmp.eq.f32.partialorder %v402, 8.507059e+37
    %v404 = vand.u32 %v392, 2147483648
    %v405 = vor.u32 1.1754944e-38, %v404
    %v406 = vsel %vm403, %v405, %v401
    %v407 = vmul.f32 1.0, %v406
    %v408 = vtanh.pop %v388
    %v409 = vxor.u32 %v388, 2147483648
    %v410 = vmul.f32 %v409, 1.442695
    %v411 = vpow.pop %v410
    %v412 = vadd.f32 %v411, 1.0
    %v413 = vrcp.pop %v412
    %v414 = vmul.f32 %v412, %v413
    %v415 = vsub.f32 1.0, %v414
    %v416 = vmul.f32 %v413, %v415
    %v417 = vadd.f32 %v413, %v416
    %vm418 = vweird.f32 %v412
    %vm419 = vweird.f32 %v413
    %vm420 = vmor %vm418, %vm419
    %v421 = vsel %vm420, %v413, %v417
    %v422 = vand.u32 2147483647, %v412
    %vm423 = vcmp.eq.f32.partialorder %v422, 8.507059e+37
    %v424 = vand.u32 %v412, 2147483648
    %v425 = vor.u32 1.1754944e-38, %v424
    %v426 = vsel %vm423, %v425, %v421
    %v427 = vmul.f32 1.0, %v426
    %v428 = vmul.f32 %v407, %v351
    %v429 = vmul.f32 %v407, %v408
    %431 = vrot.lane.b32.xlu0 %v429, 64
    %v432 = vpop.permute.xlu0 %431
    %v434 = vadd.f32 %v428, %v432
    %v435 = vtanh.pop %v434
    %v436 = vmul.f32 %v427, %v435
    %v437 = vld [vmem:[%s6] sm:$0xff]
    %v438 = vld [vmem:[%s6 + $0x8] sm:$0xff]
    %v439 = vld [vmem:[%s6 + $0x10] sm:$0xff]
    %v440 = vld [vmem:[%s6 + $0x18] sm:$0xff]
    %v441 = vld [vmem:[%s6 + $0x20] sm:$0xff]
    %v442 = vld [vmem:[%s6 + $0x28] sm:$0xff]
    %v443 = vld [vmem:[%s6 + $0x30] sm:$0xff]
    %v444 = vld [vmem:[%s6 + $0x38] sm:$0xff]
    %v445 = vld [vmem:[%s8] sm:$0x3]
    %v447 = vperm.slane %v445, 0
    %v448 = vperm.slane %v445, 1
    %v459 = vunpack.c.l.b16 %v437
    %v460 = vunpack.c.h.b16 %v437
    %v461 = vunpack.c.l.b16 %v438
    %v462 = vunpack.c.h.b16 %v438
    %v463 = vunpack.c.l.b16 %v439
    %v464 = vunpack.c.h.b16 %v439
    %v465 = vunpack.c.l.b16 %v440
    %v466 = vunpack.c.h.b16 %v440
    %v467 = vunpack.c.l.b16 %v441
    %v468 = vunpack.c.h.b16 %v441
    %v469 = vunpack.c.l.b16 %v442
    %v470 = vunpack.c.h.b16 %v442
    %v471 = vunpack.c.l.b16 %v443
    %v472 = vunpack.c.h.b16 %v443
    %v473 = vunpack.c.l.b16 %v444
    %v474 = vunpack.c.h.b16 %v444
    %v475 = vpack.c.b16 %v461, %v459
    %v476 = vpack.c.b16 %v462, %v460
    %v477 = vpack.c.b16 %v465, %v463
    %v478 = vpack.c.b16 %v466, %v464
    %v479 = vpack.c.b16 %v469, %v467
    %v480 = vpack.c.b16 %v470, %v468
    %v481 = vpack.c.b16 %v473, %v471
    %v482 = vpack.c.b16 %v474, %v472
    %491 = vmatpush.bf16.msra.mxu0 0
    %492 = vmatpush.bf16.msra.mxu0 0
    %493 = vmatpush.bf16.msra.mxu0 0
    %494 = vmatpush.bf16.msra.mxu0 0
    %495 = vmatpush.bf16.msra.mxu0 %v481
    %496 = vmatpush.bf16.msra.mxu0 %v479
    %497 = vmatpush.bf16.msra.mxu0 %v477
    %498 = vmatpush.bf16.msra.mxu0 %v475
    %499 = vmatmul.bf16.gmra.mxu0 %v359
    %v500 = vpop.f32.mrf.mxu0
    %v501 = vadd.f32 %v447, %v500
    %v502 = vpop.f32.mrf.mxu0
    %503 = vdwg.mxu0
    %504 = vmatpush.bf16.msra.mxu0 0
    %505 = vmatpush.bf16.msra.mxu0 0
    %506 = vmatpush.bf16.msra.mxu0 0
    %507 = vmatpush.bf16.msra.mxu0 0
    %508 = vmatpush.bf16.msra.mxu0 %v482
    %509 = vmatpush.bf16.msra.mxu0 %v480
    %510 = vmatpush.bf16.msra.mxu0 %v478
    %511 = vmatpush.bf16.msra.mxu0 %v476
    %512 = vmatmul.bf16.gmra.mxu0 %v359
    %v513 = vpop.f32.mrf.mxu0
    %v514 = vadd.f32 %v448, %v513
    %v515 = vpop.f32.mrf.mxu0
    %516 = vdwg.mxu0
    %v517 = vpack.c.bf16 %v218, %v218
    %v518 = vld [vmem:[#allocation3] sm:$0xff]
    %v519 = vld [vmem:[#allocation3 + $0x8] sm:$0xff]
    %v520 = vld [vmem:[#allocation3 + $0x10] sm:$0xff]
    %v521 = vld [vmem:[#allocation3 + $0x18] sm:$0xff]
    %v522 = vld [vmem:[#allocation3 + $0x20] sm:$0xff]
    %v523 = vld [vmem:[#allocation3 + $0x28] sm:$0xff]
    %v524 = vld [vmem:[#allocation3 + $0x30] sm:$0xff]
    %v525 = vld [vmem:[#allocation3 + $0x38] sm:$0xff]
    %v534 = vunpack.c.l.b16 %v518
    %v535 = vunpack.c.h.b16 %v518
    %v536 = vunpack.c.l.b16 %v519
    %v537 = vunpack.c.h.b16 %v519
    %v538 = vunpack.c.l.b16 %v520
    %v539 = vunpack.c.h.b16 %v520
    %v540 = vunpack.c.l.b16 %v521
    %v541 = vunpack.c.h.b16 %v521
    %v542 = vunpack.c.l.b16 %v522
    %v543 = vunpack.c.h.b16 %v522
    %v544 = vunpack.c.l.b16 %v523
    %v545 = vunpack.c.h.b16 %v523
    %v546 = vunpack.c.l.b16 %v524
    %v547 = vunpack.c.h.b16 %v524
    %v548 = vunpack.c.l.b16 %v525
    %v549 = vunpack.c.h.b16 %v525
    %v550 = vpack.c.b16 %v536, %v534
    %v551 = vpack.c.b16 %v537, %v535
    %v552 = vpack.c.b16 %v540, %v538
    %v553 = vpack.c.b16 %v541, %v539
    %v554 = vpack.c.b16 %v544, %v542
    %v555 = vpack.c.b16 %v545, %v543
    %v556 = vpack.c.b16 %v548, %v546
    %v557 = vpack.c.b16 %v549, %v547
    %v567 = vsel %vm270, %v517, 0
    %569 = vmatpush.bf16.msra.mxu0 0
    %570 = vmatpush.bf16.msra.mxu0 0
    %571 = vmatpush.bf16.msra.mxu0 0
    %572 = vmatpush.bf16.msra.mxu0 0
    %573 = vmatpush.bf16.msra.mxu0 %v556
    %574 = vmatpush.bf16.msra.mxu0 %v554
    %575 = vmatpush.bf16.msra.mxu0 %v552
    %576 = vmatpush.bf16.msra.mxu0 %v550
    %577 = vmatmul.bf16.gmra.mxu0 %v567
    %v578 = vpop.f32.mrf.mxu0
    %v579 = vadd.f32 0.0, %v578
    %v580 = vpop.f32.mrf.mxu0
    %581 = vdwg.mxu0
    %582 = vmatpush.bf16.msra.mxu0 0
    %583 = vmatpush.bf16.msra.mxu0 0
    %584 = vmatpush.bf16.msra.mxu0 0
    %585 = vmatpush.bf16.msra.mxu0 0
    %586 = vmatpush.bf16.msra.mxu0 %v557
    %587 = vmatpush.bf16.msra.mxu0 %v555
    %588 = vmatpush.bf16.msra.mxu0 %v553
    %589 = vmatpush.bf16.msra.mxu0 %v551
    %590 = vmatmul.bf16.gmra.mxu0 %v567
    %v591 = vpop.f32.mrf.mxu0
    %v592 = vadd.f32 0.0, %v591
    %v593 = vpop.f32.mrf.mxu0
    %594 = vdwg.mxu0
    %v595 = vadd.f32 %v501, %v579
    %v596 = vadd.f32 %v514, %v592
    %v597 = vxor.u32 %v595, 2147483648
    %v598 = vmul.f32 %v597, 1.442695
    %v599 = vpow.pop %v598
    %v600 = vadd.f32 %v599, 1.0
    %v601 = vrcp.pop %v600
    %v602 = vmul.f32 %v600, %v601
    %v603 = vsub.f32 1.0, %v602
    %v604 = vmul.f32 %v601, %v603
    %v605 = vadd.f32 %v601, %v604
    %vm606 = vweird.f32 %v600
    %vm607 = vweird.f32 %v601
    %vm608 = vmor %vm606, %vm607
    %v609 = vsel %vm608, %v601, %v605
    %v610 = vand.u32 2147483647, %v600
    %vm611 = vcmp.eq.f32.partialorder %v610, 8.507059e+37
    %v612 = vand.u32 %v600, 2147483648
    %v613 = vor.u32 1.1754944e-38, %v612
    %v614 = vsel %vm611, %v613, %v609
    %v615 = vmul.f32 1.0, %v614
    %v616 = vtanh.pop %v596
    %v617 = vxor.u32 %v596, 2147483648
    %v618 = vmul.f32 %v617, 1.442695
    %v619 = vpow.pop %v618
    %v620 = vadd.f32 %v619, 1.0
    %v621 = vrcp.pop %v620
    %v622 = vmul.f32 %v620, %v621
    %v623 = vsub.f32 1.0, %v622
    %v624 = vmul.f32 %v621, %v623
    %v625 = vadd.f32 %v621, %v624
    %vm626 = vweird.f32 %v620
    %vm627 = vweird.f32 %v621
    %vm628 = vmor %vm626, %vm627
    %v629 = vsel %vm628, %v621, %v625
    %v630 = vand.u32 2147483647, %v620
    %vm631 = vcmp.eq.f32.partialorder %v630, 8.507059e+37
    %v632 = vand.u32 %v620, 2147483648
    %v633 = vor.u32 1.1754944e-38, %v632
    %v634 = vsel %vm631, %v633, %v629
    %v635 = vmul.f32 1.0, %v634
    %637 = vrot.lane.b32.xlu0 %v220, 64
    %v638 = vpop.permute.xlu0 %637
    %v640 = vmul.f32 %v615, %v638
    %v641 = vmul.f32 %v615, %v616
    %643 = vrot.lane.b32.xlu0 %v641, 64
    %v644 = vpop.permute.xlu0 %643
    %v646 = vadd.f32 %v640, %v644
    %v647 = vtanh.pop %v646
    %v648 = vmul.f32 %v635, %v647
    %650 = vrot.lane.b32.xlu0 %v648, 64
    %v651 = vpop.permute.xlu0 %650
    %653 = vst.msk [vmem:[#allocation2] sm:$0xff] %vm270, %v651
    %v654 = vpack.c.bf16 %v436, %v436
    %v655 = vld [vmem:[%s4] sm:$0xff]
    %v656 = vld [vmem:[%s4 + $0x8] sm:$0xff]
    %v657 = vld [vmem:[%s4 + $0x10] sm:$0xff]
    %v658 = vld [vmem:[%s4 + $0x18] sm:$0xff]
    %v659 = vld [vmem:[%s4 + $0x20] sm:$0xff]
    %v660 = vld [vmem:[%s4 + $0x28] sm:$0xff]
    %v661 = vld [vmem:[%s4 + $0x30] sm:$0xff]
    %v662 = vld [vmem:[%s4 + $0x38] sm:$0xff]
    %664 = vrot.lane.b32.xlu0 %v654, 64
    %v665 = vpop.permute.xlu0 %664
    %v674 = vunpack.c.l.b16 %v655
    %v675 = vunpack.c.h.b16 %v655
    %v676 = vunpack.c.l.b16 %v656
    %v677 = vunpack.c.h.b16 %v656
    %v678 = vunpack.c.l.b16 %v657
    %v679 = vunpack.c.h.b16 %v657
    %v680 = vunpack.c.l.b16 %v658
    %v681 = vunpack.c.h.b16 %v658
    %v682 = vunpack.c.l.b16 %v659
    %v683 = vunpack.c.h.b16 %v659
    %v684 = vunpack.c.l.b16 %v660
    %v685 = vunpack.c.h.b16 %v660
    %v686 = vunpack.c.l.b16 %v661
    %v687 = vunpack.c.h.b16 %v661
    %v688 = vunpack.c.l.b16 %v662
    %v689 = vunpack.c.h.b16 %v662
    %v690 = vpack.c.b16 %v676, %v674
    %v691 = vpack.c.b16 %v677, %v675
    %v692 = vpack.c.b16 %v680, %v678
    %v693 = vpack.c.b16 %v681, %v679
    %v694 = vpack.c.b16 %v684, %v682
    %v695 = vpack.c.b16 %v685, %v683
    %v696 = vpack.c.b16 %v688, %v686
    %v697 = vpack.c.b16 %v689, %v687
    %v707 = vsel %vm270, %v665, 0
    %709 = vmatpush.bf16.msra.mxu0 0
    %710 = vmatpush.bf16.msra.mxu0 0
    %711 = vmatpush.bf16.msra.mxu0 0
    %712 = vmatpush.bf16.msra.mxu0 0
    %713 = vmatpush.bf16.msra.mxu0 %v696
    %714 = vmatpush.bf16.msra.mxu0 %v694
    %715 = vmatpush.bf16.msra.mxu0 %v692
    %716 = vmatpush.bf16.msra.mxu0 %v690
    %717 = vmatmul.bf16.gmra.mxu0 %v707
    %v718 = vpop.f32.mrf.mxu0
    %v719 = vadd.f32 0.0, %v718
    %v720 = vpop.f32.mrf.mxu0
    %721 = vdwg.mxu0
    %722 = vmatpush.bf16.msra.mxu0 0
    %723 = vmatpush.bf16.msra.mxu0 0
    %724 = vmatpush.bf16.msra.mxu0 0
    %725 = vmatpush.bf16.msra.mxu0 0
    %726 = vmatpush.bf16.msra.mxu0 %v697
    %727 = vmatpush.bf16.msra.mxu0 %v695
    %728 = vmatpush.bf16.msra.mxu0 %v693
    %729 = vmatpush.bf16.msra.mxu0 %v691
    %730 = vmatmul.bf16.gmra.mxu0 %v707
    %v731 = vpop.f32.mrf.mxu0
    %v732 = vadd.f32 0.0, %v731
    %v733 = vpop.f32.mrf.mxu0
    %734 = vdwg.mxu0
    %v735 = vadd.f32 %v172, %v719
    %v736 = vadd.f32 %v201, %v732
    %v737 = vxor.u32 %v735, 2147483648
    %v738 = vmul.f32 %v737, 1.442695
    %v739 = vpow.pop %v738
    %v740 = vadd.f32 %v739, 1.0
    %v741 = vrcp.pop %v740
    %v742 = vmul.f32 %v740, %v741
    %v743 = vsub.f32 1.0, %v742
    %v744 = vmul.f32 %v741, %v743
    %v745 = vadd.f32 %v741, %v744
    %vm746 = vweird.f32 %v740
    %vm747 = vweird.f32 %v741
    %vm748 = vmor %vm746, %vm747
    %v749 = vsel %vm748, %v741, %v745
    %v750 = vand.u32 2147483647, %v740
    %vm751 = vcmp.eq.f32.partialorder %v750, 8.507059e+37
    %v752 = vand.u32 %v740, 2147483648
    %v753 = vor.u32 1.1754944e-38, %v752
    %v754 = vsel %vm751, %v753, %v749
    %v755 = vmul.f32 1.0, %v754
    %v756 = vtanh.pop %v736
    %v757 = vxor.u32 %v736, 2147483648
    %v758 = vmul.f32 %v757, 1.442695
    %v759 = vpow.pop %v758
    %v760 = vadd.f32 %v759, 1.0
    %v761 = vrcp.pop %v760
    %v762 = vmul.f32 %v760, %v761
    %v763 = vsub.f32 1.0, %v762
    %v764 = vmul.f32 %v761, %v763
    %v765 = vadd.f32 %v761, %v764
    %vm766 = vweird.f32 %v760
    %vm767 = vweird.f32 %v761
    %vm768 = vmor %vm766, %vm767
    %v769 = vsel %vm768, %v761, %v765
    %v770 = vand.u32 2147483647, %v760
    %vm771 = vcmp.eq.f32.partialorder %v770, 8.507059e+37
    %v772 = vand.u32 %v760, 2147483648
    %v773 = vor.u32 1.1754944e-38, %v772
    %v774 = vsel %vm771, %v773, %v769
    %v775 = vmul.f32 1.0, %v774
    %v776 = vmul.f32 %v755, %v434
    %v777 = vmul.f32 %v755, %v756
    %779 = vrot.lane.b32.xlu0 %v777, 64
    %v780 = vpop.permute.xlu0 %779
    %v782 = vadd.f32 %v776, %v780
    %v783 = vtanh.pop %v782
    %v784 = vmul.f32 %v775, %v783
    %v785 = vld [vmem:[%s6] sm:$0xff]
    %v786 = vld [vmem:[%s6 + $0x8] sm:$0xff]
    %v787 = vld [vmem:[%s6 + $0x10] sm:$0xff]
    %v788 = vld [vmem:[%s6 + $0x18] sm:$0xff]
    %v789 = vld [vmem:[%s6 + $0x20] sm:$0xff]
    %v790 = vld [vmem:[%s6 + $0x28] sm:$0xff]
    %v791 = vld [vmem:[%s6 + $0x30] sm:$0xff]
    %v792 = vld [vmem:[%s6 + $0x38] sm:$0xff]
    %v793 = vld [vmem:[%s8] sm:$0x3]
    %v795 = vperm.slane %v793, 0
    %v796 = vperm.slane %v793, 1
    %v807 = vunpack.c.l.b16 %v785
    %v808 = vunpack.c.h.b16 %v785
    %v809 = vunpack.c.l.b16 %v786
    %v810 = vunpack.c.h.b16 %v786
    %v811 = vunpack.c.l.b16 %v787
    %v812 = vunpack.c.h.b16 %v787
    %v813 = vunpack.c.l.b16 %v788
    %v814 = vunpack.c.h.b16 %v788
    %v815 = vunpack.c.l.b16 %v789
    %v816 = vunpack.c.h.b16 %v789
    %v817 = vunpack.c.l.b16 %v790
    %v818 = vunpack.c.h.b16 %v790
    %v819 = vunpack.c.l.b16 %v791
    %v820 = vunpack.c.h.b16 %v791
    %v821 = vunpack.c.l.b16 %v792
    %v822 = vunpack.c.h.b16 %v792
    %v823 = vpack.c.b16 %v809, %v807
    %v824 = vpack.c.b16 %v810, %v808
    %v825 = vpack.c.b16 %v813, %v811
    %v826 = vpack.c.b16 %v814, %v812
    %v827 = vpack.c.b16 %v817, %v815
    %v828 = vpack.c.b16 %v818, %v816
    %v829 = vpack.c.b16 %v821, %v819
    %v830 = vpack.c.b16 %v822, %v820
    %839 = vmatpush.bf16.msra.mxu0 0
    %840 = vmatpush.bf16.msra.mxu0 0
    %841 = vmatpush.bf16.msra.mxu0 0
    %842 = vmatpush.bf16.msra.mxu0 0
    %843 = vmatpush.bf16.msra.mxu0 %v829
    %844 = vmatpush.bf16.msra.mxu0 %v827
    %845 = vmatpush.bf16.msra.mxu0 %v825
    %846 = vmatpush.bf16.msra.mxu0 %v823
    %847 = vmatmul.bf16.gmra.mxu0 %v707
    %v848 = vpop.f32.mrf.mxu0
    %v849 = vadd.f32 %v795, %v848
    %v850 = vpop.f32.mrf.mxu0
    %851 = vdwg.mxu0
    %852 = vmatpush.bf16.msra.mxu0 0
    %853 = vmatpush.bf16.msra.mxu0 0
    %854 = vmatpush.bf16.msra.mxu0 0
    %855 = vmatpush.bf16.msra.mxu0 0
    %856 = vmatpush.bf16.msra.mxu0 %v830
    %857 = vmatpush.bf16.msra.mxu0 %v828
    %858 = vmatpush.bf16.msra.mxu0 %v826
    %859 = vmatpush.bf16.msra.mxu0 %v824
    %860 = vmatmul.bf16.gmra.mxu0 %v707
    %v861 = vpop.f32.mrf.mxu0
    %v862 = vadd.f32 %v796, %v861
    %v863 = vpop.f32.mrf.mxu0
    %864 = vdwg.mxu0
    %v865 = vpack.c.bf16 %v648, %v648
    %v866 = vld [vmem:[#allocation3] sm:$0xff]
    %v867 = vld [vmem:[#allocation3 + $0x8] sm:$0xff]
    %v868 = vld [vmem:[#allocation3 + $0x10] sm:$0xff]
    %v869 = vld [vmem:[#allocation3 + $0x18] sm:$0xff]
    %v870 = vld [vmem:[#allocation3 + $0x20] sm:$0xff]
    %v871 = vld [vmem:[#allocation3 + $0x28] sm:$0xff]
    %v872 = vld [vmem:[#allocation3 + $0x30] sm:$0xff]
    %v873 = vld [vmem:[#allocation3 + $0x38] sm:$0xff]
    %875 = vrot.lane.b32.xlu0 %v865, 64
    %v876 = vpop.permute.xlu0 %875
    %v885 = vunpack.c.l.b16 %v866
    %v886 = vunpack.c.h.b16 %v866
    %v887 = vunpack.c.l.b16 %v867
    %v888 = vunpack.c.h.b16 %v867
    %v889 = vunpack.c.l.b16 %v868
    %v890 = vunpack.c.h.b16 %v868
    %v891 = vunpack.c.l.b16 %v869
    %v892 = vunpack.c.h.b16 %v869
    %v893 = vunpack.c.l.b16 %v870
    %v894 = vunpack.c.h.b16 %v870
    %v895 = vunpack.c.l.b16 %v871
    %v896 = vunpack.c.h.b16 %v871
    %v897 = vunpack.c.l.b16 %v872
    %v898 = vunpack.c.h.b16 %v872
    %v899 = vunpack.c.l.b16 %v873
    %v900 = vunpack.c.h.b16 %v873
    %v901 = vpack.c.b16 %v887, %v885
    %v902 = vpack.c.b16 %v888, %v886
    %v903 = vpack.c.b16 %v891, %v889
    %v904 = vpack.c.b16 %v892, %v890
    %v905 = vpack.c.b16 %v895, %v893
    %v906 = vpack.c.b16 %v896, %v894
    %v907 = vpack.c.b16 %v899, %v897
    %v908 = vpack.c.b16 %v900, %v898
    %v918 = vsel %vm270, %v876, 0
    %920 = vmatpush.bf16.msra.mxu0 0
    %921 = vmatpush.bf16.msra.mxu0 0
    %922 = vmatpush.bf16.msra.mxu0 0
    %923 = vmatpush.bf16.msra.mxu0 0
    %924 = vmatpush.bf16.msra.mxu0 %v907
    %925 = vmatpush.bf16.msra.mxu0 %v905
    %926 = vmatpush.bf16.msra.mxu0 %v903
    %927 = vmatpush.bf16.msra.mxu0 %v901
    %928 = vmatmul.bf16.gmra.mxu0 %v918
    %v929 = vpop.f32.mrf.mxu0
    %v930 = vadd.f32 0.0, %v929
    %v931 = vpop.f32.mrf.mxu0
    %932 = vdwg.mxu0
    %933 = vmatpush.bf16.msra.mxu0 0
    %934 = vmatpush.bf16.msra.mxu0 0
    %935 = vmatpush.bf16.msra.mxu0 0
    %936 = vmatpush.bf16.msra.mxu0 0
    %937 = vmatpush.bf16.msra.mxu0 %v908
    %938 = vmatpush.bf16.msra.mxu0 %v906
    %939 = vmatpush.bf16.msra.mxu0 %v904
    %940 = vmatpush.bf16.msra.mxu0 %v902
    %941 = vmatmul.bf16.gmra.mxu0 %v918
    %v942 = vpop.f32.mrf.mxu0
    %v943 = vadd.f32 0.0, %v942
    %v944 = vpop.f32.mrf.mxu0
    %945 = vdwg.mxu0
    %v946 = vadd.f32 %v849, %v930
    %v947 = vadd.f32 %v862, %v943
    %v948 = vxor.u32 %v946, 2147483648
    %v949 = vmul.f32 %v948, 1.442695
    %v950 = vpow.pop %v949
    %v951 = vadd.f32 %v950, 1.0
    %v952 = vrcp.pop %v951
    %v953 = vmul.f32 %v951, %v952
    %v954 = vsub.f32 1.0, %v953
    %v955 = vmul.f32 %v952, %v954
    %v956 = vadd.f32 %v952, %v955
    %vm957 = vweird.f32 %v951
    %vm958 = vweird.f32 %v952
    %vm959 = vmor %vm957, %vm958
    %v960 = vsel %vm959, %v952, %v956
    %v961 = vand.u32 2147483647, %v951
    %vm962 = vcmp.eq.f32.partialorder %v961, 8.507059e+37
    %v963 = vand.u32 %v951, 2147483648
    %v964 = vor.u32 1.1754944e-38, %v963
    %v965 = vsel %vm962, %v964, %v960
    %v966 = vmul.f32 1.0, %v965
    %v967 = vtanh.pop %v947
    %v968 = vxor.u32 %v947, 2147483648
    %v969 = vmul.f32 %v968, 1.442695
    %v970 = vpow.pop %v969
    %v971 = vadd.f32 %v970, 1.0
    %v972 = vrcp.pop %v971
    %v973 = vmul.f32 %v971, %v972
    %v974 = vsub.f32 1.0, %v973
    %v975 = vmul.f32 %v972, %v974
    %v976 = vadd.f32 %v972, %v975
    %vm977 = vweird.f32 %v971
    %vm978 = vweird.f32 %v972
    %vm979 = vmor %vm977, %vm978
    %v980 = vsel %vm979, %v972, %v976
    %v981 = vand.u32 2147483647, %v971
    %vm982 = vcmp.eq.f32.partialorder %v981, 8.507059e+37
    %v983 = vand.u32 %v971, 2147483648
    %v984 = vor.u32 1.1754944e-38, %v983
    %v985 = vsel %vm982, %v984, %v980
    %v986 = vmul.f32 1.0, %v985
    %v987 = vmul.f32 %v966, %v646
    %v988 = vmul.f32 %v966, %v967
    %990 = vrot.lane.b32.xlu0 %v988, 64
    %v991 = vpop.permute.xlu0 %990
    %v993 = vadd.f32 %v987, %v991
    %v994 = vtanh.pop %v993
    %v995 = vmul.f32 %v986, %v994
    %997 = vrot.lane.b32.xlu0 %v995, 64
    %v998 = vpop.permute.xlu0 %997
    %1000 = vst.msk [vmem:[#allocation2 + $0x8] sm:$0xff] %vm270, %v998
    %v1001 = vpack.c.bf16 %v784, %v784
    %v1002 = vld [vmem:[%s4] sm:$0xff]
    %v1003 = vld [vmem:[%s4 + $0x8] sm:$0xff]
    %v1004 = vld [vmem:[%s4 + $0x10] sm:$0xff]
    %v1005 = vld [vmem:[%s4 + $0x18] sm:$0xff]
    %v1006 = vld [vmem:[%s4 + $0x20] sm:$0xff]
    %v1007 = vld [vmem:[%s4 + $0x28] sm:$0xff]
    %v1008 = vld [vmem:[%s4 + $0x30] sm:$0xff]
    %v1009 = vld [vmem:[%s4 + $0x38] sm:$0xff]
    %1011 = vrot.lane.b32.xlu0 %v1001, 64
    %v1012 = vpop.permute.xlu0 %1011
    %v1021 = vunpack.c.l.b16 %v1002
    %v1022 = vunpack.c.h.b16 %v1002
    %v1023 = vunpack.c.l.b16 %v1003
    %v1024 = vunpack.c.h.b16 %v1003
    %v1025 = vunpack.c.l.b16 %v1004
    %v1026 = vunpack.c.h.b16 %v1004
    %v1027 = vunpack.c.l.b16 %v1005
    %v1028 = vunpack.c.h.b16 %v1005
    %v1029 = vunpack.c.l.b16 %v1006
    %v1030 = vunpack.c.h.b16 %v1006
    %v1031 = vunpack.c.l.b16 %v1007
    %v1032 = vunpack.c.h.b16 %v1007
    %v1033 = vunpack.c.l.b16 %v1008
    %v1034 = vunpack.c.h.b16 %v1008
    %v1035 = vunpack.c.l.b16 %v1009
    %v1036 = vunpack.c.h.b16 %v1009
    %v1037 = vpack.c.b16 %v1023, %v1021
    %v1038 = vpack.c.b16 %v1024, %v1022
    %v1039 = vpack.c.b16 %v1027, %v1025
    %v1040 = vpack.c.b16 %v1028, %v1026
    %v1041 = vpack.c.b16 %v1031, %v1029
    %v1042 = vpack.c.b16 %v1032, %v1030
    %v1043 = vpack.c.b16 %v1035, %v1033
    %v1044 = vpack.c.b16 %v1036, %v1034
    %v1054 = vsel %vm270, %v1012, 0
    %1056 = vmatpush.bf16.msra.mxu0 0
    %1057 = vmatpush.bf16.msra.mxu0 0
    %1058 = vmatpush.bf16.msra.mxu0 0
    %1059 = vmatpush.bf16.msra.mxu0 0
    %1060 = vmatpush.bf16.msra.mxu0 %v1043
    %1061 = vmatpush.bf16.msra.mxu0 %v1041
    %1062 = vmatpush.bf16.msra.mxu0 %v1039
    %1063 = vmatpush.bf16.msra.mxu0 %v1037
    %1064 = vmatmul.bf16.gmra.mxu0 %v1054
    %v1065 = vpop.f32.mrf.mxu0
    %v1066 = vadd.f32 0.0, %v1065
    %v1067 = vpop.f32.mrf.mxu0
    %1068 = vdwg.mxu0
    %1069 = vmatpush.bf16.msra.mxu0 0
    %1070 = vmatpush.bf16.msra.mxu0 0
    %1071 = vmatpush.bf16.msra.mxu0 0
    %1072 = vmatpush.bf16.msra.mxu0 0
    %1073 = vmatpush.bf16.msra.mxu0 %v1044
    %1074 = vmatpush.bf16.msra.mxu0 %v1042
    %1075 = vmatpush.bf16.msra.mxu0 %v1040
    %1076 = vmatpush.bf16.msra.mxu0 %v1038
    %1077 = vmatmul.bf16.gmra.mxu0 %v1054
    %v1078 = vpop.f32.mrf.mxu0
    %v1079 = vadd.f32 0.0, %v1078
    %v1080 = vpop.f32.mrf.mxu0
    %1081 = vdwg.mxu0
    %v1082 = vadd.f32 %v174, %v1066
    %v1083 = vadd.f32 %v203, %v1079
    %v1084 = vxor.u32 %v1082, 2147483648
    %v1085 = vmul.f32 %v1084, 1.442695
    %v1086 = vpow.pop %v1085
    %v1087 = vadd.f32 %v1086, 1.0
    %v1088 = vrcp.pop %v1087
    %v1089 = vmul.f32 %v1087, %v1088
    %v1090 = vsub.f32 1.0, %v1089
    %v1091 = vmul.f32 %v1088, %v1090
    %v1092 = vadd.f32 %v1088, %v1091
    %vm1093 = vweird.f32 %v1087
    %vm1094 = vweird.f32 %v1088
    %vm1095 = vmor %vm1093, %vm1094
    %v1096 = vsel %vm1095, %v1088, %v1092
    %v1097 = vand.u32 2147483647, %v1087
    %vm1098 = vcmp.eq.f32.partialorder %v1097, 8.507059e+37
    %v1099 = vand.u32 %v1087, 2147483648
    %v1100 = vor.u32 1.1754944e-38, %v1099
    %v1101 = vsel %vm1098, %v1100, %v1096
    %v1102 = vmul.f32 1.0, %v1101
    %v1103 = vtanh.pop %v1083
    %v1104 = vxor.u32 %v1083, 2147483648
    %v1105 = vmul.f32 %v1104, 1.442695
    %v1106 = vpow.pop %v1105
    %v1107 = vadd.f32 %v1106, 1.0
    %v1108 = vrcp.pop %v1107
    %v1109 = vmul.f32 %v1107, %v1108
    %v1110 = vsub.f32 1.0, %v1109
    %v1111 = vmul.f32 %v1108, %v1110
    %v1112 = vadd.f32 %v1108, %v1111
    %vm1113 = vweird.f32 %v1107
    %vm1114 = vweird.f32 %v1108
    %vm1115 = vmor %vm1113, %vm1114
    %v1116 = vsel %vm1115, %v1108, %v1112
    %v1117 = vand.u32 2147483647, %v1107
    %vm1118 = vcmp.eq.f32.partialorder %v1117, 8.507059e+37
    %v1119 = vand.u32 %v1107, 2147483648
    %v1120 = vor.u32 1.1754944e-38, %v1119
    %v1121 = vsel %vm1118, %v1120, %v1116
    %v1122 = vmul.f32 1.0, %v1121
    %v1123 = vmul.f32 %v1102, %v782
    %v1124 = vmul.f32 %v1102, %v1103
    %1126 = vrot.lane.b32.xlu0 %v1124, 64
    %v1127 = vpop.permute.xlu0 %1126
    %v1129 = vadd.f32 %v1123, %v1127
    %v1130 = vtanh.pop %v1129
    %v1131 = vmul.f32 %v1122, %v1130
    %v1132 = vld [vmem:[%s6] sm:$0xff]
    %v1133 = vld [vmem:[%s6 + $0x8] sm:$0xff]
    %v1134 = vld [vmem:[%s6 + $0x10] sm:$0xff]
    %v1135 = vld [vmem:[%s6 + $0x18] sm:$0xff]
    %v1136 = vld [vmem:[%s6 + $0x20] sm:$0xff]
    %v1137 = vld [vmem:[%s6 + $0x28] sm:$0xff]
    %v1138 = vld [vmem:[%s6 + $0x30] sm:$0xff]
    %v1139 = vld [vmem:[%s6 + $0x38] sm:$0xff]
    %v1140 = vld [vmem:[%s8] sm:$0x3]
    %v1142 = vperm.slane %v1140, 0
    %v1143 = vperm.slane %v1140, 1
    %v1154 = vunpack.c.l.b16 %v1132
    %v1155 = vunpack.c.h.b16 %v1132
    %v1156 = vunpack.c.l.b16 %v1133
    %v1157 = vunpack.c.h.b16 %v1133
    %v1158 = vunpack.c.l.b16 %v1134
    %v1159 = vunpack.c.h.b16 %v1134
    %v1160 = vunpack.c.l.b16 %v1135
    %v1161 = vunpack.c.h.b16 %v1135
    %v1162 = vunpack.c.l.b16 %v1136
    %v1163 = vunpack.c.h.b16 %v1136
    %v1164 = vunpack.c.l.b16 %v1137
    %v1165 = vunpack.c.h.b16 %v1137
    %v1166 = vunpack.c.l.b16 %v1138
    %v1167 = vunpack.c.h.b16 %v1138
    %v1168 = vunpack.c.l.b16 %v1139
    %v1169 = vunpack.c.h.b16 %v1139
    %v1170 = vpack.c.b16 %v1156, %v1154
    %v1171 = vpack.c.b16 %v1157, %v1155
    %v1172 = vpack.c.b16 %v1160, %v1158
    %v1173 = vpack.c.b16 %v1161, %v1159
    %v1174 = vpack.c.b16 %v1164, %v1162
    %v1175 = vpack.c.b16 %v1165, %v1163
    %v1176 = vpack.c.b16 %v1168, %v1166
    %v1177 = vpack.c.b16 %v1169, %v1167
    %1186 = vmatpush.bf16.msra.mxu0 0
    %1187 = vmatpush.bf16.msra.mxu0 0
    %1188 = vmatpush.bf16.msra.mxu0 0
    %1189 = vmatpush.bf16.msra.mxu0 0
    %1190 = vmatpush.bf16.msra.mxu0 %v1176
    %1191 = vmatpush.bf16.msra.mxu0 %v1174
    %1192 = vmatpush.bf16.msra.mxu0 %v1172
    %1193 = vmatpush.bf16.msra.mxu0 %v1170
    %1194 = vmatmul.bf16.gmra.mxu0 %v1054
    %v1195 = vpop.f32.mrf.mxu0
    %v1196 = vadd.f32 %v1142, %v1195
    %v1197 = vpop.f32.mrf.mxu0
    %1198 = vdwg.mxu0
    %1199 = vmatpush.bf16.msra.mxu0 0
    %1200 = vmatpush.bf16.msra.mxu0 0
    %1201 = vmatpush.bf16.msra.mxu0 0
    %1202 = vmatpush.bf16.msra.mxu0 0
    %1203 = vmatpush.bf16.msra.mxu0 %v1177
    %1204 = vmatpush.bf16.msra.mxu0 %v1175
    %1205 = vmatpush.bf16.msra.mxu0 %v1173
    %1206 = vmatpush.bf16.msra.mxu0 %v1171
    %1207 = vmatmul.bf16.gmra.mxu0 %v1054
    %v1208 = vpop.f32.mrf.mxu0
    %v1209 = vadd.f32 %v1143, %v1208
    %v1210 = vpop.f32.mrf.mxu0
    %1211 = vdwg.mxu0
    %v1212 = vpack.c.bf16 %v995, %v995
    %v1213 = vld [vmem:[#allocation3] sm:$0xff]
    %v1214 = vld [vmem:[#allocation3 + $0x8] sm:$0xff]
    %v1215 = vld [vmem:[#allocation3 + $0x10] sm:$0xff]
    %v1216 = vld [vmem:[#allocation3 + $0x18] sm:$0xff]
    %v1217 = vld [vmem:[#allocation3 + $0x20] sm:$0xff]
    %v1218 = vld [vmem:[#allocation3 + $0x28] sm:$0xff]
    %v1219 = vld [vmem:[#allocation3 + $0x30] sm:$0xff]
    %v1220 = vld [vmem:[#allocation3 + $0x38] sm:$0xff]
    %1222 = vrot.lane.b32.xlu0 %v1212, 64
    %v1223 = vpop.permute.xlu0 %1222
    %v1232 = vunpack.c.l.b16 %v1213
    %v1233 = vunpack.c.h.b16 %v1213
    %v1234 = vunpack.c.l.b16 %v1214
    %v1235 = vunpack.c.h.b16 %v1214
    %v1236 = vunpack.c.l.b16 %v1215
    %v1237 = vunpack.c.h.b16 %v1215
    %v1238 = vunpack.c.l.b16 %v1216
    %v1239 = vunpack.c.h.b16 %v1216
    %v1240 = vunpack.c.l.b16 %v1217
    %v1241 = vunpack.c.h.b16 %v1217
    %v1242 = vunpack.c.l.b16 %v1218
    %v1243 = vunpack.c.h.b16 %v1218
    %v1244 = vunpack.c.l.b16 %v1219
    %v1245 = vunpack.c.h.b16 %v1219
    %v1246 = vunpack.c.l.b16 %v1220
    %v1247 = vunpack.c.h.b16 %v1220
    %v1248 = vpack.c.b16 %v1234, %v1232
    %v1249 = vpack.c.b16 %v1235, %v1233
    %v1250 = vpack.c.b16 %v1238, %v1236
    %v1251 = vpack.c.b16 %v1239, %v1237
    %v1252 = vpack.c.b16 %v1242, %v1240
    %v1253 = vpack.c.b16 %v1243, %v1241
    %v1254 = vpack.c.b16 %v1246, %v1244
    %v1255 = vpack.c.b16 %v1247, %v1245
    %v1265 = vsel %vm270, %v1223, 0
    %1267 = vmatpush.bf16.msra.mxu0 0
    %1268 = vmatpush.bf16.msra.mxu0 0
    %1269 = vmatpush.bf16.msra.mxu0 0
    %1270 = vmatpush.bf16.msra.mxu0 0
    %1271 = vmatpush.bf16.msra.mxu0 %v1254
    %1272 = vmatpush.bf16.msra.mxu0 %v1252
    %1273 = vmatpush.bf16.msra.mxu0 %v1250
    %1274 = vmatpush.bf16.msra.mxu0 %v1248
    %1275 = vmatmul.bf16.gmra.mxu0 %v1265
    %v1276 = vpop.f32.mrf.mxu0
    %v1277 = vadd.f32 0.0, %v1276
    %v1278 = vpop.f32.mrf.mxu0
    %1279 = vdwg.mxu0
    %1280 = vmatpush.bf16.msra.mxu0 0
    %1281 = vmatpush.bf16.msra.mxu0 0
    %1282 = vmatpush.bf16.msra.mxu0 0
    %1283 = vmatpush.bf16.msra.mxu0 0
    %1284 = vmatpush.bf16.msra.mxu0 %v1255
    %1285 = vmatpush.bf16.msra.mxu0 %v1253
    %1286 = vmatpush.bf16.msra.mxu0 %v1251
    %1287 = vmatpush.bf16.msra.mxu0 %v1249
    %1288 = vmatmul.bf16.gmra.mxu0 %v1265
    %v1289 = vpop.f32.mrf.mxu0
    %v1290 = vadd.f32 0.0, %v1289
    %v1291 = vpop.f32.mrf.mxu0
    %1292 = vdwg.mxu0
    %v1293 = vadd.f32 %v1196, %v1277
    %v1294 = vadd.f32 %v1209, %v1290
    %v1295 = vxor.u32 %v1293, 2147483648
    %v1296 = vmul.f32 %v1295, 1.442695
    %v1297 = vpow.pop %v1296
    %v1298 = vadd.f32 %v1297, 1.0
    %v1299 = vrcp.pop %v1298
    %v1300 = vmul.f32 %v1298, %v1299
    %v1301 = vsub.f32 1.0, %v1300
    %v1302 = vmul.f32 %v1299, %v1301
    %v1303 = vadd.f32 %v1299, %v1302
    %vm1304 = vweird.f32 %v1298
    %vm1305 = vweird.f32 %v1299
    %vm1306 = vmor %vm1304, %vm1305
    %v1307 = vsel %vm1306, %v1299, %v1303
    %v1308 = vand.u32 2147483647, %v1298
    %vm1309 = vcmp.eq.f32.partialorder %v1308, 8.507059e+37
    %v1310 = vand.u32 %v1298, 2147483648
    %v1311 = vor.u32 1.1754944e-38, %v1310
    %v1312 = vsel %vm1309, %v1311, %v1307
    %v1313 = vmul.f32 1.0, %v1312
    %v1314 = vtanh.pop %v1294
    %v1315 = vxor.u32 %v1294, 2147483648
    %v1316 = vmul.f32 %v1315, 1.442695
    %v1317 = vpow.pop %v1316
    %v1318 = vadd.f32 %v1317, 1.0
    %v1319 = vrcp.pop %v1318
    %v1320 = vmul.f32 %v1318, %v1319
    %v1321 = vsub.f32 1.0, %v1320
    %v1322 = vmul.f32 %v1319, %v1321
    %v1323 = vadd.f32 %v1319, %v1322
    %vm1324 = vweird.f32 %v1318
    %vm1325 = vweird.f32 %v1319
    %vm1326 = vmor %vm1324, %vm1325
    %v1327 = vsel %vm1326, %v1319, %v1323
    %v1328 = vand.u32 2147483647, %v1318
    %vm1329 = vcmp.eq.f32.partialorder %v1328, 8.507059e+37
    %v1330 = vand.u32 %v1318, 2147483648
    %v1331 = vor.u32 1.1754944e-38, %v1330
    %v1332 = vsel %vm1329, %v1331, %v1327
    %v1333 = vmul.f32 1.0, %v1332
    %v1334 = vmul.f32 %v1313, %v993
    %v1335 = vmul.f32 %v1313, %v1314
    %1337 = vrot.lane.b32.xlu0 %v1335, 64
    %v1338 = vpop.permute.xlu0 %1337
    %v1340 = vadd.f32 %v1334, %v1338
    %v1341 = vtanh.pop %v1340
    %v1342 = vmul.f32 %v1333, %v1341
    %1344 = vrot.lane.b32.xlu0 %v1342, 64
    %v1345 = vpop.permute.xlu0 %1344
    %1347 = vst.msk [vmem:[#allocation2 + $0x10] sm:$0xff] %vm270, %v1345
    %v1348 = vpack.c.bf16 %v1131, %v1131
    %v1349 = vld [vmem:[%s4] sm:$0xff]
    %v1350 = vld [vmem:[%s4 + $0x8] sm:$0xff]
    %v1351 = vld [vmem:[%s4 + $0x10] sm:$0xff]
    %v1352 = vld [vmem:[%s4 + $0x18] sm:$0xff]
    %v1353 = vld [vmem:[%s4 + $0x20] sm:$0xff]
    %v1354 = vld [vmem:[%s4 + $0x28] sm:$0xff]
    %v1355 = vld [vmem:[%s4 + $0x30] sm:$0xff]
    %v1356 = vld [vmem:[%s4 + $0x38] sm:$0xff]
    %1358 = vrot.lane.b32.xlu0 %v1348, 64
    %v1359 = vpop.permute.xlu0 %1358
    %v1368 = vunpack.c.l.b16 %v1349
    %v1369 = vunpack.c.h.b16 %v1349
    %v1370 = vunpack.c.l.b16 %v1350
    %v1371 = vunpack.c.h.b16 %v1350
    %v1372 = vunpack.c.l.b16 %v1351
    %v1373 = vunpack.c.h.b16 %v1351
    %v1374 = vunpack.c.l.b16 %v1352
    %v1375 = vunpack.c.h.b16 %v1352
    %v1376 = vunpack.c.l.b16 %v1353
    %v1377 = vunpack.c.h.b16 %v1353
    %v1378 = vunpack.c.l.b16 %v1354
    %v1379 = vunpack.c.h.b16 %v1354
    %v1380 = vunpack.c.l.b16 %v1355
    %v1381 = vunpack.c.h.b16 %v1355
    %v1382 = vunpack.c.l.b16 %v1356
    %v1383 = vunpack.c.h.b16 %v1356
    %v1384 = vpack.c.b16 %v1370, %v1368
    %v1385 = vpack.c.b16 %v1371, %v1369
    %v1386 = vpack.c.b16 %v1374, %v1372
    %v1387 = vpack.c.b16 %v1375, %v1373
    %v1388 = vpack.c.b16 %v1378, %v1376
    %v1389 = vpack.c.b16 %v1379, %v1377
    %v1390 = vpack.c.b16 %v1382, %v1380
    %v1391 = vpack.c.b16 %v1383, %v1381
    %v1401 = vsel %vm270, %v1359, 0
    %1403 = vmatpush.bf16.msra.mxu0 0
    %1404 = vmatpush.bf16.msra.mxu0 0
    %1405 = vmatpush.bf16.msra.mxu0 0
    %1406 = vmatpush.bf16.msra.mxu0 0
    %1407 = vmatpush.bf16.msra.mxu0 %v1390
    %1408 = vmatpush.bf16.msra.mxu0 %v1388
    %1409 = vmatpush.bf16.msra.mxu0 %v1386
    %1410 = vmatpush.bf16.msra.mxu0 %v1384
    %1411 = vmatmul.bf16.gmra.mxu0 %v1401
    %v1412 = vpop.f32.mrf.mxu0
    %v1413 = vadd.f32 0.0, %v1412
    %v1414 = vpop.f32.mrf.mxu0
    %1415 = vdwg.mxu0
    %1416 = vmatpush.bf16.msra.mxu0 0
    %1417 = vmatpush.bf16.msra.mxu0 0
    %1418 = vmatpush.bf16.msra.mxu0 0
    %1419 = vmatpush.bf16.msra.mxu0 0
    %1420 = vmatpush.bf16.msra.mxu0 %v1391
    %1421 = vmatpush.bf16.msra.mxu0 %v1389
    %1422 = vmatpush.bf16.msra.mxu0 %v1387
    %1423 = vmatpush.bf16.msra.mxu0 %v1385
    %1424 = vmatmul.bf16.gmra.mxu0 %v1401
    %v1425 = vpop.f32.mrf.mxu0
    %v1426 = vadd.f32 0.0, %v1425
    %v1427 = vpop.f32.mrf.mxu0
    %1428 = vdwg.mxu0
    %v1429 = vadd.f32 %v177, %v1413
    %v1430 = vadd.f32 %v206, %v1426
    %v1431 = vxor.u32 %v1429, 2147483648
    %v1432 = vmul.f32 %v1431, 1.442695
    %v1433 = vpow.pop %v1432
    %v1434 = vadd.f32 %v1433, 1.0
    %v1435 = vrcp.pop %v1434
    %v1436 = vmul.f32 %v1434, %v1435
    %v1437 = vsub.f32 1.0, %v1436
    %v1438 = vmul.f32 %v1435, %v1437
    %v1439 = vadd.f32 %v1435, %v1438
    %vm1440 = vweird.f32 %v1434
    %vm1441 = vweird.f32 %v1435
    %vm1442 = vmor %vm1440, %vm1441
    %v1443 = vsel %vm1442, %v1435, %v1439
    %v1444 = vand.u32 2147483647, %v1434
    %vm1445 = vcmp.eq.f32.partialorder %v1444, 8.507059e+37
    %v1446 = vand.u32 %v1434, 2147483648
    %v1447 = vor.u32 1.1754944e-38, %v1446
    %v1448 = vsel %vm1445, %v1447, %v1443
    %v1449 = vmul.f32 1.0, %v1448
    %v1450 = vtanh.pop %v1430
    %v1451 = vxor.u32 %v1430, 2147483648
    %v1452 = vmul.f32 %v1451, 1.442695
    %v1453 = vpow.pop %v1452
    %v1454 = vadd.f32 %v1453, 1.0
    %v1455 = vrcp.pop %v1454
    %v1456 = vmul.f32 %v1454, %v1455
    %v1457 = vsub.f32 1.0, %v1456
    %v1458 = vmul.f32 %v1455, %v1457
    %v1459 = vadd.f32 %v1455, %v1458
    %vm1460 = vweird.f32 %v1454
    %vm1461 = vweird.f32 %v1455
    %vm1462 = vmor %vm1460, %vm1461
    %v1463 = vsel %vm1462, %v1455, %v1459
    %v1464 = vand.u32 2147483647, %v1454
    %vm1465 = vcmp.eq.f32.partialorder %v1464, 8.507059e+37
    %v1466 = vand.u32 %v1454, 2147483648
    %v1467 = vor.u32 1.1754944e-38, %v1466
    %v1468 = vsel %vm1465, %v1467, %v1463
    %v1469 = vmul.f32 1.0, %v1468
    %v1470 = vmul.f32 %v1449, %v1129
    %v1471 = vmul.f32 %v1449, %v1450
    %1473 = vrot.lane.b32.xlu0 %v1471, 64
    %v1474 = vpop.permute.xlu0 %1473
    %v1476 = vadd.f32 %v1470, %v1474
    %v1477 = vtanh.pop %v1476
    %v1478 = vmul.f32 %v1469, %v1477
    %v1479 = vld [vmem:[%s6] sm:$0xff]
    %v1480 = vld [vmem:[%s6 + $0x8] sm:$0xff]
    %v1481 = vld [vmem:[%s6 + $0x10] sm:$0xff]
    %v1482 = vld [vmem:[%s6 + $0x18] sm:$0xff]
    %v1483 = vld [vmem:[%s6 + $0x20] sm:$0xff]
    %v1484 = vld [vmem:[%s6 + $0x28] sm:$0xff]
    %v1485 = vld [vmem:[%s6 + $0x30] sm:$0xff]
    %v1486 = vld [vmem:[%s6 + $0x38] sm:$0xff]
    %v1487 = vld [vmem:[%s8] sm:$0x3]
    %v1489 = vperm.slane %v1487, 0
    %v1490 = vperm.slane %v1487, 1
    %v1501 = vunpack.c.l.b16 %v1479
    %v1502 = vunpack.c.h.b16 %v1479
    %v1503 = vunpack.c.l.b16 %v1480
    %v1504 = vunpack.c.h.b16 %v1480
    %v1505 = vunpack.c.l.b16 %v1481
    %v1506 = vunpack.c.h.b16 %v1481
    %v1507 = vunpack.c.l.b16 %v1482
    %v1508 = vunpack.c.h.b16 %v1482
    %v1509 = vunpack.c.l.b16 %v1483
    %v1510 = vunpack.c.h.b16 %v1483
    %v1511 = vunpack.c.l.b16 %v1484
    %v1512 = vunpack.c.h.b16 %v1484
    %v1513 = vunpack.c.l.b16 %v1485
    %v1514 = vunpack.c.h.b16 %v1485
    %v1515 = vunpack.c.l.b16 %v1486
    %v1516 = vunpack.c.h.b16 %v1486
    %v1517 = vpack.c.b16 %v1503, %v1501
    %v1518 = vpack.c.b16 %v1504, %v1502
    %v1519 = vpack.c.b16 %v1507, %v1505
    %v1520 = vpack.c.b16 %v1508, %v1506
    %v1521 = vpack.c.b16 %v1511, %v1509
    %v1522 = vpack.c.b16 %v1512, %v1510
    %v1523 = vpack.c.b16 %v1515, %v1513
    %v1524 = vpack.c.b16 %v1516, %v1514
    %1533 = vmatpush.bf16.msra.mxu0 0
    %1534 = vmatpush.bf16.msra.mxu0 0
    %1535 = vmatpush.bf16.msra.mxu0 0
    %1536 = vmatpush.bf16.msra.mxu0 0
    %1537 = vmatpush.bf16.msra.mxu0 %v1523
    %1538 = vmatpush.bf16.msra.mxu0 %v1521
    %1539 = vmatpush.bf16.msra.mxu0 %v1519
    %1540 = vmatpush.bf16.msra.mxu0 %v1517
    %1541 = vmatmul.bf16.gmra.mxu0 %v1401
    %v1542 = vpop.f32.mrf.mxu0
    %v1543 = vadd.f32 %v1489, %v1542
    %v1544 = vpop.f32.mrf.mxu0
    %1545 = vdwg.mxu0
    %1546 = vmatpush.bf16.msra.mxu0 0
    %1547 = vmatpush.bf16.msra.mxu0 0
    %1548 = vmatpush.bf16.msra.mxu0 0
    %1549 = vmatpush.bf16.msra.mxu0 0
    %1550 = vmatpush.bf16.msra.mxu0 %v1524
    %1551 = vmatpush.bf16.msra.mxu0 %v1522
    %1552 = vmatpush.bf16.msra.mxu0 %v1520
    %1553 = vmatpush.bf16.msra.mxu0 %v1518
    %1554 = vmatmul.bf16.gmra.mxu0 %v1401
    %v1555 = vpop.f32.mrf.mxu0
    %v1556 = vadd.f32 %v1490, %v1555
    %v1557 = vpop.f32.mrf.mxu0
    %1558 = vdwg.mxu0
    %v1559 = vpack.c.bf16 %v1342, %v1342
    %v1560 = vld [vmem:[#allocation3] sm:$0xff]
    %v1561 = vld [vmem:[#allocation3 + $0x8] sm:$0xff]
    %v1562 = vld [vmem:[#allocation3 + $0x10] sm:$0xff]
    %v1563 = vld [vmem:[#allocation3 + $0x18] sm:$0xff]
    %v1564 = vld [vmem:[#allocation3 + $0x20] sm:$0xff]
    %v1565 = vld [vmem:[#allocation3 + $0x28] sm:$0xff]
    %v1566 = vld [vmem:[#allocation3 + $0x30] sm:$0xff]
    %v1567 = vld [vmem:[#allocation3 + $0x38] sm:$0xff]
    %1569 = vrot.lane.b32.xlu0 %v1559, 64
    %v1570 = vpop.permute.xlu0 %1569
    %v1579 = vunpack.c.l.b16 %v1560
    %v1580 = vunpack.c.h.b16 %v1560
    %v1581 = vunpack.c.l.b16 %v1561
    %v1582 = vunpack.c.h.b16 %v1561
    %v1583 = vunpack.c.l.b16 %v1562
    %v1584 = vunpack.c.h.b16 %v1562
    %v1585 = vunpack.c.l.b16 %v1563
    %v1586 = vunpack.c.h.b16 %v1563
    %v1587 = vunpack.c.l.b16 %v1564
    %v1588 = vunpack.c.h.b16 %v1564
    %v1589 = vunpack.c.l.b16 %v1565
    %v1590 = vunpack.c.h.b16 %v1565
    %v1591 = vunpack.c.l.b16 %v1566
    %v1592 = vunpack.c.h.b16 %v1566
    %v1593 = vunpack.c.l.b16 %v1567
    %v1594 = vunpack.c.h.b16 %v1567
    %v1595 = vpack.c.b16 %v1581, %v1579
    %v1596 = vpack.c.b16 %v1582, %v1580
    %v1597 = vpack.c.b16 %v1585, %v1583
    %v1598 = vpack.c.b16 %v1586, %v1584
    %v1599 = vpack.c.b16 %v1589, %v1587
    %v1600 = vpack.c.b16 %v1590, %v1588
    %v1601 = vpack.c.b16 %v1593, %v1591
    %v1602 = vpack.c.b16 %v1594, %v1592
    %v1612 = vsel %vm270, %v1570, 0
    %1614 = vmatpush.bf16.msra.mxu0 0
    %1615 = vmatpush.bf16.msra.mxu0 0
    %1616 = vmatpush.bf16.msra.mxu0 0
    %1617 = vmatpush.bf16.msra.mxu0 0
    %1618 = vmatpush.bf16.msra.mxu0 %v1601
    %1619 = vmatpush.bf16.msra.mxu0 %v1599
    %1620 = vmatpush.bf16.msra.mxu0 %v1597
    %1621 = vmatpush.bf16.msra.mxu0 %v1595
    %1622 = vmatmul.bf16.gmra.mxu0 %v1612
    %v1623 = vpop.f32.mrf.mxu0
    %v1624 = vadd.f32 0.0, %v1623
    %v1625 = vpop.f32.mrf.mxu0
    %1626 = vdwg.mxu0
    %1627 = vmatpush.bf16.msra.mxu0 0
    %1628 = vmatpush.bf16.msra.mxu0 0
    %1629 = vmatpush.bf16.msra.mxu0 0
    %1630 = vmatpush.bf16.msra.mxu0 0
    %1631 = vmatpush.bf16.msra.mxu0 %v1602
    %1632 = vmatpush.bf16.msra.mxu0 %v1600
    %1633 = vmatpush.bf16.msra.mxu0 %v1598
    %1634 = vmatpush.bf16.msra.mxu0 %v1596
    %1635 = vmatmul.bf16.gmra.mxu0 %v1612
    %v1636 = vpop.f32.mrf.mxu0
    %v1637 = vadd.f32 0.0, %v1636
    %v1638 = vpop.f32.mrf.mxu0
    %1639 = vdwg.mxu0
    %v1640 = vadd.f32 %v1543, %v1624
    %v1641 = vadd.f32 %v1556, %v1637
    %v1642 = vxor.u32 %v1640, 2147483648
    %v1643 = vmul.f32 %v1642, 1.442695
    %v1644 = vpow.pop %v1643
    %v1645 = vadd.f32 %v1644, 1.0
    %v1646 = vrcp.pop %v1645
    %v1647 = vmul.f32 %v1645, %v1646
    %v1648 = vsub.f32 1.0, %v1647
    %v1649 = vmul.f32 %v1646, %v1648
    %v1650 = vadd.f32 %v1646, %v1649
    %vm1651 = vweird.f32 %v1645
    %vm1652 = vweird.f32 %v1646
    %vm1653 = vmor %vm1651, %vm1652
    %v1654 = vsel %vm1653, %v1646, %v1650
    %v1655 = vand.u32 2147483647, %v1645
    %vm1656 = vcmp.eq.f32.partialorder %v1655, 8.507059e+37
    %v1657 = vand.u32 %v1645, 2147483648
    %v1658 = vor.u32 1.1754944e-38, %v1657
    %v1659 = vsel %vm1656, %v1658, %v1654
    %v1660 = vmul.f32 1.0, %v1659
    %v1661 = vtanh.pop %v1641
    %v1662 = vxor.u32 %v1641, 2147483648
    %v1663 = vmul.f32 %v1662, 1.442695
    %v1664 = vpow.pop %v1663
    %v1665 = vadd.f32 %v1664, 1.0
    %v1666 = vrcp.pop %v1665
    %v1667 = vmul.f32 %v1665, %v1666
    %v1668 = vsub.f32 1.0, %v1667
    %v1669 = vmul.f32 %v1666, %v1668
    %v1670 = vadd.f32 %v1666, %v1669
    %vm1671 = vweird.f32 %v1665
    %vm1672 = vweird.f32 %v1666
    %vm1673 = vmor %vm1671, %vm1672
    %v1674 = vsel %vm1673, %v1666, %v1670
    %v1675 = vand.u32 2147483647, %v1665
    %vm1676 = vcmp.eq.f32.partialorder %v1675, 8.507059e+37
    %v1677 = vand.u32 %v1665, 2147483648
    %v1678 = vor.u32 1.1754944e-38, %v1677
    %v1679 = vsel %vm1676, %v1678, %v1674
    %v1680 = vmul.f32 1.0, %v1679
    %v1681 = vmul.f32 %v1660, %v1340
    %v1682 = vmul.f32 %v1660, %v1661
    %1684 = vrot.lane.b32.xlu0 %v1682, 64
    %v1685 = vpop.permute.xlu0 %1684
    %v1687 = vadd.f32 %v1681, %v1685
    %v1688 = vtanh.pop %v1687
    %v1689 = vmul.f32 %v1680, %v1688
    %1691 = vrot.lane.b32.xlu0 %v1689, 64
    %v1692 = vpop.permute.xlu0 %1691
    %1694 = vst.msk [vmem:[#allocation2 + $0x18] sm:$0xff] %vm270, %v1692
    %v1695 = vpack.c.bf16 %v1478, %v1478
    %v1696 = vld [vmem:[%s4] sm:$0xff]
    %v1697 = vld [vmem:[%s4 + $0x8] sm:$0xff]
    %v1698 = vld [vmem:[%s4 + $0x10] sm:$0xff]
    %v1699 = vld [vmem:[%s4 + $0x18] sm:$0xff]
    %v1700 = vld [vmem:[%s4 + $0x20] sm:$0xff]
    %v1701 = vld [vmem:[%s4 + $0x28] sm:$0xff]
    %v1702 = vld [vmem:[%s4 + $0x30] sm:$0xff]
    %v1703 = vld [vmem:[%s4 + $0x38] sm:$0xff]
    %1705 = vrot.lane.b32.xlu0 %v1695, 64
    %v1706 = vpop.permute.xlu0 %1705
    %v1715 = vunpack.c.l.b16 %v1696
    %v1716 = vunpack.c.h.b16 %v1696
    %v1717 = vunpack.c.l.b16 %v1697
    %v1718 = vunpack.c.h.b16 %v1697
    %v1719 = vunpack.c.l.b16 %v1698
    %v1720 = vunpack.c.h.b16 %v1698
    %v1721 = vunpack.c.l.b16 %v1699
    %v1722 = vunpack.c.h.b16 %v1699
    %v1723 = vunpack.c.l.b16 %v1700
    %v1724 = vunpack.c.h.b16 %v1700
    %v1725 = vunpack.c.l.b16 %v1701
    %v1726 = vunpack.c.h.b16 %v1701
    %v1727 = vunpack.c.l.b16 %v1702
    %v1728 = vunpack.c.h.b16 %v1702
    %v1729 = vunpack.c.l.b16 %v1703
    %v1730 = vunpack.c.h.b16 %v1703
    %v1731 = vpack.c.b16 %v1717, %v1715
    %v1732 = vpack.c.b16 %v1718, %v1716
    %v1733 = vpack.c.b16 %v1721, %v1719
    %v1734 = vpack.c.b16 %v1722, %v1720
    %v1735 = vpack.c.b16 %v1725, %v1723
    %v1736 = vpack.c.b16 %v1726, %v1724
    %v1737 = vpack.c.b16 %v1729, %v1727
    %v1738 = vpack.c.b16 %v1730, %v1728
    %v1748 = vsel %vm270, %v1706, 0
    %1750 = vmatpush.bf16.msra.mxu0 0
    %1751 = vmatpush.bf16.msra.mxu0 0
    %1752 = vmatpush.bf16.msra.mxu0 0
    %1753 = vmatpush.bf16.msra.mxu0 0
    %1754 = vmatpush.bf16.msra.mxu0 %v1737
    %1755 = vmatpush.bf16.msra.mxu0 %v1735
    %1756 = vmatpush.bf16.msra.mxu0 %v1733
    %1757 = vmatpush.bf16.msra.mxu0 %v1731
    %1758 = vmatmul.bf16.gmra.mxu0 %v1748
    %v1759 = vpop.f32.mrf.mxu0
    %v1760 = vadd.f32 0.0, %v1759
    %v1761 = vpop.f32.mrf.mxu0
    %1762 = vdwg.mxu0
    %1763 = vmatpush.bf16.msra.mxu0 0
    %1764 = vmatpush.bf16.msra.mxu0 0
    %1765 = vmatpush.bf16.msra.mxu0 0
    %1766 = vmatpush.bf16.msra.mxu0 0
    %1767 = vmatpush.bf16.msra.mxu0 %v1738
    %1768 = vmatpush.bf16.msra.mxu0 %v1736
    %1769 = vmatpush.bf16.msra.mxu0 %v1734
    %1770 = vmatpush.bf16.msra.mxu0 %v1732
    %1771 = vmatmul.bf16.gmra.mxu0 %v1748
    %v1772 = vpop.f32.mrf.mxu0
    %v1773 = vadd.f32 0.0, %v1772
    %v1774 = vpop.f32.mrf.mxu0
    %1775 = vdwg.mxu0
    %v1776 = vadd.f32 %v179, %v1760
    %v1777 = vadd.f32 %v208, %v1773
    %v1778 = vxor.u32 %v1776, 2147483648
    %v1779 = vmul.f32 %v1778, 1.442695
    %v1780 = vpow.pop %v1779
    %v1781 = vadd.f32 %v1780, 1.0
    %v1782 = vrcp.pop %v1781
    %v1783 = vmul.f32 %v1781, %v1782
    %v1784 = vsub.f32 1.0, %v1783
    %v1785 = vmul.f32 %v1782, %v1784
    %v1786 = vadd.f32 %v1782, %v1785
    %vm1787 = vweird.f32 %v1781
    %vm1788 = vweird.f32 %v1782
    %vm1789 = vmor %vm1787, %vm1788
    %v1790 = vsel %vm1789, %v1782, %v1786
    %v1791 = vand.u32 2147483647, %v1781
    %vm1792 = vcmp.eq.f32.partialorder %v1791, 8.507059e+37
    %v1793 = vand.u32 %v1781, 2147483648
    %v1794 = vor.u32 1.1754944e-38, %v1793
    %v1795 = vsel %vm1792, %v1794, %v1790
    %v1796 = vmul.f32 1.0, %v1795
    %v1797 = vtanh.pop %v1777
    %v1798 = vxor.u32 %v1777, 2147483648
    %v1799 = vmul.f32 %v1798, 1.442695
    %v1800 = vpow.pop %v1799
    %v1801 = vadd.f32 %v1800, 1.0
    %v1802 = vrcp.pop %v1801
    %v1803 = vmul.f32 %v1801, %v1802
    %v1804 = vsub.f32 1.0, %v1803
    %v1805 = vmul.f32 %v1802, %v1804
    %v1806 = vadd.f32 %v1802, %v1805
    %vm1807 = vweird.f32 %v1801
    %vm1808 = vweird.f32 %v1802
    %vm1809 = vmor %vm1807, %vm1808
    %v1810 = vsel %vm1809, %v1802, %v1806
    %v1811 = vand.u32 2147483647, %v1801
    %vm1812 = vcmp.eq.f32.partialorder %v1811, 8.507059e+37
    %v1813 = vand.u32 %v1801, 2147483648
    %v1814 = vor.u32 1.1754944e-38, %v1813
    %v1815 = vsel %vm1812, %v1814, %v1810
    %v1816 = vmul.f32 1.0, %v1815
    %v1817 = vmul.f32 %v1796, %v1476
    %v1818 = vmul.f32 %v1796, %v1797
    %1820 = vrot.lane.b32.xlu0 %v1818, 64
    %v1821 = vpop.permute.xlu0 %1820
    %v1823 = vadd.f32 %v1817, %v1821
    %v1824 = vtanh.pop %v1823
    %v1825 = vmul.f32 %v1816, %v1824
    %v1826 = vld [vmem:[%s6] sm:$0xff]
    %v1827 = vld [vmem:[%s6 + $0x8] sm:$0xff]
    %v1828 = vld [vmem:[%s6 + $0x10] sm:$0xff]
    %v1829 = vld [vmem:[%s6 + $0x18] sm:$0xff]
    %v1830 = vld [vmem:[%s6 + $0x20] sm:$0xff]
    %v1831 = vld [vmem:[%s6 + $0x28] sm:$0xff]
    %v1832 = vld [vmem:[%s6 + $0x30] sm:$0xff]
    %v1833 = vld [vmem:[%s6 + $0x38] sm:$0xff]
    %v1834 = vld [vmem:[%s8] sm:$0x3]
    %v1836 = vperm.slane %v1834, 0
    %v1837 = vperm.slane %v1834, 1
    %v1848 = vunpack.c.l.b16 %v1826
    %v1849 = vunpack.c.h.b16 %v1826
    %v1850 = vunpack.c.l.b16 %v1827
    %v1851 = vunpack.c.h.b16 %v1827
    %v1852 = vunpack.c.l.b16 %v1828
    %v1853 = vunpack.c.h.b16 %v1828
    %v1854 = vunpack.c.l.b16 %v1829
    %v1855 = vunpack.c.h.b16 %v1829
    %v1856 = vunpack.c.l.b16 %v1830
    %v1857 = vunpack.c.h.b16 %v1830
    %v1858 = vunpack.c.l.b16 %v1831
    %v1859 = vunpack.c.h.b16 %v1831
    %v1860 = vunpack.c.l.b16 %v1832
    %v1861 = vunpack.c.h.b16 %v1832
    %v1862 = vunpack.c.l.b16 %v1833
    %v1863 = vunpack.c.h.b16 %v1833
    %v1864 = vpack.c.b16 %v1850, %v1848
    %v1865 = vpack.c.b16 %v1851, %v1849
    %v1866 = vpack.c.b16 %v1854, %v1852
    %v1867 = vpack.c.b16 %v1855, %v1853
    %v1868 = vpack.c.b16 %v1858, %v1856
    %v1869 = vpack.c.b16 %v1859, %v1857
    %v1870 = vpack.c.b16 %v1862, %v1860
    %v1871 = vpack.c.b16 %v1863, %v1861
    %1880 = vmatpush.bf16.msra.mxu0 0
    %1881 = vmatpush.bf16.msra.mxu0 0
    %1882 = vmatpush.bf16.msra.mxu0 0
    %1883 = vmatpush.bf16.msra.mxu0 0
    %1884 = vmatpush.bf16.msra.mxu0 %v1870
    %1885 = vmatpush.bf16.msra.mxu0 %v1868
    %1886 = vmatpush.bf16.msra.mxu0 %v1866
    %1887 = vmatpush.bf16.msra.mxu0 %v1864
    %1888 = vmatmul.bf16.gmra.mxu0 %v1748
    %v1889 = vpop.f32.mrf.mxu0
    %v1890 = vadd.f32 %v1836, %v1889
    %v1891 = vpop.f32.mrf.mxu0
    %1892 = vdwg.mxu0
    %1893 = vmatpush.bf16.msra.mxu0 0
    %1894 = vmatpush.bf16.msra.mxu0 0
    %1895 = vmatpush.bf16.msra.mxu0 0
    %1896 = vmatpush.bf16.msra.mxu0 0
    %1897 = vmatpush.bf16.msra.mxu0 %v1871
    %1898 = vmatpush.bf16.msra.mxu0 %v1869
    %1899 = vmatpush.bf16.msra.mxu0 %v1867
    %1900 = vmatpush.bf16.msra.mxu0 %v1865
    %1901 = vmatmul.bf16.gmra.mxu0 %v1748
    %v1902 = vpop.f32.mrf.mxu0
    %v1903 = vadd.f32 %v1837, %v1902
    %v1904 = vpop.f32.mrf.mxu0
    %1905 = vdwg.mxu0
    %v1906 = vpack.c.bf16 %v1689, %v1689
    %v1907 = vld [vmem:[#allocation3] sm:$0xff]
    %v1908 = vld [vmem:[#allocation3 + $0x8] sm:$0xff]
    %v1909 = vld [vmem:[#allocation3 + $0x10] sm:$0xff]
    %v1910 = vld [vmem:[#allocation3 + $0x18] sm:$0xff]
    %v1911 = vld [vmem:[#allocation3 + $0x20] sm:$0xff]
    %v1912 = vld [vmem:[#allocation3 + $0x28] sm:$0xff]
    %v1913 = vld [vmem:[#allocation3 + $0x30] sm:$0xff]
    %v1914 = vld [vmem:[#allocation3 + $0x38] sm:$0xff]
    %1916 = vrot.lane.b32.xlu0 %v1906, 64
    %v1917 = vpop.permute.xlu0 %1916
    %v1926 = vunpack.c.l.b16 %v1907
    %v1927 = vunpack.c.h.b16 %v1907
    %v1928 = vunpack.c.l.b16 %v1908
    %v1929 = vunpack.c.h.b16 %v1908
    %v1930 = vunpack.c.l.b16 %v1909
    %v1931 = vunpack.c.h.b16 %v1909
    %v1932 = vunpack.c.l.b16 %v1910
    %v1933 = vunpack.c.h.b16 %v1910
    %v1934 = vunpack.c.l.b16 %v1911
    %v1935 = vunpack.c.h.b16 %v1911
    %v1936 = vunpack.c.l.b16 %v1912
    %v1937 = vunpack.c.h.b16 %v1912
    %v1938 = vunpack.c.l.b16 %v1913
    %v1939 = vunpack.c.h.b16 %v1913
    %v1940 = vunpack.c.l.b16 %v1914
    %v1941 = vunpack.c.h.b16 %v1914
    %v1942 = vpack.c.b16 %v1928, %v1926
    %v1943 = vpack.c.b16 %v1929, %v1927
    %v1944 = vpack.c.b16 %v1932, %v1930
    %v1945 = vpack.c.b16 %v1933, %v1931
    %v1946 = vpack.c.b16 %v1936, %v1934
    %v1947 = vpack.c.b16 %v1937, %v1935
    %v1948 = vpack.c.b16 %v1940, %v1938
    %v1949 = vpack.c.b16 %v1941, %v1939
    %v1959 = vsel %vm270, %v1917, 0
    %1961 = vmatpush.bf16.msra.mxu0 0
    %1962 = vmatpush.bf16.msra.mxu0 0
    %1963 = vmatpush.bf16.msra.mxu0 0
    %1964 = vmatpush.bf16.msra.mxu0 0
    %1965 = vmatpush.bf16.msra.mxu0 %v1948
    %1966 = vmatpush.bf16.msra.mxu0 %v1946
    %1967 = vmatpush.bf16.msra.mxu0 %v1944
    %1968 = vmatpush.bf16.msra.mxu0 %v1942
    %1969 = vmatmul.bf16.gmra.mxu0 %v1959
    %v1970 = vpop.f32.mrf.mxu0
    %v1971 = vadd.f32 0.0, %v1970
    %v1972 = vpop.f32.mrf.mxu0
    %1973 = vdwg.mxu0
    %1974 = vmatpush.bf16.msra.mxu0 0
    %1975 = vmatpush.bf16.msra.mxu0 0
    %1976 = vmatpush.bf16.msra.mxu0 0
    %1977 = vmatpush.bf16.msra.mxu0 0
    %1978 = vmatpush.bf16.msra.mxu0 %v1949
    %1979 = vmatpush.bf16.msra.mxu0 %v1947
    %1980 = vmatpush.bf16.msra.mxu0 %v1945
    %1981 = vmatpush.bf16.msra.mxu0 %v1943
    %1982 = vmatmul.bf16.gmra.mxu0 %v1959
    %v1983 = vpop.f32.mrf.mxu0
    %v1984 = vadd.f32 0.0, %v1983
    %v1985 = vpop.f32.mrf.mxu0
    %1986 = vdwg.mxu0
    %v1987 = vadd.f32 %v1890, %v1971
    %v1988 = vadd.f32 %v1903, %v1984
    %v1989 = vxor.u32 %v1987, 2147483648
    %v1990 = vmul.f32 %v1989, 1.442695
    %v1991 = vpow.pop %v1990
    %v1992 = vadd.f32 %v1991, 1.0
    %v1993 = vrcp.pop %v1992
    %v1994 = vmul.f32 %v1992, %v1993
    %v1995 = vsub.f32 1.0, %v1994
    %v1996 = vmul.f32 %v1993, %v1995
    %v1997 = vadd.f32 %v1993, %v1996
    %vm1998 = vweird.f32 %v1992
    %vm1999 = vweird.f32 %v1993
    %vm2000 = vmor %vm1998, %vm1999
    %v2001 = vsel %vm2000, %v1993, %v1997
    %v2002 = vand.u32 2147483647, %v1992
    %vm2003 = vcmp.eq.f32.partialorder %v2002, 8.507059e+37
    %v2004 = vand.u32 %v1992, 2147483648
    %v2005 = vor.u32 1.1754944e-38, %v2004
    %v2006 = vsel %vm2003, %v2005, %v2001
    %v2007 = vmul.f32 1.0, %v2006
    %v2008 = vtanh.pop %v1988
    %v2009 = vxor.u32 %v1988, 2147483648
    %v2010 = vmul.f32 %v2009, 1.442695
    %v2011 = vpow.pop %v2010
    %v2012 = vadd.f32 %v2011, 1.0
    %v2013 = vrcp.pop %v2012
    %v2014 = vmul.f32 %v2012, %v2013
    %v2015 = vsub.f32 1.0, %v2014
    %v2016 = vmul.f32 %v2013, %v2015
    %v2017 = vadd.f32 %v2013, %v2016
    %vm2018 = vweird.f32 %v2012
    %vm2019 = vweird.f32 %v2013
    %vm2020 = vmor %vm2018, %vm2019
    %v2021 = vsel %vm2020, %v2013, %v2017
    %v2022 = vand.u32 2147483647, %v2012
    %vm2023 = vcmp.eq.f32.partialorder %v2022, 8.507059e+37
    %v2024 = vand.u32 %v2012, 2147483648
    %v2025 = vor.u32 1.1754944e-38, %v2024
    %v2026 = vsel %vm2023, %v2025, %v2021
    %v2027 = vmul.f32 1.0, %v2026
    %v2028 = vmul.f32 %v2007, %v1687
    %v2029 = vmul.f32 %v2007, %v2008
    %2031 = vrot.lane.b32.xlu0 %v2029, 64
    %v2032 = vpop.permute.xlu0 %2031
    %v2034 = vadd.f32 %v2028, %v2032
    %v2035 = vtanh.pop %v2034
    %v2036 = vmul.f32 %v2027, %v2035
    %2038 = vrot.lane.b32.xlu0 %v2036, 64
    %v2039 = vpop.permute.xlu0 %2038
    %2041 = vst.msk [vmem:[#allocation2 + $0x20] sm:$0xff] %vm270, %v2039
    %v2042 = vpack.c.bf16 %v1825, %v1825
    %v2043 = vld [vmem:[%s4] sm:$0xff]
    %v2044 = vld [vmem:[%s4 + $0x8] sm:$0xff]
    %v2045 = vld [vmem:[%s4 + $0x10] sm:$0xff]
    %v2046 = vld [vmem:[%s4 + $0x18] sm:$0xff]
    %v2047 = vld [vmem:[%s4 + $0x20] sm:$0xff]
    %v2048 = vld [vmem:[%s4 + $0x28] sm:$0xff]
    %v2049 = vld [vmem:[%s4 + $0x30] sm:$0xff]
    %v2050 = vld [vmem:[%s4 + $0x38] sm:$0xff]
    %2052 = vrot.lane.b32.xlu0 %v2042, 64
    %v2053 = vpop.permute.xlu0 %2052
    %v2062 = vunpack.c.l.b16 %v2043
    %v2063 = vunpack.c.h.b16 %v2043
    %v2064 = vunpack.c.l.b16 %v2044
    %v2065 = vunpack.c.h.b16 %v2044
    %v2066 = vunpack.c.l.b16 %v2045
    %v2067 = vunpack.c.h.b16 %v2045
    %v2068 = vunpack.c.l.b16 %v2046
    %v2069 = vunpack.c.h.b16 %v2046
    %v2070 = vunpack.c.l.b16 %v2047
    %v2071 = vunpack.c.h.b16 %v2047
    %v2072 = vunpack.c.l.b16 %v2048
    %v2073 = vunpack.c.h.b16 %v2048
    %v2074 = vunpack.c.l.b16 %v2049
    %v2075 = vunpack.c.h.b16 %v2049
    %v2076 = vunpack.c.l.b16 %v2050
    %v2077 = vunpack.c.h.b16 %v2050
    %v2078 = vpack.c.b16 %v2064, %v2062
    %v2079 = vpack.c.b16 %v2065, %v2063
    %v2080 = vpack.c.b16 %v2068, %v2066
    %v2081 = vpack.c.b16 %v2069, %v2067
    %v2082 = vpack.c.b16 %v2072, %v2070
    %v2083 = vpack.c.b16 %v2073, %v2071
    %v2084 = vpack.c.b16 %v2076, %v2074
    %v2085 = vpack.c.b16 %v2077, %v2075
    %v2095 = vsel %vm270, %v2053, 0
    %2097 = vmatpush.bf16.msra.mxu0 0
    %2098 = vmatpush.bf16.msra.mxu0 0
    %2099 = vmatpush.bf16.msra.mxu0 0
    %2100 = vmatpush.bf16.msra.mxu0 0
    %2101 = vmatpush.bf16.msra.mxu0 %v2084
    %2102 = vmatpush.bf16.msra.mxu0 %v2082
    %2103 = vmatpush.bf16.msra.mxu0 %v2080
    %2104 = vmatpush.bf16.msra.mxu0 %v2078
    %2105 = vmatmul.bf16.gmra.mxu0 %v2095
    %v2106 = vpop.f32.mrf.mxu0
    %v2107 = vadd.f32 0.0, %v2106
    %v2108 = vpop.f32.mrf.mxu0
    %2109 = vdwg.mxu0
    %2110 = vmatpush.bf16.msra.mxu0 0
    %2111 = vmatpush.bf16.msra.mxu0 0
    %2112 = vmatpush.bf16.msra.mxu0 0
    %2113 = vmatpush.bf16.msra.mxu0 0
    %2114 = vmatpush.bf16.msra.mxu0 %v2085
    %2115 = vmatpush.bf16.msra.mxu0 %v2083
    %2116 = vmatpush.bf16.msra.mxu0 %v2081
    %2117 = vmatpush.bf16.msra.mxu0 %v2079
    %2118 = vmatmul.bf16.gmra.mxu0 %v2095
    %v2119 = vpop.f32.mrf.mxu0
    %v2120 = vadd.f32 0.0, %v2119
    %v2121 = vpop.f32.mrf.mxu0
    %2122 = vdwg.mxu0
    %v2123 = vadd.f32 %v182, %v2107
    %v2124 = vadd.f32 %v211, %v2120
    %v2125 = vxor.u32 %v2123, 2147483648
    %v2126 = vmul.f32 %v2125, 1.442695
    %v2127 = vpow.pop %v2126
    %v2128 = vadd.f32 %v2127, 1.0
    %v2129 = vrcp.pop %v2128
    %v2130 = vmul.f32 %v2128, %v2129
    %v2131 = vsub.f32 1.0, %v2130
    %v2132 = vmul.f32 %v2129, %v2131
    %v2133 = vadd.f32 %v2129, %v2132
    %vm2134 = vweird.f32 %v2128
    %vm2135 = vweird.f32 %v2129
    %vm2136 = vmor %vm2134, %vm2135
    %v2137 = vsel %vm2136, %v2129, %v2133
    %v2138 = vand.u32 2147483647, %v2128
    %vm2139 = vcmp.eq.f32.partialorder %v2138, 8.507059e+37
    %v2140 = vand.u32 %v2128, 2147483648
    %v2141 = vor.u32 1.1754944e-38, %v2140
    %v2142 = vsel %vm2139, %v2141, %v2137
    %v2143 = vmul.f32 1.0, %v2142
    %v2144 = vtanh.pop %v2124
    %v2145 = vxor.u32 %v2124, 2147483648
    %v2146 = vmul.f32 %v2145, 1.442695
    %v2147 = vpow.pop %v2146
    %v2148 = vadd.f32 %v2147, 1.0
    %v2149 = vrcp.pop %v2148
    %v2150 = vmul.f32 %v2148, %v2149
    %v2151 = vsub.f32 1.0, %v2150
    %v2152 = vmul.f32 %v2149, %v2151
    %v2153 = vadd.f32 %v2149, %v2152
    %vm2154 = vweird.f32 %v2148
    %vm2155 = vweird.f32 %v2149
    %vm2156 = vmor %vm2154, %vm2155
    %v2157 = vsel %vm2156, %v2149, %v2153
    %v2158 = vand.u32 2147483647, %v2148
    %vm2159 = vcmp.eq.f32.partialorder %v2158, 8.507059e+37
    %v2160 = vand.u32 %v2148, 2147483648
    %v2161 = vor.u32 1.1754944e-38, %v2160
    %v2162 = vsel %vm2159, %v2161, %v2157
    %v2163 = vmul.f32 1.0, %v2162
    %v2164 = vmul.f32 %v2143, %v1823
    %v2165 = vmul.f32 %v2143, %v2144
    %2167 = vrot.lane.b32.xlu0 %v2165, 64
    %v2168 = vpop.permute.xlu0 %2167
    %v2170 = vadd.f32 %v2164, %v2168
    %v2171 = vtanh.pop %v2170
    %v2172 = vmul.f32 %v2163, %v2171
    %v2173 = vld [vmem:[%s6] sm:$0xff]
    %v2174 = vld [vmem:[%s6 + $0x8] sm:$0xff]
    %v2175 = vld [vmem:[%s6 + $0x10] sm:$0xff]
    %v2176 = vld [vmem:[%s6 + $0x18] sm:$0xff]
    %v2177 = vld [vmem:[%s6 + $0x20] sm:$0xff]
    %v2178 = vld [vmem:[%s6 + $0x28] sm:$0xff]
    %v2179 = vld [vmem:[%s6 + $0x30] sm:$0xff]
    %v2180 = vld [vmem:[%s6 + $0x38] sm:$0xff]
    %v2181 = vld [vmem:[%s8] sm:$0x3]
    %v2183 = vperm.slane %v2181, 0
    %v2184 = vperm.slane %v2181, 1
    %v2195 = vunpack.c.l.b16 %v2173
    %v2196 = vunpack.c.h.b16 %v2173
    %v2197 = vunpack.c.l.b16 %v2174
    %v2198 = vunpack.c.h.b16 %v2174
    %v2199 = vunpack.c.l.b16 %v2175
    %v2200 = vunpack.c.h.b16 %v2175
    %v2201 = vunpack.c.l.b16 %v2176
    %v2202 = vunpack.c.h.b16 %v2176
    %v2203 = vunpack.c.l.b16 %v2177
    %v2204 = vunpack.c.h.b16 %v2177
    %v2205 = vunpack.c.l.b16 %v2178
    %v2206 = vunpack.c.h.b16 %v2178
    %v2207 = vunpack.c.l.b16 %v2179
    %v2208 = vunpack.c.h.b16 %v2179
    %v2209 = vunpack.c.l.b16 %v2180
    %v2210 = vunpack.c.h.b16 %v2180
    %v2211 = vpack.c.b16 %v2197, %v2195
    %v2212 = vpack.c.b16 %v2198, %v2196
    %v2213 = vpack.c.b16 %v2201, %v2199
    %v2214 = vpack.c.b16 %v2202, %v2200
    %v2215 = vpack.c.b16 %v2205, %v2203
    %v2216 = vpack.c.b16 %v2206, %v2204
    %v2217 = vpack.c.b16 %v2209, %v2207
    %v2218 = vpack.c.b16 %v2210, %v2208
    %2227 = vmatpush.bf16.msra.mxu0 0
    %2228 = vmatpush.bf16.msra.mxu0 0
    %2229 = vmatpush.bf16.msra.mxu0 0
    %2230 = vmatpush.bf16.msra.mxu0 0
    %2231 = vmatpush.bf16.msra.mxu0 %v2217
    %2232 = vmatpush.bf16.msra.mxu0 %v2215
    %2233 = vmatpush.bf16.msra.mxu0 %v2213
    %2234 = vmatpush.bf16.msra.mxu0 %v2211
    %2235 = vmatmul.bf16.gmra.mxu0 %v2095
    %v2236 = vpop.f32.mrf.mxu0
    %v2237 = vadd.f32 %v2183, %v2236
    %v2238 = vpop.f32.mrf.mxu0
    %2239 = vdwg.mxu0
    %2240 = vmatpush.bf16.msra.mxu0 0
    %2241 = vmatpush.bf16.msra.mxu0 0
    %2242 = vmatpush.bf16.msra.mxu0 0
    %2243 = vmatpush.bf16.msra.mxu0 0
    %2244 = vmatpush.bf16.msra.mxu0 %v2218
    %2245 = vmatpush.bf16.msra.mxu0 %v2216
    %2246 = vmatpush.bf16.msra.mxu0 %v2214
    %2247 = vmatpush.bf16.msra.mxu0 %v2212
    %2248 = vmatmul.bf16.gmra.mxu0 %v2095
    %v2249 = vpop.f32.mrf.mxu0
    %v2250 = vadd.f32 %v2184, %v2249
    %v2251 = vpop.f32.mrf.mxu0
    %2252 = vdwg.mxu0
    %v2253 = vpack.c.bf16 %v2036, %v2036
    %v2254 = vld [vmem:[#allocation3] sm:$0xff]
    %v2255 = vld [vmem:[#allocation3 + $0x8] sm:$0xff]
    %v2256 = vld [vmem:[#allocation3 + $0x10] sm:$0xff]
    %v2257 = vld [vmem:[#allocation3 + $0x18] sm:$0xff]
    %v2258 = vld [vmem:[#allocation3 + $0x20] sm:$0xff]
    %v2259 = vld [vmem:[#allocation3 + $0x28] sm:$0xff]
    %v2260 = vld [vmem:[#allocation3 + $0x30] sm:$0xff]
    %v2261 = vld [vmem:[#allocation3 + $0x38] sm:$0xff]
    %2263 = vrot.lane.b32.xlu0 %v2253, 64
    %v2264 = vpop.permute.xlu0 %2263
    %v2273 = vunpack.c.l.b16 %v2254
    %v2274 = vunpack.c.h.b16 %v2254
    %v2275 = vunpack.c.l.b16 %v2255
    %v2276 = vunpack.c.h.b16 %v2255
    %v2277 = vunpack.c.l.b16 %v2256
    %v2278 = vunpack.c.h.b16 %v2256
    %v2279 = vunpack.c.l.b16 %v2257
    %v2280 = vunpack.c.h.b16 %v2257
    %v2281 = vunpack.c.l.b16 %v2258
    %v2282 = vunpack.c.h.b16 %v2258
    %v2283 = vunpack.c.l.b16 %v2259
    %v2284 = vunpack.c.h.b16 %v2259
    %v2285 = vunpack.c.l.b16 %v2260
    %v2286 = vunpack.c.h.b16 %v2260
    %v2287 = vunpack.c.l.b16 %v2261
    %v2288 = vunpack.c.h.b16 %v2261
    %v2289 = vpack.c.b16 %v2275, %v2273
    %v2290 = vpack.c.b16 %v2276, %v2274
    %v2291 = vpack.c.b16 %v2279, %v2277
    %v2292 = vpack.c.b16 %v2280, %v2278
    %v2293 = vpack.c.b16 %v2283, %v2281
    %v2294 = vpack.c.b16 %v2284, %v2282
    %v2295 = vpack.c.b16 %v2287, %v2285
    %v2296 = vpack.c.b16 %v2288, %v2286
    %v2306 = vsel %vm270, %v2264, 0
    %2308 = vmatpush.bf16.msra.mxu0 0
    %2309 = vmatpush.bf16.msra.mxu0 0
    %2310 = vmatpush.bf16.msra.mxu0 0
    %2311 = vmatpush.bf16.msra.mxu0 0
    %2312 = vmatpush.bf16.msra.mxu0 %v2295
    %2313 = vmatpush.bf16.msra.mxu0 %v2293
    %2314 = vmatpush.bf16.msra.mxu0 %v2291
    %2315 = vmatpush.bf16.msra.mxu0 %v2289
    %2316 = vmatmul.bf16.gmra.mxu0 %v2306
    %v2317 = vpop.f32.mrf.mxu0
    %v2318 = vadd.f32 0.0, %v2317
    %v2319 = vpop.f32.mrf.mxu0
    %2320 = vdwg.mxu0
    %2321 = vmatpush.bf16.msra.mxu0 0
    %2322 = vmatpush.bf16.msra.mxu0 0
    %2323 = vmatpush.bf16.msra.mxu0 0
    %2324 = vmatpush.bf16.msra.mxu0 0
    %2325 = vmatpush.bf16.msra.mxu0 %v2296
    %2326 = vmatpush.bf16.msra.mxu0 %v2294
    %2327 = vmatpush.bf16.msra.mxu0 %v2292
    %2328 = vmatpush.bf16.msra.mxu0 %v2290
    %2329 = vmatmul.bf16.gmra.mxu0 %v2306
    %v2330 = vpop.f32.mrf.mxu0
    %v2331 = vadd.f32 0.0, %v2330
    %v2332 = vpop.f32.mrf.mxu0
    %2333 = vdwg.mxu0
    %v2334 = vadd.f32 %v2237, %v2318
    %v2335 = vadd.f32 %v2250, %v2331
    %v2336 = vxor.u32 %v2334, 2147483648
    %v2337 = vmul.f32 %v2336, 1.442695
    %v2338 = vpow.pop %v2337
    %v2339 = vadd.f32 %v2338, 1.0
    %v2340 = vrcp.pop %v2339
    %v2341 = vmul.f32 %v2339, %v2340
    %v2342 = vsub.f32 1.0, %v2341
    %v2343 = vmul.f32 %v2340, %v2342
    %v2344 = vadd.f32 %v2340, %v2343
    %vm2345 = vweird.f32 %v2339
    %vm2346 = vweird.f32 %v2340
    %vm2347 = vmor %vm2345, %vm2346
    %v2348 = vsel %vm2347, %v2340, %v2344
    %v2349 = vand.u32 2147483647, %v2339
    %vm2350 = vcmp.eq.f32.partialorder %v2349, 8.507059e+37
    %v2351 = vand.u32 %v2339, 2147483648
    %v2352 = vor.u32 1.1754944e-38, %v2351
    %v2353 = vsel %vm2350, %v2352, %v2348
    %v2354 = vmul.f32 1.0, %v2353
    %v2355 = vtanh.pop %v2335
    %v2356 = vxor.u32 %v2335, 2147483648
    %v2357 = vmul.f32 %v2356, 1.442695
    %v2358 = vpow.pop %v2357
    %v2359 = vadd.f32 %v2358, 1.0
    %v2360 = vrcp.pop %v2359
    %v2361 = vmul.f32 %v2359, %v2360
    %v2362 = vsub.f32 1.0, %v2361
    %v2363 = vmul.f32 %v2360, %v2362
    %v2364 = vadd.f32 %v2360, %v2363
    %vm2365 = vweird.f32 %v2359
    %vm2366 = vweird.f32 %v2360
    %vm2367 = vmor %vm2365, %vm2366
    %v2368 = vsel %vm2367, %v2360, %v2364
    %v2369 = vand.u32 2147483647, %v2359
    %vm2370 = vcmp.eq.f32.partialorder %v2369, 8.507059e+37
    %v2371 = vand.u32 %v2359, 2147483648
    %v2372 = vor.u32 1.1754944e-38, %v2371
    %v2373 = vsel %vm2370, %v2372, %v2368
    %v2374 = vmul.f32 1.0, %v2373
    %v2375 = vmul.f32 %v2354, %v2034
    %v2376 = vmul.f32 %v2354, %v2355
    %2378 = vrot.lane.b32.xlu0 %v2376, 64
    %v2379 = vpop.permute.xlu0 %2378
    %v2381 = vadd.f32 %v2375, %v2379
    %v2382 = vtanh.pop %v2381
    %v2383 = vmul.f32 %v2374, %v2382
    %2385 = vrot.lane.b32.xlu0 %v2383, 64
    %v2386 = vpop.permute.xlu0 %2385
    %2388 = vst.msk [vmem:[#allocation2 + $0x28] sm:$0xff] %vm270, %v2386
    %v2389 = vpack.c.bf16 %v2172, %v2172
    %v2390 = vld [vmem:[%s4] sm:$0xff]
    %v2391 = vld [vmem:[%s4 + $0x8] sm:$0xff]
    %v2392 = vld [vmem:[%s4 + $0x10] sm:$0xff]
    %v2393 = vld [vmem:[%s4 + $0x18] sm:$0xff]
    %v2394 = vld [vmem:[%s4 + $0x20] sm:$0xff]
    %v2395 = vld [vmem:[%s4 + $0x28] sm:$0xff]
    %v2396 = vld [vmem:[%s4 + $0x30] sm:$0xff]
    %v2397 = vld [vmem:[%s4 + $0x38] sm:$0xff]
    %2399 = vrot.lane.b32.xlu0 %v2389, 64
    %v2400 = vpop.permute.xlu0 %2399
    %v2409 = vunpack.c.l.b16 %v2390
    %v2410 = vunpack.c.h.b16 %v2390
    %v2411 = vunpack.c.l.b16 %v2391
    %v2412 = vunpack.c.h.b16 %v2391
    %v2413 = vunpack.c.l.b16 %v2392
    %v2414 = vunpack.c.h.b16 %v2392
    %v2415 = vunpack.c.l.b16 %v2393
    %v2416 = vunpack.c.h.b16 %v2393
    %v2417 = vunpack.c.l.b16 %v2394
    %v2418 = vunpack.c.h.b16 %v2394
    %v2419 = vunpack.c.l.b16 %v2395
    %v2420 = vunpack.c.h.b16 %v2395
    %v2421 = vunpack.c.l.b16 %v2396
    %v2422 = vunpack.c.h.b16 %v2396
    %v2423 = vunpack.c.l.b16 %v2397
    %v2424 = vunpack.c.h.b16 %v2397
    %v2425 = vpack.c.b16 %v2411, %v2409
    %v2426 = vpack.c.b16 %v2412, %v2410
    %v2427 = vpack.c.b16 %v2415, %v2413
    %v2428 = vpack.c.b16 %v2416, %v2414
    %v2429 = vpack.c.b16 %v2419, %v2417
    %v2430 = vpack.c.b16 %v2420, %v2418
    %v2431 = vpack.c.b16 %v2423, %v2421
    %v2432 = vpack.c.b16 %v2424, %v2422
    %v2442 = vsel %vm270, %v2400, 0
    %2444 = vmatpush.bf16.msra.mxu0 0
    %2445 = vmatpush.bf16.msra.mxu0 0
    %2446 = vmatpush.bf16.msra.mxu0 0
    %2447 = vmatpush.bf16.msra.mxu0 0
    %2448 = vmatpush.bf16.msra.mxu0 %v2431
    %2449 = vmatpush.bf16.msra.mxu0 %v2429
    %2450 = vmatpush.bf16.msra.mxu0 %v2427
    %2451 = vmatpush.bf16.msra.mxu0 %v2425
    %2452 = vmatmul.bf16.gmra.mxu0 %v2442
    %v2453 = vpop.f32.mrf.mxu0
    %v2454 = vadd.f32 0.0, %v2453
    %v2455 = vpop.f32.mrf.mxu0
    %2456 = vdwg.mxu0
    %2457 = vmatpush.bf16.msra.mxu0 0
    %2458 = vmatpush.bf16.msra.mxu0 0
    %2459 = vmatpush.bf16.msra.mxu0 0
    %2460 = vmatpush.bf16.msra.mxu0 0
    %2461 = vmatpush.bf16.msra.mxu0 %v2432
    %2462 = vmatpush.bf16.msra.mxu0 %v2430
    %2463 = vmatpush.bf16.msra.mxu0 %v2428
    %2464 = vmatpush.bf16.msra.mxu0 %v2426
    %2465 = vmatmul.bf16.gmra.mxu0 %v2442
    %v2466 = vpop.f32.mrf.mxu0
    %v2467 = vadd.f32 0.0, %v2466
    %v2468 = vpop.f32.mrf.mxu0
    %2469 = vdwg.mxu0
    %v2470 = vadd.f32 %v184, %v2454
    %v2471 = vadd.f32 %v213, %v2467
    %v2472 = vxor.u32 %v2470, 2147483648
    %v2473 = vmul.f32 %v2472, 1.442695
    %v2474 = vpow.pop %v2473
    %v2475 = vadd.f32 %v2474, 1.0
    %v2476 = vrcp.pop %v2475
    %v2477 = vmul.f32 %v2475, %v2476
    %v2478 = vsub.f32 1.0, %v2477
    %v2479 = vmul.f32 %v2476, %v2478
    %v2480 = vadd.f32 %v2476, %v2479
    %vm2481 = vweird.f32 %v2475
    %vm2482 = vweird.f32 %v2476
    %vm2483 = vmor %vm2481, %vm2482
    %v2484 = vsel %vm2483, %v2476, %v2480
    %v2485 = vand.u32 2147483647, %v2475
    %vm2486 = vcmp.eq.f32.partialorder %v2485, 8.507059e+37
    %v2487 = vand.u32 %v2475, 2147483648
    %v2488 = vor.u32 1.1754944e-38, %v2487
    %v2489 = vsel %vm2486, %v2488, %v2484
    %v2490 = vmul.f32 1.0, %v2489
    %v2491 = vtanh.pop %v2471
    %v2492 = vxor.u32 %v2471, 2147483648
    %v2493 = vmul.f32 %v2492, 1.442695
    %v2494 = vpow.pop %v2493
    %v2495 = vadd.f32 %v2494, 1.0
    %v2496 = vrcp.pop %v2495
    %v2497 = vmul.f32 %v2495, %v2496
    %v2498 = vsub.f32 1.0, %v2497
    %v2499 = vmul.f32 %v2496, %v2498
    %v2500 = vadd.f32 %v2496, %v2499
    %vm2501 = vweird.f32 %v2495
    %vm2502 = vweird.f32 %v2496
    %vm2503 = vmor %vm2501, %vm2502
    %v2504 = vsel %vm2503, %v2496, %v2500
    %v2505 = vand.u32 2147483647, %v2495
    %vm2506 = vcmp.eq.f32.partialorder %v2505, 8.507059e+37
    %v2507 = vand.u32 %v2495, 2147483648
    %v2508 = vor.u32 1.1754944e-38, %v2507
    %v2509 = vsel %vm2506, %v2508, %v2504
    %v2510 = vmul.f32 1.0, %v2509
    %v2511 = vmul.f32 %v2490, %v2170
    %v2512 = vmul.f32 %v2490, %v2491
    %2514 = vrot.lane.b32.xlu0 %v2512, 64
    %v2515 = vpop.permute.xlu0 %2514
    %v2517 = vadd.f32 %v2511, %v2515
    %v2518 = vtanh.pop %v2517
    %v2519 = vmul.f32 %v2510, %v2518
    %v2520 = vld [vmem:[%s6] sm:$0xff]
    %v2521 = vld [vmem:[%s6 + $0x8] sm:$0xff]
    %v2522 = vld [vmem:[%s6 + $0x10] sm:$0xff]
    %v2523 = vld [vmem:[%s6 + $0x18] sm:$0xff]
    %v2524 = vld [vmem:[%s6 + $0x20] sm:$0xff]
    %v2525 = vld [vmem:[%s6 + $0x28] sm:$0xff]
    %v2526 = vld [vmem:[%s6 + $0x30] sm:$0xff]
    %v2527 = vld [vmem:[%s6 + $0x38] sm:$0xff]
    %v2528 = vld [vmem:[%s8] sm:$0x3]
    %v2530 = vperm.slane %v2528, 0
    %v2531 = vperm.slane %v2528, 1
    %v2542 = vunpack.c.l.b16 %v2520
    %v2543 = vunpack.c.h.b16 %v2520
    %v2544 = vunpack.c.l.b16 %v2521
    %v2545 = vunpack.c.h.b16 %v2521
    %v2546 = vunpack.c.l.b16 %v2522
    %v2547 = vunpack.c.h.b16 %v2522
    %v2548 = vunpack.c.l.b16 %v2523
    %v2549 = vunpack.c.h.b16 %v2523
    %v2550 = vunpack.c.l.b16 %v2524
    %v2551 = vunpack.c.h.b16 %v2524
    %v2552 = vunpack.c.l.b16 %v2525
    %v2553 = vunpack.c.h.b16 %v2525
    %v2554 = vunpack.c.l.b16 %v2526
    %v2555 = vunpack.c.h.b16 %v2526
    %v2556 = vunpack.c.l.b16 %v2527
    %v2557 = vunpack.c.h.b16 %v2527
    %v2558 = vpack.c.b16 %v2544, %v2542
    %v2559 = vpack.c.b16 %v2545, %v2543
    %v2560 = vpack.c.b16 %v2548, %v2546
    %v2561 = vpack.c.b16 %v2549, %v2547
    %v2562 = vpack.c.b16 %v2552, %v2550
    %v2563 = vpack.c.b16 %v2553, %v2551
    %v2564 = vpack.c.b16 %v2556, %v2554
    %v2565 = vpack.c.b16 %v2557, %v2555
    %2574 = vmatpush.bf16.msra.mxu0 0
    %2575 = vmatpush.bf16.msra.mxu0 0
    %2576 = vmatpush.bf16.msra.mxu0 0
    %2577 = vmatpush.bf16.msra.mxu0 0
    %2578 = vmatpush.bf16.msra.mxu0 %v2564
    %2579 = vmatpush.bf16.msra.mxu0 %v2562
    %2580 = vmatpush.bf16.msra.mxu0 %v2560
    %2581 = vmatpush.bf16.msra.mxu0 %v2558
    %2582 = vmatmul.bf16.gmra.mxu0 %v2442
    %v2583 = vpop.f32.mrf.mxu0
    %v2584 = vadd.f32 %v2530, %v2583
    %v2585 = vpop.f32.mrf.mxu0
    %2586 = vdwg.mxu0
    %2587 = vmatpush.bf16.msra.mxu0 0
    %2588 = vmatpush.bf16.msra.mxu0 0
    %2589 = vmatpush.bf16.msra.mxu0 0
    %2590 = vmatpush.bf16.msra.mxu0 0
    %2591 = vmatpush.bf16.msra.mxu0 %v2565
    %2592 = vmatpush.bf16.msra.mxu0 %v2563
    %2593 = vmatpush.bf16.msra.mxu0 %v2561
    %2594 = vmatpush.bf16.msra.mxu0 %v2559
    %2595 = vmatmul.bf16.gmra.mxu0 %v2442
    %v2596 = vpop.f32.mrf.mxu0
    %v2597 = vadd.f32 %v2531, %v2596
    %v2598 = vpop.f32.mrf.mxu0
    %2599 = vdwg.mxu0
    %v2600 = vpack.c.bf16 %v2383, %v2383
    %v2601 = vld [vmem:[#allocation3] sm:$0xff]
    %v2602 = vld [vmem:[#allocation3 + $0x8] sm:$0xff]
    %v2603 = vld [vmem:[#allocation3 + $0x10] sm:$0xff]
    %v2604 = vld [vmem:[#allocation3 + $0x18] sm:$0xff]
    %v2605 = vld [vmem:[#allocation3 + $0x20] sm:$0xff]
    %v2606 = vld [vmem:[#allocation3 + $0x28] sm:$0xff]
    %v2607 = vld [vmem:[#allocation3 + $0x30] sm:$0xff]
    %v2608 = vld [vmem:[#allocation3 + $0x38] sm:$0xff]
    %2610 = vrot.lane.b32.xlu0 %v2600, 64
    %v2611 = vpop.permute.xlu0 %2610
    %v2620 = vunpack.c.l.b16 %v2601
    %v2621 = vunpack.c.h.b16 %v2601
    %v2622 = vunpack.c.l.b16 %v2602
    %v2623 = vunpack.c.h.b16 %v2602
    %v2624 = vunpack.c.l.b16 %v2603
    %v2625 = vunpack.c.h.b16 %v2603
    %v2626 = vunpack.c.l.b16 %v2604
    %v2627 = vunpack.c.h.b16 %v2604
    %v2628 = vunpack.c.l.b16 %v2605
    %v2629 = vunpack.c.h.b16 %v2605
    %v2630 = vunpack.c.l.b16 %v2606
    %v2631 = vunpack.c.h.b16 %v2606
    %v2632 = vunpack.c.l.b16 %v2607
    %v2633 = vunpack.c.h.b16 %v2607
    %v2634 = vunpack.c.l.b16 %v2608
    %v2635 = vunpack.c.h.b16 %v2608
    %v2636 = vpack.c.b16 %v2622, %v2620
    %v2637 = vpack.c.b16 %v2623, %v2621
    %v2638 = vpack.c.b16 %v2626, %v2624
    %v2639 = vpack.c.b16 %v2627, %v2625
    %v2640 = vpack.c.b16 %v2630, %v2628
    %v2641 = vpack.c.b16 %v2631, %v2629
    %v2642 = vpack.c.b16 %v2634, %v2632
    %v2643 = vpack.c.b16 %v2635, %v2633
    %v2653 = vsel %vm270, %v2611, 0
    %2655 = vmatpush.bf16.msra.mxu0 0
    %2656 = vmatpush.bf16.msra.mxu0 0
    %2657 = vmatpush.bf16.msra.mxu0 0
    %2658 = vmatpush.bf16.msra.mxu0 0
    %2659 = vmatpush.bf16.msra.mxu0 %v2642
    %2660 = vmatpush.bf16.msra.mxu0 %v2640
    %2661 = vmatpush.bf16.msra.mxu0 %v2638
    %2662 = vmatpush.bf16.msra.mxu0 %v2636
    %2663 = vmatmul.bf16.gmra.mxu0 %v2653
    %v2664 = vpop.f32.mrf.mxu0
    %v2665 = vadd.f32 0.0, %v2664
    %v2666 = vpop.f32.mrf.mxu0
    %2667 = vdwg.mxu0
    %2668 = vmatpush.bf16.msra.mxu0 0
    %2669 = vmatpush.bf16.msra.mxu0 0
    %2670 = vmatpush.bf16.msra.mxu0 0
    %2671 = vmatpush.bf16.msra.mxu0 0
    %2672 = vmatpush.bf16.msra.mxu0 %v2643
    %2673 = vmatpush.bf16.msra.mxu0 %v2641
    %2674 = vmatpush.bf16.msra.mxu0 %v2639
    %2675 = vmatpush.bf16.msra.mxu0 %v2637
    %2676 = vmatmul.bf16.gmra.mxu0 %v2653
    %v2677 = vpop.f32.mrf.mxu0
    %v2678 = vadd.f32 0.0, %v2677
    %v2679 = vpop.f32.mrf.mxu0
    %2680 = vdwg.mxu0
    %v2681 = vadd.f32 %v2584, %v2665
    %v2682 = vadd.f32 %v2597, %v2678
    %v2683 = vxor.u32 %v2681, 2147483648
    %v2684 = vmul.f32 %v2683, 1.442695
    %v2685 = vpow.pop %v2684
    %v2686 = vadd.f32 %v2685, 1.0
    %v2687 = vrcp.pop %v2686
    %v2688 = vmul.f32 %v2686, %v2687
    %v2689 = vsub.f32 1.0, %v2688
    %v2690 = vmul.f32 %v2687, %v2689
    %v2691 = vadd.f32 %v2687, %v2690
    %vm2692 = vweird.f32 %v2686
    %vm2693 = vweird.f32 %v2687
    %vm2694 = vmor %vm2692, %vm2693
    %v2695 = vsel %vm2694, %v2687, %v2691
    %v2696 = vand.u32 2147483647, %v2686
    %vm2697 = vcmp.eq.f32.partialorder %v2696, 8.507059e+37
    %v2698 = vand.u32 %v2686, 2147483648
    %v2699 = vor.u32 1.1754944e-38, %v2698
    %v2700 = vsel %vm2697, %v2699, %v2695
    %v2701 = vmul.f32 1.0, %v2700
    %v2702 = vtanh.pop %v2682
    %v2703 = vxor.u32 %v2682, 2147483648
    %v2704 = vmul.f32 %v2703, 1.442695
    %v2705 = vpow.pop %v2704
    %v2706 = vadd.f32 %v2705, 1.0
    %v2707 = vrcp.pop %v2706
    %v2708 = vmul.f32 %v2706, %v2707
    %v2709 = vsub.f32 1.0, %v2708
    %v2710 = vmul.f32 %v2707, %v2709
    %v2711 = vadd.f32 %v2707, %v2710
    %vm2712 = vweird.f32 %v2706
    %vm2713 = vweird.f32 %v2707
    %vm2714 = vmor %vm2712, %vm2713
    %v2715 = vsel %vm2714, %v2707, %v2711
    %v2716 = vand.u32 2147483647, %v2706
    %vm2717 = vcmp.eq.f32.partialorder %v2716, 8.507059e+37
    %v2718 = vand.u32 %v2706, 2147483648
    %v2719 = vor.u32 1.1754944e-38, %v2718
    %v2720 = vsel %vm2717, %v2719, %v2715
    %v2721 = vmul.f32 1.0, %v2720
    %v2722 = vmul.f32 %v2701, %v2381
    %v2723 = vmul.f32 %v2701, %v2702
    %2725 = vrot.lane.b32.xlu0 %v2723, 64
    %v2726 = vpop.permute.xlu0 %2725
    %v2728 = vadd.f32 %v2722, %v2726
    %v2729 = vtanh.pop %v2728
    %v2730 = vmul.f32 %v2721, %v2729
    %2732 = vrot.lane.b32.xlu0 %v2730, 64
    %v2733 = vpop.permute.xlu0 %2732
    %2735 = vst.msk [vmem:[#allocation2 + $0x30] sm:$0xff] %vm270, %v2733
    %v2736 = vpack.c.bf16 %v2519, %v2519
    %v2737 = vld [vmem:[%s6] sm:$0xff]
    %v2738 = vld [vmem:[%s6 + $0x8] sm:$0xff]
    %v2739 = vld [vmem:[%s6 + $0x10] sm:$0xff]
    %v2740 = vld [vmem:[%s6 + $0x18] sm:$0xff]
    %v2741 = vld [vmem:[%s6 + $0x20] sm:$0xff]
    %v2742 = vld [vmem:[%s6 + $0x28] sm:$0xff]
    %v2743 = vld [vmem:[%s6 + $0x30] sm:$0xff]
    %v2744 = vld [vmem:[%s6 + $0x38] sm:$0xff]
    %v2745 = vld [vmem:[%s8] sm:$0x3]
    %v2747 = vperm.slane %v2745, 0
    %v2748 = vperm.slane %v2745, 1
    %2752 = vrot.lane.b32.xlu0 %v2736, 64
    %v2753 = vpop.permute.xlu0 %2752
    %v2762 = vunpack.c.l.b16 %v2737
    %v2763 = vunpack.c.h.b16 %v2737
    %v2764 = vunpack.c.l.b16 %v2738
    %v2765 = vunpack.c.h.b16 %v2738
    %v2766 = vunpack.c.l.b16 %v2739
    %v2767 = vunpack.c.h.b16 %v2739
    %v2768 = vunpack.c.l.b16 %v2740
    %v2769 = vunpack.c.h.b16 %v2740
    %v2770 = vunpack.c.l.b16 %v2741
    %v2771 = vunpack.c.h.b16 %v2741
    %v2772 = vunpack.c.l.b16 %v2742
    %v2773 = vunpack.c.h.b16 %v2742
    %v2774 = vunpack.c.l.b16 %v2743
    %v2775 = vunpack.c.h.b16 %v2743
    %v2776 = vunpack.c.l.b16 %v2744
    %v2777 = vunpack.c.h.b16 %v2744
    %v2778 = vpack.c.b16 %v2764, %v2762
    %v2779 = vpack.c.b16 %v2765, %v2763
    %v2780 = vpack.c.b16 %v2768, %v2766
    %v2781 = vpack.c.b16 %v2769, %v2767
    %v2782 = vpack.c.b16 %v2772, %v2770
    %v2783 = vpack.c.b16 %v2773, %v2771
    %v2784 = vpack.c.b16 %v2776, %v2774
    %v2785 = vpack.c.b16 %v2777, %v2775
    %v2795 = vsel %vm270, %v2753, 0
    %2797 = vmatpush.bf16.msra.mxu0 0
    %2798 = vmatpush.bf16.msra.mxu0 0
    %2799 = vmatpush.bf16.msra.mxu0 0
    %2800 = vmatpush.bf16.msra.mxu0 0
    %2801 = vmatpush.bf16.msra.mxu0 %v2784
    %2802 = vmatpush.bf16.msra.mxu0 %v2782
    %2803 = vmatpush.bf16.msra.mxu0 %v2780
    %2804 = vmatpush.bf16.msra.mxu0 %v2778
    %2805 = vmatmul.bf16.gmra.mxu0 %v2795
    %v2806 = vpop.f32.mrf.mxu0
    %v2807 = vadd.f32 %v2747, %v2806
    %v2808 = vpop.f32.mrf.mxu0
    %2809 = vdwg.mxu0
    %2810 = vmatpush.bf16.msra.mxu0 0
    %2811 = vmatpush.bf16.msra.mxu0 0
    %2812 = vmatpush.bf16.msra.mxu0 0
    %2813 = vmatpush.bf16.msra.mxu0 0
    %2814 = vmatpush.bf16.msra.mxu0 %v2785
    %2815 = vmatpush.bf16.msra.mxu0 %v2783
    %2816 = vmatpush.bf16.msra.mxu0 %v2781
    %2817 = vmatpush.bf16.msra.mxu0 %v2779
    %2818 = vmatmul.bf16.gmra.mxu0 %v2795
    %v2819 = vpop.f32.mrf.mxu0
    %v2820 = vadd.f32 %v2748, %v2819
    %v2821 = vpop.f32.mrf.mxu0
    %2822 = vdwg.mxu0
    %v2823 = vpack.c.bf16 %v2730, %v2730
    %v2824 = vld [vmem:[#allocation3] sm:$0xff]
    %v2825 = vld [vmem:[#allocation3 + $0x8] sm:$0xff]
    %v2826 = vld [vmem:[#allocation3 + $0x10] sm:$0xff]
    %v2827 = vld [vmem:[#allocation3 + $0x18] sm:$0xff]
    %v2828 = vld [vmem:[#allocation3 + $0x20] sm:$0xff]
    %v2829 = vld [vmem:[#allocation3 + $0x28] sm:$0xff]
    %v2830 = vld [vmem:[#allocation3 + $0x30] sm:$0xff]
    %v2831 = vld [vmem:[#allocation3 + $0x38] sm:$0xff]
    %2833 = vrot.lane.b32.xlu0 %v2823, 64
    %v2834 = vpop.permute.xlu0 %2833
    %v2843 = vunpack.c.l.b16 %v2824
    %v2844 = vunpack.c.h.b16 %v2824
    %v2845 = vunpack.c.l.b16 %v2825
    %v2846 = vunpack.c.h.b16 %v2825
    %v2847 = vunpack.c.l.b16 %v2826
    %v2848 = vunpack.c.h.b16 %v2826
    %v2849 = vunpack.c.l.b16 %v2827
    %v2850 = vunpack.c.h.b16 %v2827
    %v2851 = vunpack.c.l.b16 %v2828
    %v2852 = vunpack.c.h.b16 %v2828
    %v2853 = vunpack.c.l.b16 %v2829
    %v2854 = vunpack.c.h.b16 %v2829
    %v2855 = vunpack.c.l.b16 %v2830
    %v2856 = vunpack.c.h.b16 %v2830
    %v2857 = vunpack.c.l.b16 %v2831
    %v2858 = vunpack.c.h.b16 %v2831
    %v2859 = vpack.c.b16 %v2845, %v2843
    %v2860 = vpack.c.b16 %v2846, %v2844
    %v2861 = vpack.c.b16 %v2849, %v2847
    %v2862 = vpack.c.b16 %v2850, %v2848
    %v2863 = vpack.c.b16 %v2853, %v2851
    %v2864 = vpack.c.b16 %v2854, %v2852
    %v2865 = vpack.c.b16 %v2857, %v2855
    %v2866 = vpack.c.b16 %v2858, %v2856
    %v2876 = vsel %vm270, %v2834, 0
    %2878 = vmatpush.bf16.msra.mxu0 0
    %2879 = vmatpush.bf16.msra.mxu0 0
    %2880 = vmatpush.bf16.msra.mxu0 0
    %2881 = vmatpush.bf16.msra.mxu0 0
    %2882 = vmatpush.bf16.msra.mxu0 %v2865
    %2883 = vmatpush.bf16.msra.mxu0 %v2863
    %2884 = vmatpush.bf16.msra.mxu0 %v2861
    %2885 = vmatpush.bf16.msra.mxu0 %v2859
    %2886 = vmatmul.bf16.gmra.mxu0 %v2876
    %v2887 = vpop.f32.mrf.mxu0
    %v2888 = vadd.f32 0.0, %v2887
    %v2889 = vpop.f32.mrf.mxu0
    %2890 = vdwg.mxu0
    %2891 = vmatpush.bf16.msra.mxu0 0
    %2892 = vmatpush.bf16.msra.mxu0 0
    %2893 = vmatpush.bf16.msra.mxu0 0
    %2894 = vmatpush.bf16.msra.mxu0 0
    %2895 = vmatpush.bf16.msra.mxu0 %v2866
    %2896 = vmatpush.bf16.msra.mxu0 %v2864
    %2897 = vmatpush.bf16.msra.mxu0 %v2862
    %2898 = vmatpush.bf16.msra.mxu0 %v2860
    %2899 = vmatmul.bf16.gmra.mxu0 %v2876
    %v2900 = vpop.f32.mrf.mxu0
    %v2901 = vadd.f32 0.0, %v2900
    %v2902 = vpop.f32.mrf.mxu0
    %2903 = vdwg.mxu0
    %v2904 = vadd.f32 %v2807, %v2888
    %v2905 = vadd.f32 %v2820, %v2901
    %v2906 = vxor.u32 %v2904, 2147483648
    %v2907 = vmul.f32 %v2906, 1.442695
    %v2908 = vpow.pop %v2907
    %v2909 = vadd.f32 %v2908, 1.0
    %v2910 = vrcp.pop %v2909
    %v2911 = vmul.f32 %v2909, %v2910
    %v2912 = vsub.f32 1.0, %v2911
    %v2913 = vmul.f32 %v2910, %v2912
    %v2914 = vadd.f32 %v2910, %v2913
    %vm2915 = vweird.f32 %v2909
    %vm2916 = vweird.f32 %v2910
    %vm2917 = vmor %vm2915, %vm2916
    %v2918 = vsel %vm2917, %v2910, %v2914
    %v2919 = vand.u32 2147483647, %v2909
    %vm2920 = vcmp.eq.f32.partialorder %v2919, 8.507059e+37
    %v2921 = vand.u32 %v2909, 2147483648
    %v2922 = vor.u32 1.1754944e-38, %v2921
    %v2923 = vsel %vm2920, %v2922, %v2918
    %v2924 = vmul.f32 1.0, %v2923
    %v2925 = vtanh.pop %v2905
    %v2926 = vxor.u32 %v2905, 2147483648
    %v2927 = vmul.f32 %v2926, 1.442695
    %v2928 = vpow.pop %v2927
    %v2929 = vadd.f32 %v2928, 1.0
    %v2930 = vrcp.pop %v2929
    %v2931 = vmul.f32 %v2929, %v2930
    %v2932 = vsub.f32 1.0, %v2931
    %v2933 = vmul.f32 %v2930, %v2932
    %v2934 = vadd.f32 %v2930, %v2933
    %vm2935 = vweird.f32 %v2929
    %vm2936 = vweird.f32 %v2930
    %vm2937 = vmor %vm2935, %vm2936
    %v2938 = vsel %vm2937, %v2930, %v2934
    %v2939 = vand.u32 2147483647, %v2929
    %vm2940 = vcmp.eq.f32.partialorder %v2939, 8.507059e+37
    %v2941 = vand.u32 %v2929, 2147483648
    %v2942 = vor.u32 1.1754944e-38, %v2941
    %v2943 = vsel %vm2940, %v2942, %v2938
    %v2944 = vmul.f32 1.0, %v2943
    %v2945 = vmul.f32 %v2924, %v2728
    %v2946 = vmul.f32 %v2924, %v2925
    %2948 = vrot.lane.b32.xlu0 %v2946, 64
    %v2949 = vpop.permute.xlu0 %2948
    %v2951 = vadd.f32 %v2945, %v2949
    %v2952 = vtanh.pop %v2951
    %v2953 = vmul.f32 %v2944, %v2952
    %2955 = vrot.lane.b32.xlu0 %v2953, 64
    %v2956 = vpop.permute.xlu0 %2955
    %2958 = vst.msk [vmem:[#allocation2 + $0x38] sm:$0xff] %vm270, %v2956
    %2960 = vrot.lane.b32.xlu0 %v2519, 64
    %v2961 = vpop.permute.xlu0 %2960
    %2963 = vst.msk [vmem:[%s16] sm:$0xff] %vm270, %v2961
    %2965 = vrot.lane.b32.xlu0 %v2517, 64
    %v2966 = vpop.permute.xlu0 %2965
    %2968 = vst.msk [vmem:[%s17] sm:$0xff] %vm270, %v2966
    %s2969 = scalar_lea.vmem %s16, 8
    %2970 = vst.msk [vmem:[%s2969] sm:$0xff] %vm270, %v2956
    %2972 = vrot.lane.b32.xlu0 %v2951, 64
    %v2973 = vpop.permute.xlu0 %2972
    %s2975 = scalar_lea.vmem %s17, 8
    %2976 = vst.msk [vmem:[%s2975] sm:$0xff] %vm270, %v2973
    %v2977 = vld [vmem:[#allocation2] sm:$0xff]
    %v2978 = vld [vmem:[#allocation2 + $0x8] sm:$0xff]
    %v2979 = vld [vmem:[#allocation2 + $0x10] sm:$0xff]
    %v2980 = vld [vmem:[#allocation2 + $0x18] sm:$0xff]
    %v2981 = vld [vmem:[#allocation2 + $0x20] sm:$0xff]
    %v2982 = vld [vmem:[#allocation2 + $0x28] sm:$0xff]
    %v2983 = vld [vmem:[#allocation2 + $0x30] sm:$0xff]
    %v2984 = vld [vmem:[#allocation2 + $0x38] sm:$0xff]
    %v2985 = vpack.c.bf16 %v2978, %v2977
    %v2986 = vpack.c.bf16 %v2980, %v2979
    %v2987 = vpack.c.bf16 %v2982, %v2981
    %v2988 = vpack.c.bf16 %v2984, %v2983
    %v2989 = vld [vmem:[#allocation5] sm:$0xf]
    %v2990 = vld [vmem:[#allocation5 + $0x4] sm:$0xf]
    %v2991 = vld [vmem:[#allocation5 + $0x8] sm:$0xf]
    %v2992 = vld [vmem:[#allocation5 + $0xc] sm:$0xf]
    %v2993 = vld [vmem:[#allocation5 + $0x10] sm:$0xf]
    %v2994 = vld [vmem:[#allocation5 + $0x14] sm:$0xf]
    %v2995 = vld [vmem:[#allocation5 + $0x18] sm:$0xf]
    %v2996 = vld [vmem:[#allocation5 + $0x1c] sm:$0xf]
    %v2997 = vld [vmem:[%s10] sm:$0x1]
    %v2999 = vperm.slane %v2997, 0
    %v3009 = vunpack.c.l.b16 %v2989
    %v3010 = vunpack.c.l.b16 %v2990
    %v3011 = vunpack.c.l.b16 %v2991
    %v3012 = vunpack.c.l.b16 %v2992
    %v3013 = vunpack.c.l.b16 %v2993
    %v3014 = vunpack.c.l.b16 %v2994
    %v3015 = vunpack.c.l.b16 %v2995
    %v3016 = vunpack.c.l.b16 %v2996
    %v3017 = vpack.c.b16 %v3010, %v3009
    %v3018 = vpack.c.b16 %v3012, %v3011
    %v3019 = vpack.c.b16 %v3014, %v3013
    %v3020 = vpack.c.b16 %v3016, %v3015
    %v3026 = vsel %vm270, %v2985, 0
    %v3029 = vsel %vm270, %v2986, 0
    %v3032 = vsel %vm270, %v2987, 0
    %v3035 = vsel %vm270, %v2988, 0
    %3037 = vmatpush.bf16.msra.mxu0 0
    %3038 = vmatpush.bf16.msra.mxu0 0
    %3039 = vmatpush.bf16.msra.mxu0 0
    %3040 = vmatpush.bf16.msra.mxu0 0
    %3041 = vmatpush.bf16.msra.mxu0 %v3020
    %3042 = vmatpush.bf16.msra.mxu0 %v3019
    %3043 = vmatpush.bf16.msra.mxu0 %v3018
    %3044 = vmatpush.bf16.msra.mxu0 %v3017
    %3045 = vmatmul.bf16.gmra.mxu0 %v3026
    %v3046 = vpop.f32.mrf.mxu0
    %v3047 = vadd.f32 %v2999, %v3046
    %v3048 = vpop.f32.mrf.mxu0
    %v3049 = vadd.f32 %v2999, %v3048
    %3050 = vmatmul.bf16.gmra.mxu0 %v3029
    %v3051 = vpop.f32.mrf.mxu0
    %v3052 = vadd.f32 %v2999, %v3051
    %v3053 = vpop.f32.mrf.mxu0
    %v3054 = vadd.f32 %v2999, %v3053
    %3055 = vmatmul.bf16.gmra.mxu0 %v3032
    %v3056 = vpop.f32.mrf.mxu0
    %v3057 = vadd.f32 %v2999, %v3056
    %v3058 = vpop.f32.mrf.mxu0
    %v3059 = vadd.f32 %v2999, %v3058
    %3060 = vmatmul.bf16.gmra.mxu0 %v3035
    %v3061 = vpop.f32.mrf.mxu0
    %v3062 = vadd.f32 %v2999, %v3061
    %v3063 = vpop.f32.mrf.mxu0
    %v3064 = vadd.f32 %v2999, %v3063
    %3065 = vdwg.mxu0
    %v3066 = vsel %vm144, %v3047, 0.0
    %3067 = vadd.xlane.f32.xlu0 %v3066
    %v3068 = vpop.xlane.xlu0 %3067
    %v3069 = vsel %vm144, %v3049, 0.0
    %3070 = vadd.xlane.f32.xlu0 %v3069
    %v3071 = vpop.xlane.xlu0 %3070
    %v3072 = vsel %vm144, %v3052, 0.0
    %3073 = vadd.xlane.f32.xlu0 %v3072
    %v3074 = vpop.xlane.xlu0 %3073
    %v3075 = vsel %vm144, %v3054, 0.0
    %3076 = vadd.xlane.f32.xlu0 %v3075
    %v3077 = vpop.xlane.xlu0 %3076
    %v3078 = vsel %vm144, %v3057, 0.0
    %3079 = vadd.xlane.f32.xlu0 %v3078
    %v3080 = vpop.xlane.xlu0 %3079
    %v3081 = vsel %vm144, %v3059, 0.0
    %3082 = vadd.xlane.f32.xlu0 %v3081
    %v3083 = vpop.xlane.xlu0 %3082
    %v3084 = vsel %vm144, %v3062, 0.0
    %3085 = vadd.xlane.f32.xlu0 %v3084
    %v3086 = vpop.xlane.xlu0 %3085
    %v3087 = vsel %vm144, %v3064, 0.0
    %3088 = vadd.xlane.f32.xlu0 %v3087
    %v3089 = vpop.xlane.xlu0 %3088
    %v3090 = vrcp.pop 32.0
    %v3091 = vmul.f32 32.0, %v3090
    %v3092 = vsub.f32 1.0, %v3091
    %v3093 = vmul.f32 %v3090, %v3092
    %v3094 = vadd.f32 %v3090, %v3093
    %vm3095 = vweird.f32 %v3090
    %v3096 = vsel %vm3095, %v3090, %v3094
    %v3097 = vmul.f32 %v3068, %v3096
    %v3098 = vmul.f32 %v3071, %v3096
    %v3099 = vmul.f32 %v3074, %v3096
    %v3100 = vmul.f32 %v3077, %v3096
    %v3101 = vmul.f32 %v3080, %v3096
    %v3102 = vmul.f32 %v3083, %v3096
    %v3103 = vmul.f32 %v3086, %v3096
    %v3104 = vmul.f32 %v3089, %v3096
    %v3105 = vmul.f32 %v3047, %v3047
    %v3106 = vmul.f32 %v3049, %v3049
    %v3107 = vmul.f32 %v3052, %v3052
    %v3108 = vmul.f32 %v3054, %v3054
    %v3109 = vmul.f32 %v3057, %v3057
    %v3110 = vmul.f32 %v3059, %v3059
    %v3111 = vmul.f32 %v3062, %v3062
    %v3112 = vmul.f32 %v3064, %v3064
    %v3113 = vsel %vm144, %v3105, 0.0
    %3114 = vadd.xlane.f32.xlu0 %v3113
    %v3115 = vpop.xlane.xlu0 %3114
    %v3116 = vsel %vm144, %v3106, 0.0
    %3117 = vadd.xlane.f32.xlu0 %v3116
    %v3118 = vpop.xlane.xlu0 %3117
    %v3119 = vsel %vm144, %v3107, 0.0
    %3120 = vadd.xlane.f32.xlu0 %v3119
    %v3121 = vpop.xlane.xlu0 %3120
    %v3122 = vsel %vm144, %v3108, 0.0
    %3123 = vadd.xlane.f32.xlu0 %v3122
    %v3124 = vpop.xlane.xlu0 %3123
    %v3125 = vsel %vm144, %v3109, 0.0
    %3126 = vadd.xlane.f32.xlu0 %v3125
    %v3127 = vpop.xlane.xlu0 %3126
    %v3128 = vsel %vm144, %v3110, 0.0
    %3129 = vadd.xlane.f32.xlu0 %v3128
    %v3130 = vpop.xlane.xlu0 %3129
    %v3131 = vsel %vm144, %v3111, 0.0
    %3132 = vadd.xlane.f32.xlu0 %v3131
    %v3133 = vpop.xlane.xlu0 %3132
    %v3134 = vsel %vm144, %v3112, 0.0
    %3135 = vadd.xlane.f32.xlu0 %v3134
    %v3136 = vpop.xlane.xlu0 %3135
    %v3137 = vmul.f32 %v3115, %v3096
    %v3138 = vmul.f32 %v3118, %v3096
    %v3139 = vmul.f32 %v3121, %v3096
    %v3140 = vmul.f32 %v3124, %v3096
    %v3141 = vmul.f32 %v3127, %v3096
    %v3142 = vmul.f32 %v3130, %v3096
    %v3143 = vmul.f32 %v3133, %v3096
    %v3144 = vmul.f32 %v3136, %v3096
    %v3145 = vmul.f32 %v3097, %v3097
    %v3146 = vmul.f32 %v3098, %v3098
    %v3147 = vmul.f32 %v3099, %v3099
    %v3148 = vmul.f32 %v3100, %v3100
    %v3149 = vmul.f32 %v3101, %v3101
    %v3150 = vmul.f32 %v3102, %v3102
    %v3151 = vmul.f32 %v3103, %v3103
    %v3152 = vmul.f32 %v3104, %v3104
    %v3153 = vsub.f32 %v3137, %v3145
    %v3154 = vsub.f32 %v3138, %v3146
    %v3155 = vsub.f32 %v3139, %v3147
    %v3156 = vsub.f32 %v3140, %v3148
    %v3157 = vsub.f32 %v3141, %v3149
    %v3158 = vsub.f32 %v3142, %v3150
    %v3159 = vsub.f32 %v3143, %v3151
    %v3160 = vsub.f32 %v3144, %v3152
    %v3161 = vsub.f32 %v3047, %v3097
    %v3162 = vsub.f32 %v3049, %v3098
    %v3163 = vsub.f32 %v3052, %v3099
    %v3164 = vsub.f32 %v3054, %v3100
    %v3165 = vsub.f32 %v3057, %v3101
    %v3166 = vsub.f32 %v3059, %v3102
    %v3167 = vsub.f32 %v3062, %v3103
    %v3168 = vsub.f32 %v3064, %v3104
    %v3169 = vadd.f32 %v3153, 1e-05
    %v3170 = vadd.f32 %v3154, 1e-05
    %v3171 = vadd.f32 %v3155, 1e-05
    %v3172 = vadd.f32 %v3156, 1e-05
    %v3173 = vadd.f32 %v3157, 1e-05
    %v3174 = vadd.f32 %v3158, 1e-05
    %v3175 = vadd.f32 %v3159, 1e-05
    %v3176 = vadd.f32 %v3160, 1e-05
    %v3177 = vrsqrt.pop %v3169
    %v3178 = vmul.f32 %v3177, %v3169
    %v3179 = vmul.f32 %v3178, %v3177
    %v3180 = vmul.f32 0.5, %v3179
    %v3181 = vsub.f32 1.5, %v3180
    %v3182 = vmul.f32 %v3177, %v3181
    %vm3183 = vweird.f32 %v3169
    %vm3184 = vweird.f32 %v3177
    %vm3185 = vmor %vm3183, %vm3184
    %v3186 = vsel %vm3185, %v3177, %v3182
    %v3187 = vrsqrt.pop %v3170
    %v3188 = vmul.f32 %v3187, %v3170
    %v3189 = vmul.f32 %v3188, %v3187
    %v3190 = vmul.f32 0.5, %v3189
    %v3191 = vsub.f32 1.5, %v3190
    %v3192 = vmul.f32 %v3187, %v3191
    %vm3193 = vweird.f32 %v3170
    %vm3194 = vweird.f32 %v3187
    %vm3195 = vmor %vm3193, %vm3194
    %v3196 = vsel %vm3195, %v3187, %v3192
    %v3197 = vrsqrt.pop %v3171
    %v3198 = vmul.f32 %v3197, %v3171
    %v3199 = vmul.f32 %v3198, %v3197
    %v3200 = vmul.f32 0.5, %v3199
    %v3201 = vsub.f32 1.5, %v3200
    %v3202 = vmul.f32 %v3197, %v3201
    %vm3203 = vweird.f32 %v3171
    %vm3204 = vweird.f32 %v3197
    %vm3205 = vmor %vm3203, %vm3204
    %v3206 = vsel %vm3205, %v3197, %v3202
    %v3207 = vrsqrt.pop %v3172
    %v3208 = vmul.f32 %v3207, %v3172
    %v3209 = vmul.f32 %v3208, %v3207
    %v3210 = vmul.f32 0.5, %v3209
    %v3211 = vsub.f32 1.5, %v3210
    %v3212 = vmul.f32 %v3207, %v3211
    %vm3213 = vweird.f32 %v3172
    %vm3214 = vweird.f32 %v3207
    %vm3215 = vmor %vm3213, %vm3214
    %v3216 = vsel %vm3215, %v3207, %v3212
    %v3217 = vrsqrt.pop %v3173
    %v3218 = vmul.f32 %v3217, %v3173
    %v3219 = vmul.f32 %v3218, %v3217
    %v3220 = vmul.f32 0.5, %v3219
    %v3221 = vsub.f32 1.5, %v3220
    %v3222 = vmul.f32 %v3217, %v3221
    %vm3223 = vweird.f32 %v3173
    %vm3224 = vweird.f32 %v3217
    %vm3225 = vmor %vm3223, %vm3224
    %v3226 = vsel %vm3225, %v3217, %v3222
    %v3227 = vrsqrt.pop %v3174
    %v3228 = vmul.f32 %v3227, %v3174
    %v3229 = vmul.f32 %v3228, %v3227
    %v3230 = vmul.f32 0.5, %v3229
    %v3231 = vsub.f32 1.5, %v3230
    %v3232 = vmul.f32 %v3227, %v3231
    %vm3233 = vweird.f32 %v3174
    %vm3234 = vweird.f32 %v3227
    %vm3235 = vmor %vm3233, %vm3234
    %v3236 = vsel %vm3235, %v3227, %v3232
    %v3237 = vrsqrt.pop %v3175
    %v3238 = vmul.f32 %v3237, %v3175
    %v3239 = vmul.f32 %v3238, %v3237
    %v3240 = vmul.f32 0.5, %v3239
    %v3241 = vsub.f32 1.5, %v3240
    %v3242 = vmul.f32 %v3237, %v3241
    %vm3243 = vweird.f32 %v3175
    %vm3244 = vweird.f32 %v3237
    %vm3245 = vmor %vm3243, %vm3244
    %v3246 = vsel %vm3245, %v3237, %v3242
    %v3247 = vrsqrt.pop %v3176
    %v3248 = vmul.f32 %v3247, %v3176
    %v3249 = vmul.f32 %v3248, %v3247
    %v3250 = vmul.f32 0.5, %v3249
    %v3251 = vsub.f32 1.5, %v3250
    %v3252 = vmul.f32 %v3247, %v3251
    %vm3253 = vweird.f32 %v3176
    %vm3254 = vweird.f32 %v3247
    %vm3255 = vmor %vm3253, %vm3254
    %v3256 = vsel %vm3255, %v3247, %v3252
    %v3257 = vmul.f32 %v3161, %v3186
    %v3258 = vmul.f32 %v3162, %v3196
    %v3259 = vmul.f32 %v3163, %v3206
    %v3260 = vmul.f32 %v3164, %v3216
    %v3261 = vmul.f32 %v3165, %v3226
    %v3262 = vmul.f32 %v3166, %v3236
    %v3263 = vmul.f32 %v3167, %v3246
    %v3264 = vmul.f32 %v3168, %v3256
    %v3265 = vld [vmem:[%s11] sm:$0x1]
    %v3267 = vperm.slane %v3265, 0
    %v3269 = vmul.f32 %v3257, %v3267
    %v3270 = vmul.f32 %v3258, %v3267
    %v3271 = vmul.f32 %v3259, %v3267
    %v3272 = vmul.f32 %v3260, %v3267
    %v3273 = vmul.f32 %v3261, %v3267
    %v3274 = vmul.f32 %v3262, %v3267
    %v3275 = vmul.f32 %v3263, %v3267
    %v3276 = vmul.f32 %v3264, %v3267
    %v3277 = vld [vmem:[%s12] sm:$0x1]
    %v3279 = vperm.slane %v3277, 0
    %v3281 = vadd.f32 %v3269, %v3279
    %v3282 = vadd.f32 %v3270, %v3279
    %v3283 = vadd.f32 %v3271, %v3279
    %v3284 = vadd.f32 %v3272, %v3279
    %v3285 = vadd.f32 %v3273, %v3279
    %v3286 = vadd.f32 %v3274, %v3279
    %v3287 = vadd.f32 %v3275, %v3279
    %v3288 = vadd.f32 %v3276, %v3279
    %vm3289 = vcmp.ge.f32.partialorder %v3281, 0.0
    %vm3290 = vcmp.ge.f32.partialorder %v3282, 0.0
    %vm3291 = vcmp.ge.f32.partialorder %v3283, 0.0
    %vm3292 = vcmp.ge.f32.partialorder %v3284, 0.0
    %vm3293 = vcmp.ge.f32.partialorder %v3285, 0.0
    %vm3294 = vcmp.ge.f32.partialorder %v3286, 0.0
    %vm3295 = vcmp.ge.f32.partialorder %v3287, 0.0
    %vm3296 = vcmp.ge.f32.partialorder %v3288, 0.0
    %v3297 = vmul.f32 %v3281, 0.01
    %v3298 = vmul.f32 %v3282, 0.01
    %v3299 = vmul.f32 %v3283, 0.01
    %v3300 = vmul.f32 %v3284, 0.01
    %v3301 = vmul.f32 %v3285, 0.01
    %v3302 = vmul.f32 %v3286, 0.01
    %v3303 = vmul.f32 %v3287, 0.01
    %v3304 = vmul.f32 %v3288, 0.01
    %v3305 = vsel %vm3289, %v3281, %v3297
    %v3306 = vsel %vm3290, %v3282, %v3298
    %v3307 = vsel %vm3291, %v3283, %v3299
    %v3308 = vsel %vm3292, %v3284, %v3300
    %v3309 = vsel %vm3293, %v3285, %v3301
    %v3310 = vsel %vm3294, %v3286, %v3302
    %v3311 = vsel %vm3295, %v3287, %v3303
    %v3312 = vsel %vm3296, %v3288, %v3304
    %v3313 = vpack.c.bf16 %v3306, %v3305
    %v3314 = vpack.c.bf16 %v3308, %v3307
    %v3315 = vpack.c.bf16 %v3310, %v3309
    %v3316 = vpack.c.bf16 %v3312, %v3311
    %v3317 = vld [vmem:[%s13] sm:$0xf]
    %v3318 = vld [vmem:[%s13 + $0x4] sm:$0xf]
    %v3319 = vld [vmem:[%s13 + $0x8] sm:$0xf]
    %v3320 = vld [vmem:[%s13 + $0xc] sm:$0xf]
    %v3321 = vld [vmem:[%s14] sm:$0x1]
    %v3323 = vperm.slane %v3321, 0
    %v3329 = vunpack.c.l.b16 %v3317
    %v3330 = vunpack.c.l.b16 %v3318
    %v3331 = vunpack.c.l.b16 %v3319
    %v3332 = vunpack.c.l.b16 %v3320
    %v3333 = vpack.c.b16 %v3330, %v3329
    %v3334 = vpack.c.b16 %v3332, %v3331
    %v3338 = vsel %vm144, %v3313, 0
    %v3341 = vsel %vm144, %v3314, 0
    %v3344 = vsel %vm144, %v3315, 0
    %v3347 = vsel %vm144, %v3316, 0
    %3349 = vmatpush.bf16.msra.mxu0 0
    %3350 = vmatpush.bf16.msra.mxu0 0
    %3351 = vmatpush.bf16.msra.mxu0 0
    %3352 = vmatpush.bf16.msra.mxu0 0
    %3353 = vmatpush.bf16.msra.mxu0 0
    %3354 = vmatpush.bf16.msra.mxu0 0
    %3355 = vmatpush.bf16.msra.mxu0 %v3334
    %3356 = vmatpush.bf16.msra.mxu0 %v3333
    %3357 = vmatmul.bf16.gmra.mxu0 %v3338
    %v3358 = vpop.f32.mrf.mxu0
    %v3359 = vadd.f32 %v3323, %v3358
    %v3360 = vpop.f32.mrf.mxu0
    %v3361 = vadd.f32 %v3323, %v3360
    %3362 = vmatmul.bf16.gmra.mxu0 %v3341
    %v3363 = vpop.f32.mrf.mxu0
    %v3364 = vadd.f32 %v3323, %v3363
    %v3365 = vpop.f32.mrf.mxu0
    %v3366 = vadd.f32 %v3323, %v3365
    %3367 = vmatmul.bf16.gmra.mxu0 %v3344
    %v3368 = vpop.f32.mrf.mxu0
    %v3369 = vadd.f32 %v3323, %v3368
    %v3370 = vpop.f32.mrf.mxu0
    %v3371 = vadd.f32 %v3323, %v3370
    %3372 = vmatmul.bf16.gmra.mxu0 %v3347
    %v3373 = vpop.f32.mrf.mxu0
    %v3374 = vadd.f32 %v3323, %v3373
    %v3375 = vpop.f32.mrf.mxu0
    %v3376 = vadd.f32 %v3323, %v3375
    %3377 = vdwg.mxu0
    %3378 = vst [vmem:[%s15] sm:$0xff] %v3359
    %3379 = vst [vmem:[%s15 + $0x8] sm:$0xff] %v3361
    %3380 = vst [vmem:[%s15 + $0x10] sm:$0xff] %v3364
    %3381 = vst [vmem:[%s15 + $0x18] sm:$0xff] %v3366
    %3382 = vst [vmem:[%s15 + $0x20] sm:$0xff] %v3369
    %3383 = vst [vmem:[%s15 + $0x28] sm:$0xff] %v3371
    %3384 = vst [vmem:[%s15 + $0x30] sm:$0xff] %v3374
    %3385 = vst [vmem:[%s15 + $0x38] sm:$0xff] %v3376
    // Predicated region
    $region70: #{lm_forward.1} parent=1 // pred_check
      _
    $region71: #{lm_forward.1} parent=1 // pred_check_branch
      %3387 = sbr.rel (0) target = $region73
    $region72: #{lm_forward.1} parent=1 // pred_region
      _
    $region73: #{lm_forward.1} parent=1 // pred_fallthru
      _
    // Predicated region
    $region74: #{lm_forward.1} parent=1 // pred_check
      _
    $region75: #{lm_forward.1} parent=1 // pred_check_branch
      %3389 = sbr.rel (0) target = $region77
    $region76: #{lm_forward.1} parent=1 // pred_region
      _
    $region77: #{lm_forward.1} parent=1 // pred_fallthru
      _
    // Predicated region
    $region78: #{lm_forward.1} parent=1 // pred_check
      _
    $region79: #{lm_forward.1} parent=1 // pred_check_branch
      %3391 = sbr.rel (0) target = $region81
    $region80: #{lm_forward.1} parent=1 // pred_region
      _
    $region81: #{lm_forward.1} parent=1 // pred_fallthru
      _
    // Predicated region
    $region82: #{lm_forward.1} parent=1 // pred_check
      _
    $region83: #{lm_forward.1} parent=1 // pred_check_branch
      %3393 = sbr.rel (0) target = $region85
    $region84: #{lm_forward.1} parent=1 // pred_region
      _
    $region85: #{lm_forward.1} parent=1 // pred_fallthru
      _
    // Predicated region
    $region86: #{lm_forward.1} parent=1 // pred_check
      _
    $region87: #{lm_forward.1} parent=1 // pred_check_branch
      %3395 = sbr.rel (0) target = $region89
    $region88: #{lm_forward.1} parent=1 // pred_region
      _
    $region89: #{lm_forward.1} parent=1 // pred_fallthru
      _
    // Predicated region
    $region90: #{lm_forward.1} parent=1 // pred_check
      _
    $region91: #{lm_forward.1} parent=1 // pred_check_branch
      %3397 = sbr.rel (0) target = $region93
    $region92: #{lm_forward.1} parent=1 // pred_region
      _
    $region93: #{lm_forward.1} parent=1 // pred_fallthru
      _
    %3398 = vsyncpa [#allocation4], 1
    %3399 = vsyncpa [#allocation6], 1

</llo_original>
